<compile_context>
chip_gen: v7x
topology: tpu7x:2x2x1
jax: 0.10.0
libtpu: 0.0.40
codegen_flags: <defaults>
</compile_context>

<pallas_src>
import functools

import jax
import jax.numpy as jnp
from jax.experimental import pallas as pl
from jax.experimental.pallas import tpu as pltpu

EPS = 1e-5          # nn.InstanceNorm3d default eps
NEG_SLOPE = 0.01    # nn.LeakyReLU(negative_slope=0.01)
SUBLANE = 16        # bf16 sublane tile height -> channel pads are multiples of 16


def _round_up(x, m):
    return (x + m - 1) // m * m


def _fused_conv_block_kernel(x_ref, w1_ref, w2_ref, mask_ref, o_ref, p_buf,
                             *, D, H, W, Cin_p, F_p, Cmax):
    """Fused (3x3x3 'same' conv, no bias -> InstanceNorm3d -> LeakyReLU) x2, one sample.

    x_ref   : (1, Cin_p, S)     channels on sublanes, flat spatial S=D*H*W on lanes
    w1_ref  : (F_p, 27*Cin_p)   bf16, col index = tap*Cin_p + cin (tap = kd*9+kh*3+kw)
    w2_ref  : (F_p, 27*F_p)     bf16
    mask_ref: (27*Cmax, S)      f32 boundary masks, pre-broadcast to sublane height
    o_ref   : (1, F_p, S)       lane-dense output slab
    p_buf   : (27*Cmax, S)      bf16 VMEM scratch for the im2col slab
    """
    S = D * H * W

    # tap t = kd*9 + kh*3 + kw with (dd, dh, dw) = (kd-1, kh-1, kw-1)
    taps = []
    for dd in (-1, 0, 1):
        for dh in (-1, 0, 1):
            for dw in (-1, 0, 1):
                taps.append((dd == 0 and dh == 0 and dw == 0,
                             dd * H * W + dh * W + dw))

    def layer(a, w_bf16, C):
        """a: (C, S) f32 activation, w_bf16: (F_out, 27*C) bf16. Returns (F_out, S) f32."""
        # Build the im2col slab tap-by-tap directly into the bf16 VMEM scratch.
        for t, (is_center, delta) in enumerate(taps):
            if is_center:
                piece = a
            else:
                # rolled[c, s] = a[c, (s + delta) % S]; wrap-around positions are
                # zeroed by the precomputed boundary mask ('same' zero padding).
                rolled = pltpu.roll(a, (-delta) % S, axis=1)
                piece = rolled * mask_ref[t * Cmax:t * Cmax + C, :]
            p_buf[t * C:(t + 1) * C, :] = piece.astype(jnp.bfloat16)

        p = p_buf[0:27 * C, :]                                        # (27*C, S) bf16
        y = jnp.dot(w_bf16, p, preferred_element_type=jnp.float32)    # (F_out, S) f32 acc

        # InstanceNorm3d (affine=False): per-channel stats over spatial, one pass,
        # biased variance (matches PyTorch). Stats computed on the f32 dot output.
        inv_s = 1.0 / S
        mean = jnp.sum(y, axis=1, keepdims=True) * inv_s
        mean_sq = jnp.sum(y * y, axis=1, keepdims=True) * inv_s
        var = jnp.maximum(mean_sq - mean * mean, 0.0)
        y = (y - mean) * jax.lax.rsqrt(var + EPS)
        # LeakyReLU(0.01)
        return jnp.where(y >= 0, y, NEG_SLOPE * y)

    x = x_ref[0].astype(jnp.float32)            # (Cin_p, S)
    h1 = layer(x, w1_ref[...], Cin_p)           # intermediate stays in f32 / VMEM
    h2 = layer(h1, w2_ref[...], F_p)
    # nn.Dropout(0.3) is identity in eval mode.
    # TODO(synk): training-mode dropout (pltpu.prng_* Bernoulli mask scaled by 1/0.7).
    o_ref[0] = h2.astype(o_ref.dtype)


def conv_block_forward(x_ncdhw, w1, w2):
    """Pallas equivalent of conv_block.forward (inference semantics).

    x_ncdhw: (N, Cin, D, H, W); w1: (F, Cin, 3, 3, 3); w2: (F, F, 3, 3, 3).
    Returns (N, F, D, H, W).
    """
    N, Cin, D, H, W = x_ncdhw.shape
    F = w1.shape[0]
    assert w1.shape == (F, Cin, 3, 3, 3)
    assert w2.shape == (F, F, 3, 3, 3)
    S = D * H * W

    # Pad channel counts to a multiple of 16 (bf16 sublane tile) so every C-row
    # piece of the im2col stack is tile-aligned. Tiny channel pad, no halo pad.
    Cin_p = _round_up(Cin, SUBLANE)
    F_p = _round_up(F, SUBLANE)
    Cmax = max(Cin_p, F_p)

    # NCDHW -> (N, C, S): pure reshape, no transpose.
    x = x_ncdhw.reshape(N, Cin, S)
    if Cin_p != Cin:
        x = jnp.pad(x, ((0, 0), (0, Cin_p - Cin), (0, 0)))

    def pack_weight(w, cin, cin_p, cout_p):
        w = jnp.pad(w, ((0, cout_p - w.shape[0]), (0, cin_p - cin),
                        (0, 0), (0, 0), (0, 0)))
        # (Cout_p, Cin_p, kD, kH, kW) -> (Cout_p, kD, kH, kW, Cin_p) -> (Cout_p, 27*Cin_p)
        w = jnp.transpose(w, (0, 2, 3, 4, 1)).reshape(cout_p, 27 * cin_p)
        return w.astype(jnp.bfloat16)   # bf16 MXU operand

    w1m = pack_weight(w1, Cin, Cin_p, F_p)
    w2m = pack_weight(w2, F, F_p, F_p)

    # Precompute per-tap boundary masks (hoisted out of the kernel), pre-broadcast
    # to full sublane height -> in-kernel mask application is a plain VPU multiply.
    idx = jnp.arange(S, dtype=jnp.int32)
    dpos = idx // (H * W)
    hpos = (idx // W) % H
    wpos = idx % W
    mrows = []
    for dd in (-1, 0, 1):
        for dh in (-1, 0, 1):
            for dw in (-1, 0, 1):
                valid = ((dpos + dd >= 0) & (dpos + dd < D) &
                         (hpos + dh >= 0) & (hpos + dh < H) &
                         (wpos + dw >= 0) & (wpos + dw < W))
                mrows.append(jnp.where(valid, 1.0, 0.0).astype(jnp.float32))
    mask = jnp.stack(mrows, axis=0)                                       # (27, S)
    mask = jnp.broadcast_to(mask[:, None, :], (27, Cmax, S)).reshape(27 * Cmax, S)

    kernel = functools.partial(_fused_conv_block_kernel, D=D, H=H, W=W,
                               Cin_p=Cin_p, F_p=F_p, Cmax=Cmax)

    flops = 2 * N * S * 27 * (F_p * Cin_p + F_p * F_p)
    bytes_accessed = (x.size * 4 + w1m.size * 2 + w2m.size * 2
                      + mask.size * 4 + N * F_p * S * 4)

    out = pl.pallas_call(
        kernel,
        out_shape=jax.ShapeDtypeStruct((N, F_p, S), x_ncdhw.dtype),
        grid=(N,),
        in_specs=[
            pl.BlockSpec((1, Cin_p, S), lambda n: (n, 0, 0)),
            pl.BlockSpec((F_p, 27 * Cin_p), lambda n: (0, 0)),
            pl.BlockSpec((F_p, 27 * F_p), lambda n: (0, 0)),
            pl.BlockSpec((27 * Cmax, S), lambda n: (0, 0)),   # constant block: fetched once
        ],
        out_specs=pl.BlockSpec((1, F_p, S), lambda n: (n, 0, 0)),
        scratch_shapes=[pltpu.VMEM((27 * Cmax, S), jnp.bfloat16)],
        compiler_params=pltpu.CompilerParams(
            dimension_semantics=("parallel",)),
        cost_estimate=pl.CostEstimate(flops=flops,
                                      transcendentals=2 * N * F_p,
                                      bytes_accessed=bytes_accessed),
    )(x, w1m, w2m, mask)

    # (N, F_p, S) -> (N, F, D, H, W): drop channel padding, pure reshape back to NCDHW.
    return out[:, :F, :].reshape(N, F, D, H, W)


def _ref_forward(x_ncdhw, w1, w2):
    """Pure-JAX f32 reference (PyTorch eval semantics) for correctness check."""
    def conv(x, w):
        return jax.lax.conv_general_dilated(
            x, w, window_strides=(1, 1, 1), padding="SAME",
            dimension_numbers=("NCDHW", "OIDHW", "NCDHW"))

    def inorm_lrelu(y):
        mean = y.mean(axis=(2, 3, 4), keepdims=True)
        var = ((y - mean) ** 2).mean(axis=(2, 3, 4), keepdims=True)
        y = (y - mean) / jnp.sqrt(var + EPS)
        return jnp.where(y >= 0, y, NEG_SLOPE * y)

    h = inorm_lrelu(conv(x_ncdhw, w1))
    h = inorm_lrelu(conv(h, w2))
    return h  # Dropout is identity in eval mode.


if __name__ == "__main__":
    key = jax.random.PRNGKey(0)
    kx, kw1, kw2 = jax.random.split(key, 3)

    N, Cin, D, H, W = 2, 4, 8, 8, 8
    F = 8  # n_features

    x = jax.random.normal(kx, (N, Cin, D, H, W), dtype=jnp.float32)
    # Deterministic synthetic weights (shapes from nn.Conv3d in __init__).
    w1 = 0.1 * jax.random.normal(kw1, (F, Cin, 3, 3, 3), dtype=jnp.float32)
    w2 = 0.1 * jax.random.normal(kw2, (F, F, 3, 3, 3), dtype=jnp.float32)

    out = jax.block_until_ready(conv_block_forward(x, w1, w2))
    ref = jax.block_until_ready(_ref_forward(x, w1, w2))

    assert out.shape == (N, F, D, H, W), out.shape
    # bf16 MXU operands (f32 accumulation) vs. f32 reference -> bf16-level tolerance.
    assert jnp.allclose(out, ref, rtol=5e-2, atol=5e-2), (
        float(jnp.max(jnp.abs(out - ref))))

    print("KERNEL_OK")
</pallas_src>

<mosaic_0001>
module attributes {stable_mosaic.version = 11 : i64} {
  func.func @_fused_conv_block_kernel(%arg0: i32, %arg1: memref<1x16x512xf32, #tpu.memory_space<vmem>>, %arg2: memref<16x432xbf16, #tpu.memory_space<vmem>>, %arg3: memref<16x432xbf16, #tpu.memory_space<vmem>>, %arg4: memref<432x512xf32, #tpu.memory_space<vmem>>, %arg5: memref<1x16x512xf32, #tpu.memory_space<vmem>>, %arg6: memref<432x512xbf16, #tpu.memory_space<vmem>>) attributes {dimension_semantics = [#tpu.dimension_semantics<parallel>], iteration_bounds = array<i64: 2>, scalar_prefetch = 0 : i64, scratch_operands = 1 : i64, tpu.core_type = #tpu.core_type<tc>, window_params = [{transform_indices = @transform_0, window_bounds = array<i64: 1, 16, 512>}, {pipeline_mode = #tpu.pipeline_mode<synchronous>, transform_indices = @transform_1, window_bounds = array<i64: 16, 432>}, {pipeline_mode = #tpu.pipeline_mode<synchronous>, transform_indices = @transform_2, window_bounds = array<i64: 16, 432>}, {pipeline_mode = #tpu.pipeline_mode<synchronous>, transform_indices = @transform_3, window_bounds = array<i64: 432, 512>}, {transform_indices = @transform_4, window_bounds = array<i64: 1, 16, 512>}]} {
    %c0 = arith.constant 0 : index
    %c0_0 = arith.constant 0 : index
    %c0_1 = arith.constant 0 : index
    %0 = vector.load %arg1[%c0, %c0_0, %c0_1] : memref<1x16x512xf32, #tpu.memory_space<vmem>>, vector<1x16x512xf32>
    %1 = vector.shape_cast %0 : vector<1x16x512xf32> to vector<16x512xf32>
    %c0_2 = arith.constant 0 : index
    %c0_3 = arith.constant 0 : index
    %2 = vector.load %arg2[%c0_2, %c0_3] : memref<16x432xbf16, #tpu.memory_space<vmem>>, vector<16x432xbf16>
    %c73_i32 = arith.constant 73 : i32
    %3 = tpu.dynamic_rotate %1 by %c73_i32 dim 1 : vector<16x512xf32>, i32 -> vector<16x512xf32>
    %c0_4 = arith.constant 0 : index
    %c0_5 = arith.constant 0 : index
    %4 = vector.load %arg4[%c0_4, %c0_5] : memref<432x512xf32, #tpu.memory_space<vmem>>, vector<16x512xf32>
    %5 = arith.mulf %3, %4 : vector<16x512xf32>
    %6 = arith.truncf %5 : vector<16x512xf32> to vector<16x512xbf16>
    %c0_6 = arith.constant 0 : index
    %c0_7 = arith.constant 0 : index
    %7 = vector.load %arg6[%c0_6, %c0_7] : memref<432x512xbf16, #tpu.memory_space<vmem>>, vector<16x512xbf16>
    tpu.vector_store %arg6[%c0_6, %c0_7], %6 {strides = array<i32>} : memref<432x512xbf16, #tpu.memory_space<vmem>>, vector<16x512xbf16>,
    %c72_i32 = arith.constant 72 : i32
    %8 = tpu.dynamic_rotate %1 by %c72_i32 dim 1 : vector<16x512xf32>, i32 -> vector<16x512xf32>
    %c16 = arith.constant 16 : index
    %c0_8 = arith.constant 0 : index
    %9 = vector.load %arg4[%c16, %c0_8] : memref<432x512xf32, #tpu.memory_space<vmem>>, vector<16x512xf32>
    %10 = arith.mulf %8, %9 : vector<16x512xf32>
    %11 = arith.truncf %10 : vector<16x512xf32> to vector<16x512xbf16>
    %c16_9 = arith.constant 16 : index
    %c0_10 = arith.constant 0 : index
    %12 = vector.load %arg6[%c16_9, %c0_10] : memref<432x512xbf16, #tpu.memory_space<vmem>>, vector<16x512xbf16>
    tpu.vector_store %arg6[%c16_9, %c0_10], %11 {strides = array<i32>} : memref<432x512xbf16, #tpu.memory_space<vmem>>, vector<16x512xbf16>,
    %c71_i32 = arith.constant 71 : i32
    %13 = tpu.dynamic_rotate %1 by %c71_i32 dim 1 : vector<16x512xf32>, i32 -> vector<16x512xf32>
    %c32 = arith.constant 32 : index
    %c0_11 = arith.constant 0 : index
    %14 = vector.load %arg4[%c32, %c0_11] : memref<432x512xf32, #tpu.memory_space<vmem>>, vector<16x512xf32>
    %15 = arith.mulf %13, %14 : vector<16x512xf32>
    %16 = arith.truncf %15 : vector<16x512xf32> to vector<16x512xbf16>
    %c32_12 = arith.constant 32 : index
    %c0_13 = arith.constant 0 : index
    %17 = vector.load %arg6[%c32_12, %c0_13] : memref<432x512xbf16, #tpu.memory_space<vmem>>, vector<16x512xbf16>
    tpu.vector_store %arg6[%c32_12, %c0_13], %16 {strides = array<i32>} : memref<432x512xbf16, #tpu.memory_space<vmem>>, vector<16x512xbf16>,
    %c65_i32 = arith.constant 65 : i32
    %18 = tpu.dynamic_rotate %1 by %c65_i32 dim 1 : vector<16x512xf32>, i32 -> vector<16x512xf32>
    %c48 = arith.constant 48 : index
    %c0_14 = arith.constant 0 : index
    %19 = vector.load %arg4[%c48, %c0_14] : memref<432x512xf32, #tpu.memory_space<vmem>>, vector<16x512xf32>
    %20 = arith.mulf %18, %19 : vector<16x512xf32>
    %21 = arith.truncf %20 : vector<16x512xf32> to vector<16x512xbf16>
    %c48_15 = arith.constant 48 : index
    %c0_16 = arith.constant 0 : index
    %22 = vector.load %arg6[%c48_15, %c0_16] : memref<432x512xbf16, #tpu.memory_space<vmem>>, vector<16x512xbf16>
    tpu.vector_store %arg6[%c48_15, %c0_16], %21 {strides = array<i32>} : memref<432x512xbf16, #tpu.memory_space<vmem>>, vector<16x512xbf16>,
    %c64_i32 = arith.constant 64 : i32
    %23 = tpu.dynamic_rotate %1 by %c64_i32 dim 1 : vector<16x512xf32>, i32 -> vector<16x512xf32>
    %c64 = arith.constant 64 : index
    %c0_17 = arith.constant 0 : index
    %24 = vector.load %arg4[%c64, %c0_17] : memref<432x512xf32, #tpu.memory_space<vmem>>, vector<16x512xf32>
    %25 = arith.mulf %23, %24 : vector<16x512xf32>
    %26 = arith.truncf %25 : vector<16x512xf32> to vector<16x512xbf16>
    %c64_18 = arith.constant 64 : index
    %c0_19 = arith.constant 0 : index
    %27 = vector.load %arg6[%c64_18, %c0_19] : memref<432x512xbf16, #tpu.memory_space<vmem>>, vector<16x512xbf16>
    tpu.vector_store %arg6[%c64_18, %c0_19], %26 {strides = array<i32>} : memref<432x512xbf16, #tpu.memory_space<vmem>>, vector<16x512xbf16>,
    %c63_i32 = arith.constant 63 : i32
    %28 = tpu.dynamic_rotate %1 by %c63_i32 dim 1 : vector<16x512xf32>, i32 -> vector<16x512xf32>
    %c80 = arith.constant 80 : index
    %c0_20 = arith.constant 0 : index
    %29 = vector.load %arg4[%c80, %c0_20] : memref<432x512xf32, #tpu.memory_space<vmem>>, vector<16x512xf32>
    %30 = arith.mulf %28, %29 : vector<16x512xf32>
    %31 = arith.truncf %30 : vector<16x512xf32> to vector<16x512xbf16>
    %c80_21 = arith.constant 80 : index
    %c0_22 = arith.constant 0 : index
    %32 = vector.load %arg6[%c80_21, %c0_22] : memref<432x512xbf16, #tpu.memory_space<vmem>>, vector<16x512xbf16>
    tpu.vector_store %arg6[%c80_21, %c0_22], %31 {strides = array<i32>} : memref<432x512xbf16, #tpu.memory_space<vmem>>, vector<16x512xbf16>,
    %c57_i32 = arith.constant 57 : i32
    %33 = tpu.dynamic_rotate %1 by %c57_i32 dim 1 : vector<16x512xf32>, i32 -> vector<16x512xf32>
    %c96 = arith.constant 96 : index
    %c0_23 = arith.constant 0 : index
    %34 = vector.load %arg4[%c96, %c0_23] : memref<432x512xf32, #tpu.memory_space<vmem>>, vector<16x512xf32>
    %35 = arith.mulf %33, %34 : vector<16x512xf32>
    %36 = arith.truncf %35 : vector<16x512xf32> to vector<16x512xbf16>
    %c96_24 = arith.constant 96 : index
    %c0_25 = arith.constant 0 : index
    %37 = vector.load %arg6[%c96_24, %c0_25] : memref<432x512xbf16, #tpu.memory_space<vmem>>, vector<16x512xbf16>
    tpu.vector_store %arg6[%c96_24, %c0_25], %36 {strides = array<i32>} : memref<432x512xbf16, #tpu.memory_space<vmem>>, vector<16x512xbf16>,
    %c56_i32 = arith.constant 56 : i32
    %38 = tpu.dynamic_rotate %1 by %c56_i32 dim 1 : vector<16x512xf32>, i32 -> vector<16x512xf32>
    %c112 = arith.constant 112 : index
    %c0_26 = arith.constant 0 : index
    %39 = vector.load %arg4[%c112, %c0_26] : memref<432x512xf32, #tpu.memory_space<vmem>>, vector<16x512xf32>
    %40 = arith.mulf %38, %39 : vector<16x512xf32>
    %41 = arith.truncf %40 : vector<16x512xf32> to vector<16x512xbf16>
    %c112_27 = arith.constant 112 : index
    %c0_28 = arith.constant 0 : index
    %42 = vector.load %arg6[%c112_27, %c0_28] : memref<432x512xbf16, #tpu.memory_space<vmem>>, vector<16x512xbf16>
    tpu.vector_store %arg6[%c112_27, %c0_28], %41 {strides = array<i32>} : memref<432x512xbf16, #tpu.memory_space<vmem>>, vector<16x512xbf16>,
    %c55_i32 = arith.constant 55 : i32
    %43 = tpu.dynamic_rotate %1 by %c55_i32 dim 1 : vector<16x512xf32>, i32 -> vector<16x512xf32>
    %c128 = arith.constant 128 : index
    %c0_29 = arith.constant 0 : index
    %44 = vector.load %arg4[%c128, %c0_29] : memref<432x512xf32, #tpu.memory_space<vmem>>, vector<16x512xf32>
    %45 = arith.mulf %43, %44 : vector<16x512xf32>
    %46 = arith.truncf %45 : vector<16x512xf32> to vector<16x512xbf16>
    %c128_30 = arith.constant 128 : index
    %c0_31 = arith.constant 0 : index
    %47 = vector.load %arg6[%c128_30, %c0_31] : memref<432x512xbf16, #tpu.memory_space<vmem>>, vector<16x512xbf16>
    tpu.vector_store %arg6[%c128_30, %c0_31], %46 {strides = array<i32>} : memref<432x512xbf16, #tpu.memory_space<vmem>>, vector<16x512xbf16>,
    %c9_i32 = arith.constant 9 : i32
    %48 = tpu.dynamic_rotate %1 by %c9_i32 dim 1 : vector<16x512xf32>, i32 -> vector<16x512xf32>
    %c144 = arith.constant 144 : index
    %c0_32 = arith.constant 0 : index
    %49 = vector.load %arg4[%c144, %c0_32] : memref<432x512xf32, #tpu.memory_space<vmem>>, vector<16x512xf32>
    %50 = arith.mulf %48, %49 : vector<16x512xf32>
    %51 = arith.truncf %50 : vector<16x512xf32> to vector<16x512xbf16>
    %c144_33 = arith.constant 144 : index
    %c0_34 = arith.constant 0 : index
    %52 = vector.load %arg6[%c144_33, %c0_34] : memref<432x512xbf16, #tpu.memory_space<vmem>>, vector<16x512xbf16>
    tpu.vector_store %arg6[%c144_33, %c0_34], %51 {strides = array<i32>} : memref<432x512xbf16, #tpu.memory_space<vmem>>, vector<16x512xbf16>,
    %c8_i32 = arith.constant 8 : i32
    %53 = tpu.dynamic_rotate %1 by %c8_i32 dim 1 : vector<16x512xf32>, i32 -> vector<16x512xf32>
    %c160 = arith.constant 160 : index
    %c0_35 = arith.constant 0 : index
    %54 = vector.load %arg4[%c160, %c0_35] : memref<432x512xf32, #tpu.memory_space<vmem>>, vector<16x512xf32>
    %55 = arith.mulf %53, %54 : vector<16x512xf32>
    %56 = arith.truncf %55 : vector<16x512xf32> to vector<16x512xbf16>
    %c160_36 = arith.constant 160 : index
    %c0_37 = arith.constant 0 : index
    %57 = vector.load %arg6[%c160_36, %c0_37] : memref<432x512xbf16, #tpu.memory_space<vmem>>, vector<16x512xbf16>
    tpu.vector_store %arg6[%c160_36, %c0_37], %56 {strides = array<i32>} : memref<432x512xbf16, #tpu.memory_space<vmem>>, vector<16x512xbf16>,
    %c7_i32 = arith.constant 7 : i32
    %58 = tpu.dynamic_rotate %1 by %c7_i32 dim 1 : vector<16x512xf32>, i32 -> vector<16x512xf32>
    %c176 = arith.constant 176 : index
    %c0_38 = arith.constant 0 : index
    %59 = vector.load %arg4[%c176, %c0_38] : memref<432x512xf32, #tpu.memory_space<vmem>>, vector<16x512xf32>
    %60 = arith.mulf %58, %59 : vector<16x512xf32>
    %61 = arith.truncf %60 : vector<16x512xf32> to vector<16x512xbf16>
    %c176_39 = arith.constant 176 : index
    %c0_40 = arith.constant 0 : index
    %62 = vector.load %arg6[%c176_39, %c0_40] : memref<432x512xbf16, #tpu.memory_space<vmem>>, vector<16x512xbf16>
    tpu.vector_store %arg6[%c176_39, %c0_40], %61 {strides = array<i32>} : memref<432x512xbf16, #tpu.memory_space<vmem>>, vector<16x512xbf16>,
    %c1_i32 = arith.constant 1 : i32
    %63 = tpu.dynamic_rotate %1 by %c1_i32 dim 1 : vector<16x512xf32>, i32 -> vector<16x512xf32>
    %c192 = arith.constant 192 : index
    %c0_41 = arith.constant 0 : index
    %64 = vector.load %arg4[%c192, %c0_41] : memref<432x512xf32, #tpu.memory_space<vmem>>, vector<16x512xf32>
    %65 = arith.mulf %63, %64 : vector<16x512xf32>
    %66 = arith.truncf %65 : vector<16x512xf32> to vector<16x512xbf16>
    %c192_42 = arith.constant 192 : index
    %c0_43 = arith.constant 0 : index
    %67 = vector.load %arg6[%c192_42, %c0_43] : memref<432x512xbf16, #tpu.memory_space<vmem>>, vector<16x512xbf16>
    tpu.vector_store %arg6[%c192_42, %c0_43], %66 {strides = array<i32>} : memref<432x512xbf16, #tpu.memory_space<vmem>>, vector<16x512xbf16>,
    %68 = arith.truncf %1 : vector<16x512xf32> to vector<16x512xbf16>
    %c208 = arith.constant 208 : index
    %c0_44 = arith.constant 0 : index
    %69 = vector.load %arg6[%c208, %c0_44] : memref<432x512xbf16, #tpu.memory_space<vmem>>, vector<16x512xbf16>
    tpu.vector_store %arg6[%c208, %c0_44], %68 {strides = array<i32>} : memref<432x512xbf16, #tpu.memory_space<vmem>>, vector<16x512xbf16>,
    %c511_i32 = arith.constant 511 : i32
    %70 = tpu.dynamic_rotate %1 by %c511_i32 dim 1 : vector<16x512xf32>, i32 -> vector<16x512xf32>
    %c224 = arith.constant 224 : index
    %c0_45 = arith.constant 0 : index
    %71 = vector.load %arg4[%c224, %c0_45] : memref<432x512xf32, #tpu.memory_space<vmem>>, vector<16x512xf32>
    %72 = arith.mulf %70, %71 : vector<16x512xf32>
    %73 = arith.truncf %72 : vector<16x512xf32> to vector<16x512xbf16>
    %c224_46 = arith.constant 224 : index
    %c0_47 = arith.constant 0 : index
    %74 = vector.load %arg6[%c224_46, %c0_47] : memref<432x512xbf16, #tpu.memory_space<vmem>>, vector<16x512xbf16>
    tpu.vector_store %arg6[%c224_46, %c0_47], %73 {strides = array<i32>} : memref<432x512xbf16, #tpu.memory_space<vmem>>, vector<16x512xbf16>,
    %c505_i32 = arith.constant 505 : i32
    %75 = tpu.dynamic_rotate %1 by %c505_i32 dim 1 : vector<16x512xf32>, i32 -> vector<16x512xf32>
    %c240 = arith.constant 240 : index
    %c0_48 = arith.constant 0 : index
    %76 = vector.load %arg4[%c240, %c0_48] : memref<432x512xf32, #tpu.memory_space<vmem>>, vector<16x512xf32>
    %77 = arith.mulf %75, %76 : vector<16x512xf32>
    %78 = arith.truncf %77 : vector<16x512xf32> to vector<16x512xbf16>
    %c240_49 = arith.constant 240 : index
    %c0_50 = arith.constant 0 : index
    %79 = vector.load %arg6[%c240_49, %c0_50] : memref<432x512xbf16, #tpu.memory_space<vmem>>, vector<16x512xbf16>
    tpu.vector_store %arg6[%c240_49, %c0_50], %78 {strides = array<i32>} : memref<432x512xbf16, #tpu.memory_space<vmem>>, vector<16x512xbf16>,
    %c504_i32 = arith.constant 504 : i32
    %80 = tpu.dynamic_rotate %1 by %c504_i32 dim 1 : vector<16x512xf32>, i32 -> vector<16x512xf32>
    %c256 = arith.constant 256 : index
    %c0_51 = arith.constant 0 : index
    %81 = vector.load %arg4[%c256, %c0_51] : memref<432x512xf32, #tpu.memory_space<vmem>>, vector<16x512xf32>
    %82 = arith.mulf %80, %81 : vector<16x512xf32>
    %83 = arith.truncf %82 : vector<16x512xf32> to vector<16x512xbf16>
    %c256_52 = arith.constant 256 : index
    %c0_53 = arith.constant 0 : index
    %84 = vector.load %arg6[%c256_52, %c0_53] : memref<432x512xbf16, #tpu.memory_space<vmem>>, vector<16x512xbf16>
    tpu.vector_store %arg6[%c256_52, %c0_53], %83 {strides = array<i32>} : memref<432x512xbf16, #tpu.memory_space<vmem>>, vector<16x512xbf16>,
    %c503_i32 = arith.constant 503 : i32
    %85 = tpu.dynamic_rotate %1 by %c503_i32 dim 1 : vector<16x512xf32>, i32 -> vector<16x512xf32>
    %c272 = arith.constant 272 : index
    %c0_54 = arith.constant 0 : index
    %86 = vector.load %arg4[%c272, %c0_54] : memref<432x512xf32, #tpu.memory_space<vmem>>, vector<16x512xf32>
    %87 = arith.mulf %85, %86 : vector<16x512xf32>
    %88 = arith.truncf %87 : vector<16x512xf32> to vector<16x512xbf16>
    %c272_55 = arith.constant 272 : index
    %c0_56 = arith.constant 0 : index
    %89 = vector.load %arg6[%c272_55, %c0_56] : memref<432x512xbf16, #tpu.memory_space<vmem>>, vector<16x512xbf16>
    tpu.vector_store %arg6[%c272_55, %c0_56], %88 {strides = array<i32>} : memref<432x512xbf16, #tpu.memory_space<vmem>>, vector<16x512xbf16>,
    %c457_i32 = arith.constant 457 : i32
    %90 = tpu.dynamic_rotate %1 by %c457_i32 dim 1 : vector<16x512xf32>, i32 -> vector<16x512xf32>
    %c288 = arith.constant 288 : index
    %c0_57 = arith.constant 0 : index
    %91 = vector.load %arg4[%c288, %c0_57] : memref<432x512xf32, #tpu.memory_space<vmem>>, vector<16x512xf32>
    %92 = arith.mulf %90, %91 : vector<16x512xf32>
    %93 = arith.truncf %92 : vector<16x512xf32> to vector<16x512xbf16>
    %c288_58 = arith.constant 288 : index
    %c0_59 = arith.constant 0 : index
    %94 = vector.load %arg6[%c288_58, %c0_59] : memref<432x512xbf16, #tpu.memory_space<vmem>>, vector<16x512xbf16>
    tpu.vector_store %arg6[%c288_58, %c0_59], %93 {strides = array<i32>} : memref<432x512xbf16, #tpu.memory_space<vmem>>, vector<16x512xbf16>,
    %c456_i32 = arith.constant 456 : i32
    %95 = tpu.dynamic_rotate %1 by %c456_i32 dim 1 : vector<16x512xf32>, i32 -> vector<16x512xf32>
    %c304 = arith.constant 304 : index
    %c0_60 = arith.constant 0 : index
    %96 = vector.load %arg4[%c304, %c0_60] : memref<432x512xf32, #tpu.memory_space<vmem>>, vector<16x512xf32>
    %97 = arith.mulf %95, %96 : vector<16x512xf32>
    %98 = arith.truncf %97 : vector<16x512xf32> to vector<16x512xbf16>
    %c304_61 = arith.constant 304 : index
    %c0_62 = arith.constant 0 : index
    %99 = vector.load %arg6[%c304_61, %c0_62] : memref<432x512xbf16, #tpu.memory_space<vmem>>, vector<16x512xbf16>
    tpu.vector_store %arg6[%c304_61, %c0_62], %98 {strides = array<i32>} : memref<432x512xbf16, #tpu.memory_space<vmem>>, vector<16x512xbf16>,
    %c455_i32 = arith.constant 455 : i32
    %100 = tpu.dynamic_rotate %1 by %c455_i32 dim 1 : vector<16x512xf32>, i32 -> vector<16x512xf32>
    %c320 = arith.constant 320 : index
    %c0_63 = arith.constant 0 : index
    %101 = vector.load %arg4[%c320, %c0_63] : memref<432x512xf32, #tpu.memory_space<vmem>>, vector<16x512xf32>
    %102 = arith.mulf %100, %101 : vector<16x512xf32>
    %103 = arith.truncf %102 : vector<16x512xf32> to vector<16x512xbf16>
    %c320_64 = arith.constant 320 : index
    %c0_65 = arith.constant 0 : index
    %104 = vector.load %arg6[%c320_64, %c0_65] : memref<432x512xbf16, #tpu.memory_space<vmem>>, vector<16x512xbf16>
    tpu.vector_store %arg6[%c320_64, %c0_65], %103 {strides = array<i32>} : memref<432x512xbf16, #tpu.memory_space<vmem>>, vector<16x512xbf16>,
    %c449_i32 = arith.constant 449 : i32
    %105 = tpu.dynamic_rotate %1 by %c449_i32 dim 1 : vector<16x512xf32>, i32 -> vector<16x512xf32>
    %c336 = arith.constant 336 : index
    %c0_66 = arith.constant 0 : index
    %106 = vector.load %arg4[%c336, %c0_66] : memref<432x512xf32, #tpu.memory_space<vmem>>, vector<16x512xf32>
    %107 = arith.mulf %105, %106 : vector<16x512xf32>
    %108 = arith.truncf %107 : vector<16x512xf32> to vector<16x512xbf16>
    %c336_67 = arith.constant 336 : index
    %c0_68 = arith.constant 0 : index
    %109 = vector.load %arg6[%c336_67, %c0_68] : memref<432x512xbf16, #tpu.memory_space<vmem>>, vector<16x512xbf16>
    tpu.vector_store %arg6[%c336_67, %c0_68], %108 {strides = array<i32>} : memref<432x512xbf16, #tpu.memory_space<vmem>>, vector<16x512xbf16>,
    %c448_i32 = arith.constant 448 : i32
    %110 = tpu.dynamic_rotate %1 by %c448_i32 dim 1 : vector<16x512xf32>, i32 -> vector<16x512xf32>
    %c352 = arith.constant 352 : index
    %c0_69 = arith.constant 0 : index
    %111 = vector.load %arg4[%c352, %c0_69] : memref<432x512xf32, #tpu.memory_space<vmem>>, vector<16x512xf32>
    %112 = arith.mulf %110, %111 : vector<16x512xf32>
    %113 = arith.truncf %112 : vector<16x512xf32> to vector<16x512xbf16>
    %c352_70 = arith.constant 352 : index
    %c0_71 = arith.constant 0 : index
    %114 = vector.load %arg6[%c352_70, %c0_71] : memref<432x512xbf16, #tpu.memory_space<vmem>>, vector<16x512xbf16>
    tpu.vector_store %arg6[%c352_70, %c0_71], %113 {strides = array<i32>} : memref<432x512xbf16, #tpu.memory_space<vmem>>, vector<16x512xbf16>,
    %c447_i32 = arith.constant 447 : i32
    %115 = tpu.dynamic_rotate %1 by %c447_i32 dim 1 : vector<16x512xf32>, i32 -> vector<16x512xf32>
    %c368 = arith.constant 368 : index
    %c0_72 = arith.constant 0 : index
    %116 = vector.load %arg4[%c368, %c0_72] : memref<432x512xf32, #tpu.memory_space<vmem>>, vector<16x512xf32>
    %117 = arith.mulf %115, %116 : vector<16x512xf32>
    %118 = arith.truncf %117 : vector<16x512xf32> to vector<16x512xbf16>
    %c368_73 = arith.constant 368 : index
    %c0_74 = arith.constant 0 : index
    %119 = vector.load %arg6[%c368_73, %c0_74] : memref<432x512xbf16, #tpu.memory_space<vmem>>, vector<16x512xbf16>
    tpu.vector_store %arg6[%c368_73, %c0_74], %118 {strides = array<i32>} : memref<432x512xbf16, #tpu.memory_space<vmem>>, vector<16x512xbf16>,
    %c441_i32 = arith.constant 441 : i32
    %120 = tpu.dynamic_rotate %1 by %c441_i32 dim 1 : vector<16x512xf32>, i32 -> vector<16x512xf32>
    %c384 = arith.constant 384 : index
    %c0_75 = arith.constant 0 : index
    %121 = vector.load %arg4[%c384, %c0_75] : memref<432x512xf32, #tpu.memory_space<vmem>>, vector<16x512xf32>
    %122 = arith.mulf %120, %121 : vector<16x512xf32>
    %123 = arith.truncf %122 : vector<16x512xf32> to vector<16x512xbf16>
    %c384_76 = arith.constant 384 : index
    %c0_77 = arith.constant 0 : index
    %124 = vector.load %arg6[%c384_76, %c0_77] : memref<432x512xbf16, #tpu.memory_space<vmem>>, vector<16x512xbf16>
    tpu.vector_store %arg6[%c384_76, %c0_77], %123 {strides = array<i32>} : memref<432x512xbf16, #tpu.memory_space<vmem>>, vector<16x512xbf16>,
    %c440_i32 = arith.constant 440 : i32
    %125 = tpu.dynamic_rotate %1 by %c440_i32 dim 1 : vector<16x512xf32>, i32 -> vector<16x512xf32>
    %c400 = arith.constant 400 : index
    %c0_78 = arith.constant 0 : index
    %126 = vector.load %arg4[%c400, %c0_78] : memref<432x512xf32, #tpu.memory_space<vmem>>, vector<16x512xf32>
    %127 = arith.mulf %125, %126 : vector<16x512xf32>
    %128 = arith.truncf %127 : vector<16x512xf32> to vector<16x512xbf16>
    %c400_79 = arith.constant 400 : index
    %c0_80 = arith.constant 0 : index
    %129 = vector.load %arg6[%c400_79, %c0_80] : memref<432x512xbf16, #tpu.memory_space<vmem>>, vector<16x512xbf16>
    tpu.vector_store %arg6[%c400_79, %c0_80], %128 {strides = array<i32>} : memref<432x512xbf16, #tpu.memory_space<vmem>>, vector<16x512xbf16>,
    %c439_i32 = arith.constant 439 : i32
    %130 = tpu.dynamic_rotate %1 by %c439_i32 dim 1 : vector<16x512xf32>, i32 -> vector<16x512xf32>
    %c416 = arith.constant 416 : index
    %c0_81 = arith.constant 0 : index
    %131 = vector.load %arg4[%c416, %c0_81] : memref<432x512xf32, #tpu.memory_space<vmem>>, vector<16x512xf32>
    %132 = arith.mulf %130, %131 : vector<16x512xf32>
    %133 = arith.truncf %132 : vector<16x512xf32> to vector<16x512xbf16>
    %c416_82 = arith.constant 416 : index
    %c0_83 = arith.constant 0 : index
    %134 = vector.load %arg6[%c416_82, %c0_83] : memref<432x512xbf16, #tpu.memory_space<vmem>>, vector<16x512xbf16>
    tpu.vector_store %arg6[%c416_82, %c0_83], %133 {strides = array<i32>} : memref<432x512xbf16, #tpu.memory_space<vmem>>, vector<16x512xbf16>,
    %c0_84 = arith.constant 0 : index
    %c0_85 = arith.constant 0 : index
    %135 = vector.load %arg6[%c0_84, %c0_85] : memref<432x512xbf16, #tpu.memory_space<vmem>>, vector<432x512xbf16>
    %cst = arith.constant dense<0.000000e+00> : vector<16x512xf32>
    %136 = tpu.matmul %2, %135, %cst {dimension_numbers = #tpu.dot_dimension_numbers<[1], [0], [0], [1], [0, 0, 1, 1], [], []>} : vector<16x432xbf16>, vector<432x512xbf16>, vector<16x512xf32> -> vector<16x512xf32>
    %cst_86 = arith.constant dense<0.000000e+00> : vector<16xf32>
    %137 = vector.multi_reduction <add>, %136, %cst_86 [1] : vector<16x512xf32> to vector<16xf32>
    %138 = vector.shape_cast %137 : vector<16xf32> to vector<16x1xf32>
    %cst_87 = arith.constant 0.001953125 : f32
    %139 = vector.broadcast %cst_87 : f32 to vector<16x1xf32>
    %140 = arith.mulf %138, %139 : vector<16x1xf32>
    %141 = arith.mulf %136, %136 : vector<16x512xf32>
    %cst_88 = arith.constant dense<0.000000e+00> : vector<16xf32>
    %142 = vector.multi_reduction <add>, %141, %cst_88 [1] : vector<16x512xf32> to vector<16xf32>
    %143 = vector.shape_cast %142 : vector<16xf32> to vector<16x1xf32>
    %cst_89 = arith.constant 0.001953125 : f32
    %144 = vector.broadcast %cst_89 : f32 to vector<16x1xf32>
    %145 = arith.mulf %143, %144 : vector<16x1xf32>
    %146 = arith.mulf %140, %140 : vector<16x1xf32>
    %147 = arith.subf %145, %146 : vector<16x1xf32>
    %cst_90 = arith.constant 0.000000e+00 : f32
    %148 = vector.broadcast %cst_90 : f32 to vector<16x1xf32>
    %149 = arith.maximumf %147, %148 : vector<16x1xf32>
    %150 = vector.broadcast %140 : vector<16x1xf32> to vector<16x512xf32>
    %151 = arith.subf %136, %150 : vector<16x512xf32>
    %cst_91 = arith.constant 9.99999974E-6 : f32
    %152 = vector.broadcast %cst_91 : f32 to vector<16x1xf32>
    %153 = arith.addf %149, %152 : vector<16x1xf32>
    %154 = math.rsqrt %153 : vector<16x1xf32>
    %155 = vector.broadcast %154 : vector<16x1xf32> to vector<16x512xf32>
    %156 = arith.mulf %151, %155 : vector<16x512xf32>
    %cst_92 = arith.constant 0.000000e+00 : f32
    %157 = vector.broadcast %cst_92 : f32 to vector<16x512xf32>
    %158 = arith.cmpf oge, %156, %157 : vector<16x512xf32>
    %cst_93 = arith.constant 0.00999999977 : f32
    %159 = vector.broadcast %cst_93 : f32 to vector<16x512xf32>
    %160 = arith.mulf %159, %156 : vector<16x512xf32>
    %161 = arith.select %158, %156, %160 : vector<16x512xi1>, vector<16x512xf32>
    %c0_94 = arith.constant 0 : index
    %c0_95 = arith.constant 0 : index
    %162 = vector.load %arg3[%c0_94, %c0_95] : memref<16x432xbf16, #tpu.memory_space<vmem>>, vector<16x432xbf16>
    %c73_i32_96 = arith.constant 73 : i32
    %163 = tpu.dynamic_rotate %161 by %c73_i32_96 dim 1 : vector<16x512xf32>, i32 -> vector<16x512xf32>
    %c0_97 = arith.constant 0 : index
    %c0_98 = arith.constant 0 : index
    %164 = vector.load %arg4[%c0_97, %c0_98] : memref<432x512xf32, #tpu.memory_space<vmem>>, vector<16x512xf32>
    %165 = arith.mulf %163, %164 : vector<16x512xf32>
    %166 = arith.truncf %165 : vector<16x512xf32> to vector<16x512xbf16>
    %c0_99 = arith.constant 0 : index
    %c0_100 = arith.constant 0 : index
    %167 = vector.load %arg6[%c0_99, %c0_100] : memref<432x512xbf16, #tpu.memory_space<vmem>>, vector<16x512xbf16>
    tpu.vector_store %arg6[%c0_99, %c0_100], %166 {strides = array<i32>} : memref<432x512xbf16, #tpu.memory_space<vmem>>, vector<16x512xbf16>,
    %c72_i32_101 = arith.constant 72 : i32
    %168 = tpu.dynamic_rotate %161 by %c72_i32_101 dim 1 : vector<16x512xf32>, i32 -> vector<16x512xf32>
    %c16_102 = arith.constant 16 : index
    %c0_103 = arith.constant 0 : index
    %169 = vector.load %arg4[%c16_102, %c0_103] : memref<432x512xf32, #tpu.memory_space<vmem>>, vector<16x512xf32>
    %170 = arith.mulf %168, %169 : vector<16x512xf32>
    %171 = arith.truncf %170 : vector<16x512xf32> to vector<16x512xbf16>
    %c16_104 = arith.constant 16 : index
    %c0_105 = arith.constant 0 : index
    %172 = vector.load %arg6[%c16_104, %c0_105] : memref<432x512xbf16, #tpu.memory_space<vmem>>, vector<16x512xbf16>
    tpu.vector_store %arg6[%c16_104, %c0_105], %171 {strides = array<i32>} : memref<432x512xbf16, #tpu.memory_space<vmem>>, vector<16x512xbf16>,
    %c71_i32_106 = arith.constant 71 : i32
    %173 = tpu.dynamic_rotate %161 by %c71_i32_106 dim 1 : vector<16x512xf32>, i32 -> vector<16x512xf32>
    %c32_107 = arith.constant 32 : index
    %c0_108 = arith.constant 0 : index
    %174 = vector.load %arg4[%c32_107, %c0_108] : memref<432x512xf32, #tpu.memory_space<vmem>>, vector<16x512xf32>
    %175 = arith.mulf %173, %174 : vector<16x512xf32>
    %176 = arith.truncf %175 : vector<16x512xf32> to vector<16x512xbf16>
    %c32_109 = arith.constant 32 : index
    %c0_110 = arith.constant 0 : index
    %177 = vector.load %arg6[%c32_109, %c0_110] : memref<432x512xbf16, #tpu.memory_space<vmem>>, vector<16x512xbf16>
    tpu.vector_store %arg6[%c32_109, %c0_110], %176 {strides = array<i32>} : memref<432x512xbf16, #tpu.memory_space<vmem>>, vector<16x512xbf16>,
    %c65_i32_111 = arith.constant 65 : i32
    %178 = tpu.dynamic_rotate %161 by %c65_i32_111 dim 1 : vector<16x512xf32>, i32 -> vector<16x512xf32>
    %c48_112 = arith.constant 48 : index
    %c0_113 = arith.constant 0 : index
    %179 = vector.load %arg4[%c48_112, %c0_113] : memref<432x512xf32, #tpu.memory_space<vmem>>, vector<16x512xf32>
    %180 = arith.mulf %178, %179 : vector<16x512xf32>
    %181 = arith.truncf %180 : vector<16x512xf32> to vector<16x512xbf16>
    %c48_114 = arith.constant 48 : index
    %c0_115 = arith.constant 0 : index
    %182 = vector.load %arg6[%c48_114, %c0_115] : memref<432x512xbf16, #tpu.memory_space<vmem>>, vector<16x512xbf16>
    tpu.vector_store %arg6[%c48_114, %c0_115], %181 {strides = array<i32>} : memref<432x512xbf16, #tpu.memory_space<vmem>>, vector<16x512xbf16>,
    %c64_i32_116 = arith.constant 64 : i32
    %183 = tpu.dynamic_rotate %161 by %c64_i32_116 dim 1 : vector<16x512xf32>, i32 -> vector<16x512xf32>
    %c64_117 = arith.constant 64 : index
    %c0_118 = arith.constant 0 : index
    %184 = vector.load %arg4[%c64_117, %c0_118] : memref<432x512xf32, #tpu.memory_space<vmem>>, vector<16x512xf32>
    %185 = arith.mulf %183, %184 : vector<16x512xf32>
    %186 = arith.truncf %185 : vector<16x512xf32> to vector<16x512xbf16>
    %c64_119 = arith.constant 64 : index
    %c0_120 = arith.constant 0 : index
    %187 = vector.load %arg6[%c64_119, %c0_120] : memref<432x512xbf16, #tpu.memory_space<vmem>>, vector<16x512xbf16>
    tpu.vector_store %arg6[%c64_119, %c0_120], %186 {strides = array<i32>} : memref<432x512xbf16, #tpu.memory_space<vmem>>, vector<16x512xbf16>,
    %c63_i32_121 = arith.constant 63 : i32
    %188 = tpu.dynamic_rotate %161 by %c63_i32_121 dim 1 : vector<16x512xf32>, i32 -> vector<16x512xf32>
    %c80_122 = arith.constant 80 : index
    %c0_123 = arith.constant 0 : index
    %189 = vector.load %arg4[%c80_122, %c0_123] : memref<432x512xf32, #tpu.memory_space<vmem>>, vector<16x512xf32>
    %190 = arith.mulf %188, %189 : vector<16x512xf32>
    %191 = arith.truncf %190 : vector<16x512xf32> to vector<16x512xbf16>
    %c80_124 = arith.constant 80 : index
    %c0_125 = arith.constant 0 : index
    %192 = vector.load %arg6[%c80_124, %c0_125] : memref<432x512xbf16, #tpu.memory_space<vmem>>, vector<16x512xbf16>
    tpu.vector_store %arg6[%c80_124, %c0_125], %191 {strides = array<i32>} : memref<432x512xbf16, #tpu.memory_space<vmem>>, vector<16x512xbf16>,
    %c57_i32_126 = arith.constant 57 : i32
    %193 = tpu.dynamic_rotate %161 by %c57_i32_126 dim 1 : vector<16x512xf32>, i32 -> vector<16x512xf32>
    %c96_127 = arith.constant 96 : index
    %c0_128 = arith.constant 0 : index
    %194 = vector.load %arg4[%c96_127, %c0_128] : memref<432x512xf32, #tpu.memory_space<vmem>>, vector<16x512xf32>
    %195 = arith.mulf %193, %194 : vector<16x512xf32>
    %196 = arith.truncf %195 : vector<16x512xf32> to vector<16x512xbf16>
    %c96_129 = arith.constant 96 : index
    %c0_130 = arith.constant 0 : index
    %197 = vector.load %arg6[%c96_129, %c0_130] : memref<432x512xbf16, #tpu.memory_space<vmem>>, vector<16x512xbf16>
    tpu.vector_store %arg6[%c96_129, %c0_130], %196 {strides = array<i32>} : memref<432x512xbf16, #tpu.memory_space<vmem>>, vector<16x512xbf16>,
    %c56_i32_131 = arith.constant 56 : i32
    %198 = tpu.dynamic_rotate %161 by %c56_i32_131 dim 1 : vector<16x512xf32>, i32 -> vector<16x512xf32>
    %c112_132 = arith.constant 112 : index
    %c0_133 = arith.constant 0 : index
    %199 = vector.load %arg4[%c112_132, %c0_133] : memref<432x512xf32, #tpu.memory_space<vmem>>, vector<16x512xf32>
    %200 = arith.mulf %198, %199 : vector<16x512xf32>
    %201 = arith.truncf %200 : vector<16x512xf32> to vector<16x512xbf16>
    %c112_134 = arith.constant 112 : index
    %c0_135 = arith.constant 0 : index
    %202 = vector.load %arg6[%c112_134, %c0_135] : memref<432x512xbf16, #tpu.memory_space<vmem>>, vector<16x512xbf16>
    tpu.vector_store %arg6[%c112_134, %c0_135], %201 {strides = array<i32>} : memref<432x512xbf16, #tpu.memory_space<vmem>>, vector<16x512xbf16>,
    %c55_i32_136 = arith.constant 55 : i32
    %203 = tpu.dynamic_rotate %161 by %c55_i32_136 dim 1 : vector<16x512xf32>, i32 -> vector<16x512xf32>
    %c128_137 = arith.constant 128 : index
    %c0_138 = arith.constant 0 : index
    %204 = vector.load %arg4[%c128_137, %c0_138] : memref<432x512xf32, #tpu.memory_space<vmem>>, vector<16x512xf32>
    %205 = arith.mulf %203, %204 : vector<16x512xf32>
    %206 = arith.truncf %205 : vector<16x512xf32> to vector<16x512xbf16>
    %c128_139 = arith.constant 128 : index
    %c0_140 = arith.constant 0 : index
    %207 = vector.load %arg6[%c128_139, %c0_140] : memref<432x512xbf16, #tpu.memory_space<vmem>>, vector<16x512xbf16>
    tpu.vector_store %arg6[%c128_139, %c0_140], %206 {strides = array<i32>} : memref<432x512xbf16, #tpu.memory_space<vmem>>, vector<16x512xbf16>,
    %c9_i32_141 = arith.constant 9 : i32
    %208 = tpu.dynamic_rotate %161 by %c9_i32_141 dim 1 : vector<16x512xf32>, i32 -> vector<16x512xf32>
    %c144_142 = arith.constant 144 : index
    %c0_143 = arith.constant 0 : index
    %209 = vector.load %arg4[%c144_142, %c0_143] : memref<432x512xf32, #tpu.memory_space<vmem>>, vector<16x512xf32>
    %210 = arith.mulf %208, %209 : vector<16x512xf32>
    %211 = arith.truncf %210 : vector<16x512xf32> to vector<16x512xbf16>
    %c144_144 = arith.constant 144 : index
    %c0_145 = arith.constant 0 : index
    %212 = vector.load %arg6[%c144_144, %c0_145] : memref<432x512xbf16, #tpu.memory_space<vmem>>, vector<16x512xbf16>
    tpu.vector_store %arg6[%c144_144, %c0_145], %211 {strides = array<i32>} : memref<432x512xbf16, #tpu.memory_space<vmem>>, vector<16x512xbf16>,
    %c8_i32_146 = arith.constant 8 : i32
    %213 = tpu.dynamic_rotate %161 by %c8_i32_146 dim 1 : vector<16x512xf32>, i32 -> vector<16x512xf32>
    %c160_147 = arith.constant 160 : index
    %c0_148 = arith.constant 0 : index
    %214 = vector.load %arg4[%c160_147, %c0_148] : memref<432x512xf32, #tpu.memory_space<vmem>>, vector<16x512xf32>
    %215 = arith.mulf %213, %214 : vector<16x512xf32>
    %216 = arith.truncf %215 : vector<16x512xf32> to vector<16x512xbf16>
    %c160_149 = arith.constant 160 : index
    %c0_150 = arith.constant 0 : index
    %217 = vector.load %arg6[%c160_149, %c0_150] : memref<432x512xbf16, #tpu.memory_space<vmem>>, vector<16x512xbf16>
    tpu.vector_store %arg6[%c160_149, %c0_150], %216 {strides = array<i32>} : memref<432x512xbf16, #tpu.memory_space<vmem>>, vector<16x512xbf16>,
    %c7_i32_151 = arith.constant 7 : i32
    %218 = tpu.dynamic_rotate %161 by %c7_i32_151 dim 1 : vector<16x512xf32>, i32 -> vector<16x512xf32>
    %c176_152 = arith.constant 176 : index
    %c0_153 = arith.constant 0 : index
    %219 = vector.load %arg4[%c176_152, %c0_153] : memref<432x512xf32, #tpu.memory_space<vmem>>, vector<16x512xf32>
    %220 = arith.mulf %218, %219 : vector<16x512xf32>
    %221 = arith.truncf %220 : vector<16x512xf32> to vector<16x512xbf16>
    %c176_154 = arith.constant 176 : index
    %c0_155 = arith.constant 0 : index
    %222 = vector.load %arg6[%c176_154, %c0_155] : memref<432x512xbf16, #tpu.memory_space<vmem>>, vector<16x512xbf16>
    tpu.vector_store %arg6[%c176_154, %c0_155], %221 {strides = array<i32>} : memref<432x512xbf16, #tpu.memory_space<vmem>>, vector<16x512xbf16>,
    %c1_i32_156 = arith.constant 1 : i32
    %223 = tpu.dynamic_rotate %161 by %c1_i32_156 dim 1 : vector<16x512xf32>, i32 -> vector<16x512xf32>
    %c192_157 = arith.constant 192 : index
    %c0_158 = arith.constant 0 : index
    %224 = vector.load %arg4[%c192_157, %c0_158] : memref<432x512xf32, #tpu.memory_space<vmem>>, vector<16x512xf32>
    %225 = arith.mulf %223, %224 : vector<16x512xf32>
    %226 = arith.truncf %225 : vector<16x512xf32> to vector<16x512xbf16>
    %c192_159 = arith.constant 192 : index
    %c0_160 = arith.constant 0 : index
    %227 = vector.load %arg6[%c192_159, %c0_160] : memref<432x512xbf16, #tpu.memory_space<vmem>>, vector<16x512xbf16>
    tpu.vector_store %arg6[%c192_159, %c0_160], %226 {strides = array<i32>} : memref<432x512xbf16, #tpu.memory_space<vmem>>, vector<16x512xbf16>,
    %228 = arith.truncf %161 : vector<16x512xf32> to vector<16x512xbf16>
    %c208_161 = arith.constant 208 : index
    %c0_162 = arith.constant 0 : index
    %229 = vector.load %arg6[%c208_161, %c0_162] : memref<432x512xbf16, #tpu.memory_space<vmem>>, vector<16x512xbf16>
    tpu.vector_store %arg6[%c208_161, %c0_162], %228 {strides = array<i32>} : memref<432x512xbf16, #tpu.memory_space<vmem>>, vector<16x512xbf16>,
    %c511_i32_163 = arith.constant 511 : i32
    %230 = tpu.dynamic_rotate %161 by %c511_i32_163 dim 1 : vector<16x512xf32>, i32 -> vector<16x512xf32>
    %c224_164 = arith.constant 224 : index
    %c0_165 = arith.constant 0 : index
    %231 = vector.load %arg4[%c224_164, %c0_165] : memref<432x512xf32, #tpu.memory_space<vmem>>, vector<16x512xf32>
    %232 = arith.mulf %230, %231 : vector<16x512xf32>
    %233 = arith.truncf %232 : vector<16x512xf32> to vector<16x512xbf16>
    %c224_166 = arith.constant 224 : index
    %c0_167 = arith.constant 0 : index
    %234 = vector.load %arg6[%c224_166, %c0_167] : memref<432x512xbf16, #tpu.memory_space<vmem>>, vector<16x512xbf16>
    tpu.vector_store %arg6[%c224_166, %c0_167], %233 {strides = array<i32>} : memref<432x512xbf16, #tpu.memory_space<vmem>>, vector<16x512xbf16>,
    %c505_i32_168 = arith.constant 505 : i32
    %235 = tpu.dynamic_rotate %161 by %c505_i32_168 dim 1 : vector<16x512xf32>, i32 -> vector<16x512xf32>
    %c240_169 = arith.constant 240 : index
    %c0_170 = arith.constant 0 : index
    %236 = vector.load %arg4[%c240_169, %c0_170] : memref<432x512xf32, #tpu.memory_space<vmem>>, vector<16x512xf32>
    %237 = arith.mulf %235, %236 : vector<16x512xf32>
    %238 = arith.truncf %237 : vector<16x512xf32> to vector<16x512xbf16>
    %c240_171 = arith.constant 240 : index
    %c0_172 = arith.constant 0 : index
    %239 = vector.load %arg6[%c240_171, %c0_172] : memref<432x512xbf16, #tpu.memory_space<vmem>>, vector<16x512xbf16>
    tpu.vector_store %arg6[%c240_171, %c0_172], %238 {strides = array<i32>} : memref<432x512xbf16, #tpu.memory_space<vmem>>, vector<16x512xbf16>,
    %c504_i32_173 = arith.constant 504 : i32
    %240 = tpu.dynamic_rotate %161 by %c504_i32_173 dim 1 : vector<16x512xf32>, i32 -> vector<16x512xf32>
    %c256_174 = arith.constant 256 : index
    %c0_175 = arith.constant 0 : index
    %241 = vector.load %arg4[%c256_174, %c0_175] : memref<432x512xf32, #tpu.memory_space<vmem>>, vector<16x512xf32>
    %242 = arith.mulf %240, %241 : vector<16x512xf32>
    %243 = arith.truncf %242 : vector<16x512xf32> to vector<16x512xbf16>
    %c256_176 = arith.constant 256 : index
    %c0_177 = arith.constant 0 : index
    %244 = vector.load %arg6[%c256_176, %c0_177] : memref<432x512xbf16, #tpu.memory_space<vmem>>, vector<16x512xbf16>
    tpu.vector_store %arg6[%c256_176, %c0_177], %243 {strides = array<i32>} : memref<432x512xbf16, #tpu.memory_space<vmem>>, vector<16x512xbf16>,
    %c503_i32_178 = arith.constant 503 : i32
    %245 = tpu.dynamic_rotate %161 by %c503_i32_178 dim 1 : vector<16x512xf32>, i32 -> vector<16x512xf32>
    %c272_179 = arith.constant 272 : index
    %c0_180 = arith.constant 0 : index
    %246 = vector.load %arg4[%c272_179, %c0_180] : memref<432x512xf32, #tpu.memory_space<vmem>>, vector<16x512xf32>
    %247 = arith.mulf %245, %246 : vector<16x512xf32>
    %248 = arith.truncf %247 : vector<16x512xf32> to vector<16x512xbf16>
    %c272_181 = arith.constant 272 : index
    %c0_182 = arith.constant 0 : index
    %249 = vector.load %arg6[%c272_181, %c0_182] : memref<432x512xbf16, #tpu.memory_space<vmem>>, vector<16x512xbf16>
    tpu.vector_store %arg6[%c272_181, %c0_182], %248 {strides = array<i32>} : memref<432x512xbf16, #tpu.memory_space<vmem>>, vector<16x512xbf16>,
    %c457_i32_183 = arith.constant 457 : i32
    %250 = tpu.dynamic_rotate %161 by %c457_i32_183 dim 1 : vector<16x512xf32>, i32 -> vector<16x512xf32>
    %c288_184 = arith.constant 288 : index
    %c0_185 = arith.constant 0 : index
    %251 = vector.load %arg4[%c288_184, %c0_185] : memref<432x512xf32, #tpu.memory_space<vmem>>, vector<16x512xf32>
    %252 = arith.mulf %250, %251 : vector<16x512xf32>
    %253 = arith.truncf %252 : vector<16x512xf32> to vector<16x512xbf16>
    %c288_186 = arith.constant 288 : index
    %c0_187 = arith.constant 0 : index
    %254 = vector.load %arg6[%c288_186, %c0_187] : memref<432x512xbf16, #tpu.memory_space<vmem>>, vector<16x512xbf16>
    tpu.vector_store %arg6[%c288_186, %c0_187], %253 {strides = array<i32>} : memref<432x512xbf16, #tpu.memory_space<vmem>>, vector<16x512xbf16>,
    %c456_i32_188 = arith.constant 456 : i32
    %255 = tpu.dynamic_rotate %161 by %c456_i32_188 dim 1 : vector<16x512xf32>, i32 -> vector<16x512xf32>
    %c304_189 = arith.constant 304 : index
    %c0_190 = arith.constant 0 : index
    %256 = vector.load %arg4[%c304_189, %c0_190] : memref<432x512xf32, #tpu.memory_space<vmem>>, vector<16x512xf32>
    %257 = arith.mulf %255, %256 : vector<16x512xf32>
    %258 = arith.truncf %257 : vector<16x512xf32> to vector<16x512xbf16>
    %c304_191 = arith.constant 304 : index
    %c0_192 = arith.constant 0 : index
    %259 = vector.load %arg6[%c304_191, %c0_192] : memref<432x512xbf16, #tpu.memory_space<vmem>>, vector<16x512xbf16>
    tpu.vector_store %arg6[%c304_191, %c0_192], %258 {strides = array<i32>} : memref<432x512xbf16, #tpu.memory_space<vmem>>, vector<16x512xbf16>,
    %c455_i32_193 = arith.constant 455 : i32
    %260 = tpu.dynamic_rotate %161 by %c455_i32_193 dim 1 : vector<16x512xf32>, i32 -> vector<16x512xf32>
    %c320_194 = arith.constant 320 : index
    %c0_195 = arith.constant 0 : index
    %261 = vector.load %arg4[%c320_194, %c0_195] : memref<432x512xf32, #tpu.memory_space<vmem>>, vector<16x512xf32>
    %262 = arith.mulf %260, %261 : vector<16x512xf32>
    %263 = arith.truncf %262 : vector<16x512xf32> to vector<16x512xbf16>
    %c320_196 = arith.constant 320 : index
    %c0_197 = arith.constant 0 : index
    %264 = vector.load %arg6[%c320_196, %c0_197] : memref<432x512xbf16, #tpu.memory_space<vmem>>, vector<16x512xbf16>
    tpu.vector_store %arg6[%c320_196, %c0_197], %263 {strides = array<i32>} : memref<432x512xbf16, #tpu.memory_space<vmem>>, vector<16x512xbf16>,
    %c449_i32_198 = arith.constant 449 : i32
    %265 = tpu.dynamic_rotate %161 by %c449_i32_198 dim 1 : vector<16x512xf32>, i32 -> vector<16x512xf32>
    %c336_199 = arith.constant 336 : index
    %c0_200 = arith.constant 0 : index
    %266 = vector.load %arg4[%c336_199, %c0_200] : memref<432x512xf32, #tpu.memory_space<vmem>>, vector<16x512xf32>
    %267 = arith.mulf %265, %266 : vector<16x512xf32>
    %268 = arith.truncf %267 : vector<16x512xf32> to vector<16x512xbf16>
    %c336_201 = arith.constant 336 : index
    %c0_202 = arith.constant 0 : index
    %269 = vector.load %arg6[%c336_201, %c0_202] : memref<432x512xbf16, #tpu.memory_space<vmem>>, vector<16x512xbf16>
    tpu.vector_store %arg6[%c336_201, %c0_202], %268 {strides = array<i32>} : memref<432x512xbf16, #tpu.memory_space<vmem>>, vector<16x512xbf16>,
    %c448_i32_203 = arith.constant 448 : i32
    %270 = tpu.dynamic_rotate %161 by %c448_i32_203 dim 1 : vector<16x512xf32>, i32 -> vector<16x512xf32>
    %c352_204 = arith.constant 352 : index
    %c0_205 = arith.constant 0 : index
    %271 = vector.load %arg4[%c352_204, %c0_205] : memref<432x512xf32, #tpu.memory_space<vmem>>, vector<16x512xf32>
    %272 = arith.mulf %270, %271 : vector<16x512xf32>
    %273 = arith.truncf %272 : vector<16x512xf32> to vector<16x512xbf16>
    %c352_206 = arith.constant 352 : index
    %c0_207 = arith.constant 0 : index
    %274 = vector.load %arg6[%c352_206, %c0_207] : memref<432x512xbf16, #tpu.memory_space<vmem>>, vector<16x512xbf16>
    tpu.vector_store %arg6[%c352_206, %c0_207], %273 {strides = array<i32>} : memref<432x512xbf16, #tpu.memory_space<vmem>>, vector<16x512xbf16>,
    %c447_i32_208 = arith.constant 447 : i32
    %275 = tpu.dynamic_rotate %161 by %c447_i32_208 dim 1 : vector<16x512xf32>, i32 -> vector<16x512xf32>
    %c368_209 = arith.constant 368 : index
    %c0_210 = arith.constant 0 : index
    %276 = vector.load %arg4[%c368_209, %c0_210] : memref<432x512xf32, #tpu.memory_space<vmem>>, vector<16x512xf32>
    %277 = arith.mulf %275, %276 : vector<16x512xf32>
    %278 = arith.truncf %277 : vector<16x512xf32> to vector<16x512xbf16>
    %c368_211 = arith.constant 368 : index
    %c0_212 = arith.constant 0 : index
    %279 = vector.load %arg6[%c368_211, %c0_212] : memref<432x512xbf16, #tpu.memory_space<vmem>>, vector<16x512xbf16>
    tpu.vector_store %arg6[%c368_211, %c0_212], %278 {strides = array<i32>} : memref<432x512xbf16, #tpu.memory_space<vmem>>, vector<16x512xbf16>,
    %c441_i32_213 = arith.constant 441 : i32
    %280 = tpu.dynamic_rotate %161 by %c441_i32_213 dim 1 : vector<16x512xf32>, i32 -> vector<16x512xf32>
    %c384_214 = arith.constant 384 : index
    %c0_215 = arith.constant 0 : index
    %281 = vector.load %arg4[%c384_214, %c0_215] : memref<432x512xf32, #tpu.memory_space<vmem>>, vector<16x512xf32>
    %282 = arith.mulf %280, %281 : vector<16x512xf32>
    %283 = arith.truncf %282 : vector<16x512xf32> to vector<16x512xbf16>
    %c384_216 = arith.constant 384 : index
    %c0_217 = arith.constant 0 : index
    %284 = vector.load %arg6[%c384_216, %c0_217] : memref<432x512xbf16, #tpu.memory_space<vmem>>, vector<16x512xbf16>
    tpu.vector_store %arg6[%c384_216, %c0_217], %283 {strides = array<i32>} : memref<432x512xbf16, #tpu.memory_space<vmem>>, vector<16x512xbf16>,
    %c440_i32_218 = arith.constant 440 : i32
    %285 = tpu.dynamic_rotate %161 by %c440_i32_218 dim 1 : vector<16x512xf32>, i32 -> vector<16x512xf32>
    %c400_219 = arith.constant 400 : index
    %c0_220 = arith.constant 0 : index
    %286 = vector.load %arg4[%c400_219, %c0_220] : memref<432x512xf32, #tpu.memory_space<vmem>>, vector<16x512xf32>
    %287 = arith.mulf %285, %286 : vector<16x512xf32>
    %288 = arith.truncf %287 : vector<16x512xf32> to vector<16x512xbf16>
    %c400_221 = arith.constant 400 : index
    %c0_222 = arith.constant 0 : index
    %289 = vector.load %arg6[%c400_221, %c0_222] : memref<432x512xbf16, #tpu.memory_space<vmem>>, vector<16x512xbf16>
    tpu.vector_store %arg6[%c400_221, %c0_222], %288 {strides = array<i32>} : memref<432x512xbf16, #tpu.memory_space<vmem>>, vector<16x512xbf16>,
    %c439_i32_223 = arith.constant 439 : i32
    %290 = tpu.dynamic_rotate %161 by %c439_i32_223 dim 1 : vector<16x512xf32>, i32 -> vector<16x512xf32>
    %c416_224 = arith.constant 416 : index
    %c0_225 = arith.constant 0 : index
    %291 = vector.load %arg4[%c416_224, %c0_225] : memref<432x512xf32, #tpu.memory_space<vmem>>, vector<16x512xf32>
    %292 = arith.mulf %290, %291 : vector<16x512xf32>
    %293 = arith.truncf %292 : vector<16x512xf32> to vector<16x512xbf16>
    %c416_226 = arith.constant 416 : index
    %c0_227 = arith.constant 0 : index
    %294 = vector.load %arg6[%c416_226, %c0_227] : memref<432x512xbf16, #tpu.memory_space<vmem>>, vector<16x512xbf16>
    tpu.vector_store %arg6[%c416_226, %c0_227], %293 {strides = array<i32>} : memref<432x512xbf16, #tpu.memory_space<vmem>>, vector<16x512xbf16>,
    %c0_228 = arith.constant 0 : index
    %c0_229 = arith.constant 0 : index
    %295 = vector.load %arg6[%c0_228, %c0_229] : memref<432x512xbf16, #tpu.memory_space<vmem>>, vector<432x512xbf16>
    %cst_230 = arith.constant dense<0.000000e+00> : vector<16x512xf32>
    %296 = tpu.matmul %162, %295, %cst_230 {dimension_numbers = #tpu.dot_dimension_numbers<[1], [0], [0], [1], [0, 0, 1, 1], [], []>} : vector<16x432xbf16>, vector<432x512xbf16>, vector<16x512xf32> -> vector<16x512xf32>
    %cst_231 = arith.constant dense<0.000000e+00> : vector<16xf32>
    %297 = vector.multi_reduction <add>, %296, %cst_231 [1] : vector<16x512xf32> to vector<16xf32>
    %298 = vector.shape_cast %297 : vector<16xf32> to vector<16x1xf32>
    %cst_232 = arith.constant 0.001953125 : f32
    %299 = vector.broadcast %cst_232 : f32 to vector<16x1xf32>
    %300 = arith.mulf %298, %299 : vector<16x1xf32>
    %301 = arith.mulf %296, %296 : vector<16x512xf32>
    %cst_233 = arith.constant dense<0.000000e+00> : vector<16xf32>
    %302 = vector.multi_reduction <add>, %301, %cst_233 [1] : vector<16x512xf32> to vector<16xf32>
    %303 = vector.shape_cast %302 : vector<16xf32> to vector<16x1xf32>
    %cst_234 = arith.constant 0.001953125 : f32
    %304 = vector.broadcast %cst_234 : f32 to vector<16x1xf32>
    %305 = arith.mulf %303, %304 : vector<16x1xf32>
    %306 = arith.mulf %300, %300 : vector<16x1xf32>
    %307 = arith.subf %305, %306 : vector<16x1xf32>
    %cst_235 = arith.constant 0.000000e+00 : f32
    %308 = vector.broadcast %cst_235 : f32 to vector<16x1xf32>
    %309 = arith.maximumf %307, %308 : vector<16x1xf32>
    %310 = vector.broadcast %300 : vector<16x1xf32> to vector<16x512xf32>
    %311 = arith.subf %296, %310 : vector<16x512xf32>
    %cst_236 = arith.constant 9.99999974E-6 : f32
    %312 = vector.broadcast %cst_236 : f32 to vector<16x1xf32>
    %313 = arith.addf %309, %312 : vector<16x1xf32>
    %314 = math.rsqrt %313 : vector<16x1xf32>
    %315 = vector.broadcast %314 : vector<16x1xf32> to vector<16x512xf32>
    %316 = arith.mulf %311, %315 : vector<16x512xf32>
    %cst_237 = arith.constant 0.000000e+00 : f32
    %317 = vector.broadcast %cst_237 : f32 to vector<16x512xf32>
    %318 = arith.cmpf oge, %316, %317 : vector<16x512xf32>
    %cst_238 = arith.constant 0.00999999977 : f32
    %319 = vector.broadcast %cst_238 : f32 to vector<16x512xf32>
    %320 = arith.mulf %319, %316 : vector<16x512xf32>
    %321 = arith.select %318, %316, %320 : vector<16x512xi1>, vector<16x512xf32>
    %c0_239 = arith.constant 0 : index
    %c0_240 = arith.constant 0 : index
    %c0_241 = arith.constant 0 : index
    %322 = vector.load %arg5[%c0_239, %c0_240, %c0_241] : memref<1x16x512xf32, #tpu.memory_space<vmem>>, vector<1x16x512xf32>
    %323 = vector.shape_cast %322 : vector<1x16x512xf32> to vector<16x512xf32>
    %324 = vector.shape_cast %321 : vector<16x512xf32> to vector<1x16x512xf32>
    tpu.vector_store %arg5[%c0_239, %c0_240, %c0_241], %324 {strides = array<i32>} : memref<1x16x512xf32, #tpu.memory_space<vmem>>, vector<1x16x512xf32>,
    return
  }
  func.func @transform_0(%arg0: i32) -> (i32, i32, i32) {
    %c0_i32 = arith.constant 0 : i32
    %c0_i32_0 = arith.constant 0 : i32
    %c0_i32_1 = arith.constant 0 : i32
    return %arg0, %c0_i32, %c0_i32_0 : i32, i32, i32
  }
  func.func @transform_1(%arg0: i32) -> (i32, i32) {
    %c0_i32 = arith.constant 0 : i32
    %c0_i32_0 = arith.constant 0 : i32
    %c0_i32_1 = arith.constant 0 : i32
    return %c0_i32, %c0_i32_0 : i32, i32
  }
  func.func @transform_2(%arg0: i32) -> (i32, i32) {
    %c0_i32 = arith.constant 0 : i32
    %c0_i32_0 = arith.constant 0 : i32
    %c0_i32_1 = arith.constant 0 : i32
    return %c0_i32, %c0_i32_0 : i32, i32
  }
  func.func @transform_3(%arg0: i32) -> (i32, i32) {
    %c0_i32 = arith.constant 0 : i32
    %c0_i32_0 = arith.constant 0 : i32
    %c0_i32_1 = arith.constant 0 : i32
    return %c0_i32, %c0_i32_0 : i32, i32
  }
  func.func @transform_4(%arg0: i32) -> (i32, i32, i32) {
    %c0_i32 = arith.constant 0 : i32
    %c0_i32_0 = arith.constant 0 : i32
    %c0_i32_1 = arith.constant 0 : i32
    return %arg0, %c0_i32, %c0_i32_0 : i32, i32, i32
  }
}

</mosaic_0001>

<llo_original>
// kernel: tpu_custom_call.1
$region0: #{tpu_custom_call.1}
  #allocation0 [shape = 'u32[]', space=smem, size = 0x4, offset = 0x4, fixed_abs, tag = 'smem constant byte address 0x4 - core index']
  #allocation1 [shape = 'u32[144,128]{1,0:T(1,128)}', space=vmem, size = 0x12000, scoped, tag = 'internal scratch']
  #allocation2 [shape = 'bf16[432,512]{1,0:T(16,128)(2,1)}', space=vmem, size = 0x6c000, scoped, tag = 'scratch operand']
  %s0 = inlined_call_operand.hbm [shape: f32[2,16,512], index: 0, kind: input, shape index: {}]
  %s1 = inlined_call_operand.hbm [shape: bf16[16,432], index: 1, kind: input, shape index: {}]
  %s2 = inlined_call_operand.hbm [shape: bf16[16,432], index: 2, kind: input, shape index: {}]
  %s3 = inlined_call_operand.hbm [shape: f32[432,512], index: 3, kind: input, shape index: {}]
  %s4 = inlined_call_operand.hbm [shape: f32[2,16,512], index: 4, kind: output, shape index: {}]
  %s5 = sld [smem:[#allocation0]]
  $region65: #{tpu_custom_call.1} parent=0
    _
  %s7 = ssub.s32 1, %s5
  %s8 = scalar_select 0, %s7, %s5
  $region1: #{tpu_custom_call.1} parent=0
    #allocation3 [shape = 'u8[65536]{0}', space=vmem, size = 0x10000, scoped, tag = 'input window, operand 0']
    #allocation4 [shape = 's32[2]{0}', space=sflag, size = 0x8, scoped, tag = 'scoped memory for tpu_custom_call.1']
    #allocation5 [shape = 's32[2]{0}', space=sflag, size = 0x8, scoped, tag = 'scoped memory for tpu_custom_call.1']
    #allocation6 [shape = 'u8[16384]{0}', space=vmem, size = 0x4000, scoped, tag = 'input window, operand 1, single buffered']
    #allocation7 [shape = 's32[1]{0}', space=sflag, size = 0x4, scoped, tag = 'scoped memory for tpu_custom_call.1']
    #allocation8 [shape = 'u8[16384]{0}', space=vmem, size = 0x4000, scoped, tag = 'input window, operand 2, single buffered']
    #allocation9 [shape = 'u8[884736]{0}', space=vmem, size = 0xd8000, scoped, tag = 'input window, operand 3, single buffered']
    #allocation10 [shape = 's32[1]{0}', space=sflag, size = 0x4, scoped, tag = 'scoped memory for tpu_custom_call.1']
    #allocation11 [shape = 'u8[65536]{0}', space=vmem, size = 0x10000, scoped, tag = 'output window, operand 0']
    %9 = vsyncpa [#allocation4], 0
    %s10 = scalar_lea.sflag [#allocation4], 1
    %11 = vsyncpa %s10, 0
    %12 = vsyncpa [#allocation7], 0
    %13 = vsyncpa [#allocation10], 0
    %14 = vsyncpa [#allocation5], 0
    %s15 = scalar_lea.sflag [#allocation5], 1
    %16 = vsyncpa %s15, 0
    loop: start=0, step=1, limit=4
    $region2: #{tpu_custom_call.1} parent=1 // loop_pre_header
      _
    $region3: #{tpu_custom_call.1} parent=1 // loop_header
      %s18 = sphi 0, %s22
      %p19 = scmp.ge.s32.totalorder %s18, 4
      %s28 = sphi 0, %s30
      %s31 = sphi 0, %s28
      %s32 = sphi 0, %s31
      %s48 = sphi 0, %s32
      %s52 = sphi 0, %s52
      %s54 = sphi 0, %s52
      %s55 = sphi 0, %s54
      %s69 = sphi 0, %s55
      %s73 = sphi 0, %s73
      %s75 = sphi 0, %s73
      %s76 = sphi 0, %s75
      %s90 = sphi 0, %s76
      %s94 = sphi 0, %s94
      %s96 = sphi 0, %s94
      %s97 = sphi 0, %s96
      %s111 = sphi 0, %s97
      %s117 = sphi 0, %s119
      %s120 = sphi 0, %s117
      %s121 = sphi 0, %s120
      %s137 = sphi 0, %s121
    $region4: #{tpu_custom_call.1} parent=1 // loop_header_branch
      %21 = sbr.rel (%p19) target = $region8
    $region5: #{tpu_custom_call.1} parent=1 // loop_body
      %s23 = ssub.s32 %s18, 1
      %s24 = ssub.s32 %s18, 2
      %s25 = sadd.s32 %s18, 1
      %s26 = ssub.s32 %s18, %s25
      %p27 = scmp.eq.s32.totalorder %s26, 0
      %s29 = sadd.s32 %s28, 1
      %s30 = scalar_select %p27, %s28, %s29
      %p33 = pneg %p27
      %p34 = scmp.eq.s32.totalorder %s18, 1
      %p35 = por %p33, %p34
      %p36 = scmp.ne.s32.totalorder %s28, %s31
      %p37 = scmp.eq.s32.totalorder %s18, 0
      %p38 = por %p36, %p37
      %p39 = scmp.ne.s32.totalorder %s28, %s31
      %p40 = scmp.eq.s32.totalorder %s23, 1
      %p41 = por %p39, %p40
      %p42 = scmp.ne.s32.totalorder %s31, %s32
      %p43 = scmp.eq.s32.totalorder %s23, 0
      %p44 = por %p42, %p43
      %p45 = scmp.ne.s32.totalorder %s31, %s32
      %p46 = scmp.eq.s32.totalorder %s24, 1
      %p47 = por %p45, %p46
      %p49 = scmp.ne.s32.totalorder %s32, %s48
      %p50 = scmp.eq.s32.totalorder %s24, 0
      %p51 = por %p49, %p50
      %s53 = sadd.s32 %s52, 1
      %p56 = scmp.eq.s32.totalorder %s18, 1
      %p57 = scmp.ne.s32.totalorder %s52, %s54
      %p58 = scmp.eq.s32.totalorder %s18, 0
      %p59 = por %p57, %p58
      %p60 = scmp.ne.s32.totalorder %s52, %s54
      %p61 = scmp.eq.s32.totalorder %s23, 1
      %p62 = por %p60, %p61
      %p63 = scmp.ne.s32.totalorder %s54, %s55
      %p64 = scmp.eq.s32.totalorder %s23, 0
      %p65 = por %p63, %p64
      %p66 = scmp.ne.s32.totalorder %s54, %s55
      %p67 = scmp.eq.s32.totalorder %s24, 1
      %p68 = por %p66, %p67
      %p70 = scmp.ne.s32.totalorder %s55, %s69
      %p71 = scmp.eq.s32.totalorder %s24, 0
      %p72 = por %p70, %p71
      %s74 = sadd.s32 %s73, 1
      %p77 = scmp.eq.s32.totalorder %s18, 1
      %p78 = scmp.ne.s32.totalorder %s73, %s75
      %p79 = scmp.eq.s32.totalorder %s18, 0
      %p80 = por %p78, %p79
      %p81 = scmp.ne.s32.totalorder %s73, %s75
      %p82 = scmp.eq.s32.totalorder %s23, 1
      %p83 = por %p81, %p82
      %p84 = scmp.ne.s32.totalorder %s75, %s76
      %p85 = scmp.eq.s32.totalorder %s23, 0
      %p86 = por %p84, %p85
      %p87 = scmp.ne.s32.totalorder %s75, %s76
      %p88 = scmp.eq.s32.totalorder %s24, 1
      %p89 = por %p87, %p88
      %p91 = scmp.ne.s32.totalorder %s76, %s90
      %p92 = scmp.eq.s32.totalorder %s24, 0
      %p93 = por %p91, %p92
      %s95 = sadd.s32 %s94, 1
      %p98 = scmp.eq.s32.totalorder %s18, 1
      %p99 = scmp.ne.s32.totalorder %s94, %s96
      %p100 = scmp.eq.s32.totalorder %s18, 0
      %p101 = por %p99, %p100
      %p102 = scmp.ne.s32.totalorder %s94, %s96
      %p103 = scmp.eq.s32.totalorder %s23, 1
      %p104 = por %p102, %p103
      %p105 = scmp.ne.s32.totalorder %s96, %s97
      %p106 = scmp.eq.s32.totalorder %s23, 0
      %p107 = por %p105, %p106
      %p108 = scmp.ne.s32.totalorder %s96, %s97
      %p109 = scmp.eq.s32.totalorder %s24, 1
      %p110 = por %p108, %p109
      %p112 = scmp.ne.s32.totalorder %s97, %s111
      %p113 = scmp.eq.s32.totalorder %s24, 0
      %p114 = por %p112, %p113
      %s115 = ssub.s32 %s18, %s25
      %p116 = scmp.eq.s32.totalorder %s115, 0
      %s118 = sadd.s32 %s117, 1
      %s119 = scalar_select %p116, %s117, %s118
      %p122 = pneg %p116
      %p123 = scmp.eq.s32.totalorder %s18, 1
      %p124 = por %p122, %p123
      %p125 = scmp.ne.s32.totalorder %s117, %s120
      %p126 = scmp.eq.s32.totalorder %s18, 0
      %p127 = por %p125, %p126
      %p128 = scmp.ne.s32.totalorder %s117, %s120
      %p129 = scmp.eq.s32.totalorder %s23, 1
      %p130 = por %p128, %p129
      %p131 = scmp.ne.s32.totalorder %s120, %s121
      %p132 = scmp.eq.s32.totalorder %s23, 0
      %p133 = por %p131, %p132
      %p134 = scmp.ne.s32.totalorder %s120, %s121
      %p135 = scmp.eq.s32.totalorder %s24, 1
      %p136 = por %p134, %p135
      %p138 = scmp.ne.s32.totalorder %s121, %s137
      %p139 = scmp.eq.s32.totalorder %s24, 0
      %p140 = por %p138, %p139
      %p141 = scmp.le.s32.totalorder 1, %s18
      %p142 = scmp.lt.s32.totalorder %s18, 3
      %p143 = pnand %p141, %p142
      %p144 = pneg %p143
      // Predicated region
      $region9: #{tpu_custom_call.1} parent=5 // pred_check
        _
      $region10: #{tpu_custom_call.1} parent=5 // pred_check_branch
        %146 = sbr.rel (%p143) target = $region12
      $region11: #{tpu_custom_call.1} parent=5 // pred_region
        %s147 = ssub.s32 %s18, 1
        // Predicated region
        $region13: #{tpu_custom_call.1} parent=11 // pred_check
          %p148 = pneg %p65
        $region14: #{tpu_custom_call.1} parent=11 // pred_check_branch
          %150 = sbr.rel (%p148) target = $region16
        $region15: #{tpu_custom_call.1} parent=11 // pred_region
          %s152 = ssub.s32 512, 512
          %153 = vsyncadd [#allocation7], %s152
          %s154 = sshll.u32 [#allocation6], 4
          %s155 = int_to_ptr.vmem [resolvable:$true] %s154
          %160 = dma.hbm_to_vmem [thread:$0]  %s1, 512, %s155, [#allocation7], 256, 256, 16
        $region16: #{tpu_custom_call.1} parent=11 // pred_fallthru
          _
        // Predicated region
        $region17: #{tpu_custom_call.1} parent=11 // pred_check
          %p161 = pneg %p86
        $region18: #{tpu_custom_call.1} parent=11 // pred_check_branch
          %163 = sbr.rel (%p161) target = $region20
        $region19: #{tpu_custom_call.1} parent=11 // pred_region
          %s165 = ssub.s32 512, 512
          %166 = vsyncadd [#allocation7], %s165
          %s167 = sshll.u32 [#allocation8], 4
          %s168 = int_to_ptr.vmem [resolvable:$true] %s167
          %173 = dma.hbm_to_vmem [thread:$0]  %s2, 512, %s168, [#allocation7], 256, 256, 16
        $region20: #{tpu_custom_call.1} parent=11 // pred_fallthru
          _
        // Predicated region
        $region21: #{tpu_custom_call.1} parent=11 // pred_check
          %p174 = pneg %p107
        $region22: #{tpu_custom_call.1} parent=11 // pred_check_branch
          %176 = sbr.rel (%p174) target = $region24
        $region23: #{tpu_custom_call.1} parent=11 // pred_region
          %s178 = ssub.s32 27648, 27648
          %179 = vsyncadd [#allocation10], %s178
          %s180 = sshll.u32 [#allocation9], 4
          %s181 = int_to_ptr.vmem [resolvable:$true] %s180
          %186 = dma.hbm_to_vmem [thread:$0]  %s3, 27648, %s181, [#allocation10], 512, 512, 32
        $region24: #{tpu_custom_call.1} parent=11 // pred_fallthru
          _
      $region12: #{tpu_custom_call.1} parent=5 // pred_fallthru
        _
      %p187 = scmp.lt.s32.totalorder %s18, 2
      // Predicated region
      $region25: #{tpu_custom_call.1} parent=5 // pred_check
        %p188 = pneg %p187
      $region26: #{tpu_custom_call.1} parent=5 // pred_check_branch
        %190 = sbr.rel (%p188) target = $region28
      $region27: #{tpu_custom_call.1} parent=5 // pred_region
        // Predicated region
        $region29: #{tpu_custom_call.1} parent=27 // pred_check
          %p191 = pneg %p38
        $region30: #{tpu_custom_call.1} parent=27 // pred_check_branch
          %193 = sbr.rel (%p191) target = $region32
        $region31: #{tpu_custom_call.1} parent=27 // pred_region
          %s194 = sand.u32 %s28, 1
          %s195 = scalar_lea.sflag [#allocation4], %s194
          %s196 = sand.u32 %s28, 1
          %s197 = smul.addr %s196, 64
          %s198 = scalar_lea.vmem [#allocation3], %s197
          %s200 = ssub.s32 1024, 1024
          %201 = vsyncadd %s195, %s200
          %s202 = smul.addr %s18, 8
          %s203 = smul.addr %s202, 128
          %s204 = scalar_lea.hbm %s0, %s203
          %s205 = sshll.u32 %s198, 4
          %s206 = int_to_ptr.vmem [resolvable:$true] %s205
          %211 = dma.hbm_to_vmem [thread:$0]  %s204, 1024, %s206, %s195, 512, 512, 32
        $region32: #{tpu_custom_call.1} parent=27 // pred_fallthru
          _
      $region28: #{tpu_custom_call.1} parent=5 // pred_fallthru
        _
      %p212 = scmp.le.s32.totalorder 1, %s18
      %p213 = scmp.lt.s32.totalorder %s18, 3
      %p214 = pnand %p212, %p213
      %p215 = pneg %p214
      // Predicated region
      $region33: #{tpu_custom_call.1} parent=5 // pred_check
        _
      $region34: #{tpu_custom_call.1} parent=5 // pred_check_branch
        %217 = sbr.rel (%p214) target = $region36
      $region35: #{tpu_custom_call.1} parent=5 // pred_region
        %s218 = ssub.s32 %s18, 1
        %s219 = sand.u32 %s31, 1
        %s220 = scalar_lea.sflag [#allocation4], %s219
        %s221 = sand.u32 %s31, 1
        %s222 = smul.addr %s221, 64
        %s223 = scalar_lea.vmem [#allocation3], %s222
        // Predicated region
        $region37: #{tpu_custom_call.1} parent=35 // pred_check
          %p224 = pneg %p44
        $region38: #{tpu_custom_call.1} parent=35 // pred_check_branch
          %226 = sbr.rel (%p224) target = $region40
        $region39: #{tpu_custom_call.1} parent=35 // pred_region
          %227 = dma.done %s220, 1024
        $region40: #{tpu_custom_call.1} parent=35 // pred_fallthru
          _
        // Predicated region
        $region41: #{tpu_custom_call.1} parent=35 // pred_check
          %p228 = pneg %p65
        $region42: #{tpu_custom_call.1} parent=35 // pred_check_branch
          %230 = sbr.rel (%p228) target = $region44
        $region43: #{tpu_custom_call.1} parent=35 // pred_region
          %231 = dma.done [#allocation7], 512
        $region44: #{tpu_custom_call.1} parent=35 // pred_fallthru
          _
        // Predicated region
        $region45: #{tpu_custom_call.1} parent=35 // pred_check
          %p232 = pneg %p86
        $region46: #{tpu_custom_call.1} parent=35 // pred_check_branch
          %234 = sbr.rel (%p232) target = $region48
        $region47: #{tpu_custom_call.1} parent=35 // pred_region
          %235 = dma.done [#allocation7], 512
        $region48: #{tpu_custom_call.1} parent=35 // pred_fallthru
          _
        // Predicated region
        $region49: #{tpu_custom_call.1} parent=35 // pred_check
          %p236 = pneg %p107
        $region50: #{tpu_custom_call.1} parent=35 // pred_check_branch
          %238 = sbr.rel (%p236) target = $region52
        $region51: #{tpu_custom_call.1} parent=35 // pred_region
          %239 = dma.done [#allocation10], 27648
        $region52: #{tpu_custom_call.1} parent=35 // pred_fallthru
          _
        %s240 = sand.u32 %s31, 1
        %s241 = scalar_lea.sflag [#allocation4], %s240
        %s242 = sand.u32 %s31, 1
        %s243 = smul.addr %s242, 64
        %s244 = scalar_lea.vmem [#allocation3], %s243
        %p245 = pneg %p44
        %p246 = pneg %p41
        %p247 = pneg %p65
        %p248 = pneg %p62
        %p249 = pneg %p86
        %p250 = pneg %p83
        %p251 = pneg %p107
        %p252 = pneg %p104
        %p253 = pneg %p133
        %p254 = pneg %p130
        %s255 = sand.u32 %s120, 1
        %s256 = scalar_lea.sflag [#allocation5], %s255
        %s257 = sand.u32 %s120, 1
        %s258 = smul.addr %s257, 64
        %s259 = scalar_lea.vmem [#allocation11], %s258
        %v261 = vld [vmem:[%s223] sm:$0xff]
        %v262 = vld [vmem:[%s223 + $0x8] sm:$0xff]
        %v263 = vld [vmem:[%s223 + $0x10] sm:$0xff]
        %v264 = vld [vmem:[%s223 + $0x18] sm:$0xff]
        %v265 = vld [vmem:[%s223 + $0x20] sm:$0xff]
        %v266 = vld [vmem:[%s223 + $0x28] sm:$0xff]
        %v267 = vld [vmem:[%s223 + $0x30] sm:$0xff]
        %v268 = vld [vmem:[%s223 + $0x38] sm:$0xff]
        %v269 = vld [vmem:[#allocation6] sm:$0xff]
        %v270 = vld [vmem:[#allocation6 + $0x8] sm:$0xff]
        %v271 = vld [vmem:[#allocation6 + $0x10] sm:$0xff]
        %v272 = vld [vmem:[#allocation6 + $0x18] sm:$0xff]
        %273 = vrot.lane.b32.xlu0 %v261, 73
        %v274 = vpop.permute.xlu0 %273
        %275 = vrot.lane.b32.xlu0 %v265, 73
        %v276 = vpop.permute.xlu0 %275
        %277 = vrot.lane.b32.xlu0 %v262, 73
        %v278 = vpop.permute.xlu0 %277
        %279 = vrot.lane.b32.xlu0 %v266, 73
        %v280 = vpop.permute.xlu0 %279
        %281 = vrot.lane.b32.xlu0 %v263, 73
        %v282 = vpop.permute.xlu0 %281
        %283 = vrot.lane.b32.xlu0 %v267, 73
        %v284 = vpop.permute.xlu0 %283
        %285 = vrot.lane.b32.xlu0 %v264, 73
        %v286 = vpop.permute.xlu0 %285
        %287 = vrot.lane.b32.xlu0 %v268, 73
        %v288 = vpop.permute.xlu0 %287
        %v289 = vlaneseq
        %v290 = vand.u32 %v289, 127
        %vm291 = vcmp.lt.s32.totalorder %v290, 73
        %v292 = vsel %vm291, %v282, %v286
        %v293 = vsel %vm291, %v284, %v288
        %v294 = vsel %vm291, %v278, %v282
        %v295 = vsel %vm291, %v280, %v284
        %v296 = vsel %vm291, %v274, %v278
        %v297 = vsel %vm291, %v276, %v280
        %v298 = vsel %vm291, %v286, %v274
        %v299 = vsel %vm291, %v288, %v276
        %v300 = vld [vmem:[#allocation9] sm:$0xff]
        %v301 = vld [vmem:[#allocation9 + $0x8] sm:$0xff]
        %v302 = vld [vmem:[#allocation9 + $0x10] sm:$0xff]
        %v303 = vld [vmem:[#allocation9 + $0x18] sm:$0xff]
        %v304 = vld [vmem:[#allocation9 + $0x20] sm:$0xff]
        %v305 = vld [vmem:[#allocation9 + $0x28] sm:$0xff]
        %v306 = vld [vmem:[#allocation9 + $0x30] sm:$0xff]
        %v307 = vld [vmem:[#allocation9 + $0x38] sm:$0xff]
        %v308 = vmul.f32 %v298, %v300
        %v309 = vmul.f32 %v296, %v301
        %v310 = vmul.f32 %v294, %v302
        %v311 = vmul.f32 %v292, %v303
        %v312 = vmul.f32 %v299, %v304
        %v313 = vmul.f32 %v297, %v305
        %v314 = vmul.f32 %v295, %v306
        %v315 = vmul.f32 %v293, %v307
        %v316 = vpack.c.bf16 %v312, %v308
        %v317 = vpack.c.bf16 %v313, %v309
        %v318 = vpack.c.bf16 %v314, %v310
        %v319 = vpack.c.bf16 %v315, %v311
        %320 = vst [vmem:[#allocation2] sm:$0xff] %v316
        %321 = vst [vmem:[#allocation2 + $0x8] sm:$0xff] %v317
        %322 = vst [vmem:[#allocation2 + $0x10] sm:$0xff] %v318
        %323 = vst [vmem:[#allocation2 + $0x18] sm:$0xff] %v319
        %324 = vrot.lane.b32.xlu0 %v261, 72
        %v325 = vpop.permute.xlu0 %324
        %326 = vrot.lane.b32.xlu0 %v265, 72
        %v327 = vpop.permute.xlu0 %326
        %328 = vrot.lane.b32.xlu0 %v262, 72
        %v329 = vpop.permute.xlu0 %328
        %330 = vrot.lane.b32.xlu0 %v266, 72
        %v331 = vpop.permute.xlu0 %330
        %332 = vrot.lane.b32.xlu0 %v263, 72
        %v333 = vpop.permute.xlu0 %332
        %334 = vrot.lane.b32.xlu0 %v267, 72
        %v335 = vpop.permute.xlu0 %334
        %336 = vrot.lane.b32.xlu0 %v264, 72
        %v337 = vpop.permute.xlu0 %336
        %338 = vrot.lane.b32.xlu0 %v268, 72
        %v339 = vpop.permute.xlu0 %338
        %vm340 = vcmp.lt.s32.totalorder %v290, 72
        %v341 = vsel %vm340, %v333, %v337
        %v342 = vsel %vm340, %v335, %v339
        %v343 = vsel %vm340, %v329, %v333
        %v344 = vsel %vm340, %v331, %v335
        %v345 = vsel %vm340, %v325, %v329
        %v346 = vsel %vm340, %v327, %v331
        %v347 = vsel %vm340, %v337, %v325
        %v348 = vsel %vm340, %v339, %v327
        %v349 = vld [vmem:[#allocation9 + $0x40] sm:$0xff]
        %v350 = vld [vmem:[#allocation9 + $0x48] sm:$0xff]
        %v351 = vld [vmem:[#allocation9 + $0x50] sm:$0xff]
        %v352 = vld [vmem:[#allocation9 + $0x58] sm:$0xff]
        %v353 = vld [vmem:[#allocation9 + $0x60] sm:$0xff]
        %v354 = vld [vmem:[#allocation9 + $0x68] sm:$0xff]
        %v355 = vld [vmem:[#allocation9 + $0x70] sm:$0xff]
        %v356 = vld [vmem:[#allocation9 + $0x78] sm:$0xff]
        %v357 = vmul.f32 %v347, %v349
        %v358 = vmul.f32 %v345, %v350
        %v359 = vmul.f32 %v343, %v351
        %v360 = vmul.f32 %v341, %v352
        %v361 = vmul.f32 %v348, %v353
        %v362 = vmul.f32 %v346, %v354
        %v363 = vmul.f32 %v344, %v355
        %v364 = vmul.f32 %v342, %v356
        %v365 = vpack.c.bf16 %v361, %v357
        %v366 = vpack.c.bf16 %v362, %v358
        %v367 = vpack.c.bf16 %v363, %v359
        %v368 = vpack.c.bf16 %v364, %v360
        %369 = vst [vmem:[#allocation2 + $0x20] sm:$0xff] %v365
        %370 = vst [vmem:[#allocation2 + $0x28] sm:$0xff] %v366
        %371 = vst [vmem:[#allocation2 + $0x30] sm:$0xff] %v367
        %372 = vst [vmem:[#allocation2 + $0x38] sm:$0xff] %v368
        %373 = vrot.lane.b32.xlu0 %v261, 71
        %v374 = vpop.permute.xlu0 %373
        %375 = vrot.lane.b32.xlu0 %v265, 71
        %v376 = vpop.permute.xlu0 %375
        %377 = vrot.lane.b32.xlu0 %v262, 71
        %v378 = vpop.permute.xlu0 %377
        %379 = vrot.lane.b32.xlu0 %v266, 71
        %v380 = vpop.permute.xlu0 %379
        %381 = vrot.lane.b32.xlu0 %v263, 71
        %v382 = vpop.permute.xlu0 %381
        %383 = vrot.lane.b32.xlu0 %v267, 71
        %v384 = vpop.permute.xlu0 %383
        %385 = vrot.lane.b32.xlu0 %v264, 71
        %v386 = vpop.permute.xlu0 %385
        %387 = vrot.lane.b32.xlu0 %v268, 71
        %v388 = vpop.permute.xlu0 %387
        %vm389 = vcmp.lt.s32.totalorder %v290, 71
        %v390 = vsel %vm389, %v382, %v386
        %v391 = vsel %vm389, %v384, %v388
        %v392 = vsel %vm389, %v378, %v382
        %v393 = vsel %vm389, %v380, %v384
        %v394 = vsel %vm389, %v374, %v378
        %v395 = vsel %vm389, %v376, %v380
        %v396 = vsel %vm389, %v386, %v374
        %v397 = vsel %vm389, %v388, %v376
        %v398 = vld [vmem:[#allocation9 + $0x80] sm:$0xff]
        %v399 = vld [vmem:[#allocation9 + $0x88] sm:$0xff]
        %v400 = vld [vmem:[#allocation9 + $0x90] sm:$0xff]
        %v401 = vld [vmem:[#allocation9 + $0x98] sm:$0xff]
        %v402 = vld [vmem:[#allocation9 + $0xa0] sm:$0xff]
        %v403 = vld [vmem:[#allocation9 + $0xa8] sm:$0xff]
        %v404 = vld [vmem:[#allocation9 + $0xb0] sm:$0xff]
        %v405 = vld [vmem:[#allocation9 + $0xb8] sm:$0xff]
        %v406 = vmul.f32 %v396, %v398
        %v407 = vmul.f32 %v394, %v399
        %v408 = vmul.f32 %v392, %v400
        %v409 = vmul.f32 %v390, %v401
        %v410 = vmul.f32 %v397, %v402
        %v411 = vmul.f32 %v395, %v403
        %v412 = vmul.f32 %v393, %v404
        %v413 = vmul.f32 %v391, %v405
        %v414 = vpack.c.bf16 %v410, %v406
        %v415 = vpack.c.bf16 %v411, %v407
        %v416 = vpack.c.bf16 %v412, %v408
        %v417 = vpack.c.bf16 %v413, %v409
        %418 = vst [vmem:[#allocation2 + $0x40] sm:$0xff] %v414
        %419 = vst [vmem:[#allocation2 + $0x48] sm:$0xff] %v415
        %420 = vst [vmem:[#allocation2 + $0x50] sm:$0xff] %v416
        %421 = vst [vmem:[#allocation2 + $0x58] sm:$0xff] %v417
        %422 = vrot.lane.b32.xlu0 %v261, 65
        %v423 = vpop.permute.xlu0 %422
        %424 = vrot.lane.b32.xlu0 %v265, 65
        %v425 = vpop.permute.xlu0 %424
        %426 = vrot.lane.b32.xlu0 %v262, 65
        %v427 = vpop.permute.xlu0 %426
        %428 = vrot.lane.b32.xlu0 %v266, 65
        %v429 = vpop.permute.xlu0 %428
        %430 = vrot.lane.b32.xlu0 %v263, 65
        %v431 = vpop.permute.xlu0 %430
        %432 = vrot.lane.b32.xlu0 %v267, 65
        %v433 = vpop.permute.xlu0 %432
        %434 = vrot.lane.b32.xlu0 %v264, 65
        %v435 = vpop.permute.xlu0 %434
        %436 = vrot.lane.b32.xlu0 %v268, 65
        %v437 = vpop.permute.xlu0 %436
        %vm438 = vcmp.lt.s32.totalorder %v290, 65
        %v439 = vsel %vm438, %v431, %v435
        %v440 = vsel %vm438, %v433, %v437
        %v441 = vsel %vm438, %v427, %v431
        %v442 = vsel %vm438, %v429, %v433
        %v443 = vsel %vm438, %v423, %v427
        %v444 = vsel %vm438, %v425, %v429
        %v445 = vsel %vm438, %v435, %v423
        %v446 = vsel %vm438, %v437, %v425
        %v447 = vld [vmem:[#allocation9 + $0xc0] sm:$0xff]
        %v448 = vld [vmem:[#allocation9 + $0xc8] sm:$0xff]
        %v449 = vld [vmem:[#allocation9 + $0xd0] sm:$0xff]
        %v450 = vld [vmem:[#allocation9 + $0xd8] sm:$0xff]
        %v451 = vld [vmem:[#allocation9 + $0xe0] sm:$0xff]
        %v452 = vld [vmem:[#allocation9 + $0xe8] sm:$0xff]
        %v453 = vld [vmem:[#allocation9 + $0xf0] sm:$0xff]
        %v454 = vld [vmem:[#allocation9 + $0xf8] sm:$0xff]
        %v455 = vmul.f32 %v445, %v447
        %v456 = vmul.f32 %v443, %v448
        %v457 = vmul.f32 %v441, %v449
        %v458 = vmul.f32 %v439, %v450
        %v459 = vmul.f32 %v446, %v451
        %v460 = vmul.f32 %v444, %v452
        %v461 = vmul.f32 %v442, %v453
        %v462 = vmul.f32 %v440, %v454
        %v463 = vpack.c.bf16 %v459, %v455
        %v464 = vpack.c.bf16 %v460, %v456
        %v465 = vpack.c.bf16 %v461, %v457
        %v466 = vpack.c.bf16 %v462, %v458
        %467 = vst [vmem:[#allocation2 + $0x60] sm:$0xff] %v463
        %468 = vst [vmem:[#allocation2 + $0x68] sm:$0xff] %v464
        %469 = vst [vmem:[#allocation2 + $0x70] sm:$0xff] %v465
        %470 = vst [vmem:[#allocation2 + $0x78] sm:$0xff] %v466
        %471 = vrot.lane.b32.xlu0 %v261, 64
        %v472 = vpop.permute.xlu0 %471
        %473 = vrot.lane.b32.xlu0 %v265, 64
        %v474 = vpop.permute.xlu0 %473
        %475 = vrot.lane.b32.xlu0 %v262, 64
        %v476 = vpop.permute.xlu0 %475
        %477 = vrot.lane.b32.xlu0 %v266, 64
        %v478 = vpop.permute.xlu0 %477
        %479 = vrot.lane.b32.xlu0 %v263, 64
        %v480 = vpop.permute.xlu0 %479
        %481 = vrot.lane.b32.xlu0 %v267, 64
        %v482 = vpop.permute.xlu0 %481
        %483 = vrot.lane.b32.xlu0 %v264, 64
        %v484 = vpop.permute.xlu0 %483
        %485 = vrot.lane.b32.xlu0 %v268, 64
        %v486 = vpop.permute.xlu0 %485
        %vm487 = vcmp.lt.s32.totalorder %v290, 64
        %v488 = vsel %vm487, %v480, %v484
        %v489 = vsel %vm487, %v482, %v486
        %v490 = vsel %vm487, %v476, %v480
        %v491 = vsel %vm487, %v478, %v482
        %v492 = vsel %vm487, %v472, %v476
        %v493 = vsel %vm487, %v474, %v478
        %v494 = vsel %vm487, %v484, %v472
        %v495 = vsel %vm487, %v486, %v474
        %v496 = vld [vmem:[#allocation9 + $0x100] sm:$0xff]
        %v497 = vld [vmem:[#allocation9 + $0x108] sm:$0xff]
        %v498 = vld [vmem:[#allocation9 + $0x110] sm:$0xff]
        %v499 = vld [vmem:[#allocation9 + $0x118] sm:$0xff]
        %v500 = vld [vmem:[#allocation9 + $0x120] sm:$0xff]
        %v501 = vld [vmem:[#allocation9 + $0x128] sm:$0xff]
        %v502 = vld [vmem:[#allocation9 + $0x130] sm:$0xff]
        %v503 = vld [vmem:[#allocation9 + $0x138] sm:$0xff]
        %v504 = vmul.f32 %v494, %v496
        %v505 = vmul.f32 %v492, %v497
        %v506 = vmul.f32 %v490, %v498
        %v507 = vmul.f32 %v488, %v499
        %v508 = vmul.f32 %v495, %v500
        %v509 = vmul.f32 %v493, %v501
        %v510 = vmul.f32 %v491, %v502
        %v511 = vmul.f32 %v489, %v503
        %v512 = vpack.c.bf16 %v508, %v504
        %v513 = vpack.c.bf16 %v509, %v505
        %v514 = vpack.c.bf16 %v510, %v506
        %v515 = vpack.c.bf16 %v511, %v507
        %516 = vst [vmem:[#allocation2 + $0x80] sm:$0xff] %v512
        %517 = vst [vmem:[#allocation2 + $0x88] sm:$0xff] %v513
        %518 = vst [vmem:[#allocation2 + $0x90] sm:$0xff] %v514
        %519 = vst [vmem:[#allocation2 + $0x98] sm:$0xff] %v515
        %520 = vrot.lane.b32.xlu0 %v261, 63
        %v521 = vpop.permute.xlu0 %520
        %522 = vrot.lane.b32.xlu0 %v265, 63
        %v523 = vpop.permute.xlu0 %522
        %524 = vrot.lane.b32.xlu0 %v262, 63
        %v525 = vpop.permute.xlu0 %524
        %526 = vrot.lane.b32.xlu0 %v266, 63
        %v527 = vpop.permute.xlu0 %526
        %528 = vrot.lane.b32.xlu0 %v263, 63
        %v529 = vpop.permute.xlu0 %528
        %530 = vrot.lane.b32.xlu0 %v267, 63
        %v531 = vpop.permute.xlu0 %530
        %532 = vrot.lane.b32.xlu0 %v264, 63
        %v533 = vpop.permute.xlu0 %532
        %534 = vrot.lane.b32.xlu0 %v268, 63
        %v535 = vpop.permute.xlu0 %534
        %vm536 = vcmp.lt.s32.totalorder %v290, 63
        %v537 = vsel %vm536, %v529, %v533
        %v538 = vsel %vm536, %v531, %v535
        %v539 = vsel %vm536, %v525, %v529
        %v540 = vsel %vm536, %v527, %v531
        %v541 = vsel %vm536, %v521, %v525
        %v542 = vsel %vm536, %v523, %v527
        %v543 = vsel %vm536, %v533, %v521
        %v544 = vsel %vm536, %v535, %v523
        %v545 = vld [vmem:[#allocation9 + $0x140] sm:$0xff]
        %v546 = vld [vmem:[#allocation9 + $0x148] sm:$0xff]
        %v547 = vld [vmem:[#allocation9 + $0x150] sm:$0xff]
        %v548 = vld [vmem:[#allocation9 + $0x158] sm:$0xff]
        %v549 = vld [vmem:[#allocation9 + $0x160] sm:$0xff]
        %v550 = vld [vmem:[#allocation9 + $0x168] sm:$0xff]
        %v551 = vld [vmem:[#allocation9 + $0x170] sm:$0xff]
        %v552 = vld [vmem:[#allocation9 + $0x178] sm:$0xff]
        %v553 = vmul.f32 %v543, %v545
        %v554 = vmul.f32 %v541, %v546
        %v555 = vmul.f32 %v539, %v547
        %v556 = vmul.f32 %v537, %v548
        %v557 = vmul.f32 %v544, %v549
        %v558 = vmul.f32 %v542, %v550
        %v559 = vmul.f32 %v540, %v551
        %v560 = vmul.f32 %v538, %v552
        %v561 = vpack.c.bf16 %v557, %v553
        %v562 = vpack.c.bf16 %v558, %v554
        %v563 = vpack.c.bf16 %v559, %v555
        %v564 = vpack.c.bf16 %v560, %v556
        %565 = vst [vmem:[#allocation2 + $0xa0] sm:$0xff] %v561
        %566 = vst [vmem:[#allocation2 + $0xa8] sm:$0xff] %v562
        %567 = vst [vmem:[#allocation2 + $0xb0] sm:$0xff] %v563
        %568 = vst [vmem:[#allocation2 + $0xb8] sm:$0xff] %v564
        %569 = vrot.lane.b32.xlu0 %v261, 57
        %v570 = vpop.permute.xlu0 %569
        %571 = vrot.lane.b32.xlu0 %v265, 57
        %v572 = vpop.permute.xlu0 %571
        %573 = vrot.lane.b32.xlu0 %v262, 57
        %v574 = vpop.permute.xlu0 %573
        %575 = vrot.lane.b32.xlu0 %v266, 57
        %v576 = vpop.permute.xlu0 %575
        %577 = vrot.lane.b32.xlu0 %v263, 57
        %v578 = vpop.permute.xlu0 %577
        %579 = vrot.lane.b32.xlu0 %v267, 57
        %v580 = vpop.permute.xlu0 %579
        %581 = vrot.lane.b32.xlu0 %v264, 57
        %v582 = vpop.permute.xlu0 %581
        %583 = vrot.lane.b32.xlu0 %v268, 57
        %v584 = vpop.permute.xlu0 %583
        %vm585 = vcmp.lt.s32.totalorder %v290, 57
        %v586 = vsel %vm585, %v578, %v582
        %v587 = vsel %vm585, %v580, %v584
        %v588 = vsel %vm585, %v574, %v578
        %v589 = vsel %vm585, %v576, %v580
        %v590 = vsel %vm585, %v570, %v574
        %v591 = vsel %vm585, %v572, %v576
        %v592 = vsel %vm585, %v582, %v570
        %v593 = vsel %vm585, %v584, %v572
        %v594 = vld [vmem:[#allocation9 + $0x180] sm:$0xff]
        %v595 = vld [vmem:[#allocation9 + $0x188] sm:$0xff]
        %v596 = vld [vmem:[#allocation9 + $0x190] sm:$0xff]
        %v597 = vld [vmem:[#allocation9 + $0x198] sm:$0xff]
        %v598 = vld [vmem:[#allocation9 + $0x1a0] sm:$0xff]
        %v599 = vld [vmem:[#allocation9 + $0x1a8] sm:$0xff]
        %v600 = vld [vmem:[#allocation9 + $0x1b0] sm:$0xff]
        %v601 = vld [vmem:[#allocation9 + $0x1b8] sm:$0xff]
        %v602 = vmul.f32 %v592, %v594
        %v603 = vmul.f32 %v590, %v595
        %v604 = vmul.f32 %v588, %v596
        %v605 = vmul.f32 %v586, %v597
        %v606 = vmul.f32 %v593, %v598
        %v607 = vmul.f32 %v591, %v599
        %v608 = vmul.f32 %v589, %v600
        %v609 = vmul.f32 %v587, %v601
        %v610 = vpack.c.bf16 %v606, %v602
        %v611 = vpack.c.bf16 %v607, %v603
        %v612 = vpack.c.bf16 %v608, %v604
        %v613 = vpack.c.bf16 %v609, %v605
        %614 = vst [vmem:[#allocation2 + $0xc0] sm:$0xff] %v610
        %615 = vst [vmem:[#allocation2 + $0xc8] sm:$0xff] %v611
        %616 = vst [vmem:[#allocation2 + $0xd0] sm:$0xff] %v612
        %617 = vst [vmem:[#allocation2 + $0xd8] sm:$0xff] %v613
        %618 = vrot.lane.b32.xlu0 %v261, 56
        %v619 = vpop.permute.xlu0 %618
        %620 = vrot.lane.b32.xlu0 %v265, 56
        %v621 = vpop.permute.xlu0 %620
        %622 = vrot.lane.b32.xlu0 %v262, 56
        %v623 = vpop.permute.xlu0 %622
        %624 = vrot.lane.b32.xlu0 %v266, 56
        %v625 = vpop.permute.xlu0 %624
        %626 = vrot.lane.b32.xlu0 %v263, 56
        %v627 = vpop.permute.xlu0 %626
        %628 = vrot.lane.b32.xlu0 %v267, 56
        %v629 = vpop.permute.xlu0 %628
        %630 = vrot.lane.b32.xlu0 %v264, 56
        %v631 = vpop.permute.xlu0 %630
        %632 = vrot.lane.b32.xlu0 %v268, 56
        %v633 = vpop.permute.xlu0 %632
        %vm634 = vcmp.lt.s32.totalorder %v290, 56
        %v635 = vsel %vm634, %v627, %v631
        %v636 = vsel %vm634, %v629, %v633
        %v637 = vsel %vm634, %v623, %v627
        %v638 = vsel %vm634, %v625, %v629
        %v639 = vsel %vm634, %v619, %v623
        %v640 = vsel %vm634, %v621, %v625
        %v641 = vsel %vm634, %v631, %v619
        %v642 = vsel %vm634, %v633, %v621
        %v643 = vld [vmem:[#allocation9 + $0x1c0] sm:$0xff]
        %v644 = vld [vmem:[#allocation9 + $0x1c8] sm:$0xff]
        %v645 = vld [vmem:[#allocation9 + $0x1d0] sm:$0xff]
        %v646 = vld [vmem:[#allocation9 + $0x1d8] sm:$0xff]
        %v647 = vld [vmem:[#allocation9 + $0x1e0] sm:$0xff]
        %v648 = vld [vmem:[#allocation9 + $0x1e8] sm:$0xff]
        %v649 = vld [vmem:[#allocation9 + $0x1f0] sm:$0xff]
        %v650 = vld [vmem:[#allocation9 + $0x1f8] sm:$0xff]
        %v651 = vmul.f32 %v641, %v643
        %v652 = vmul.f32 %v639, %v644
        %v653 = vmul.f32 %v637, %v645
        %v654 = vmul.f32 %v635, %v646
        %v655 = vmul.f32 %v642, %v647
        %v656 = vmul.f32 %v640, %v648
        %v657 = vmul.f32 %v638, %v649
        %v658 = vmul.f32 %v636, %v650
        %v659 = vpack.c.bf16 %v655, %v651
        %v660 = vpack.c.bf16 %v656, %v652
        %v661 = vpack.c.bf16 %v657, %v653
        %v662 = vpack.c.bf16 %v658, %v654
        %663 = vst [vmem:[#allocation2 + $0xe0] sm:$0xff] %v659
        %664 = vst [vmem:[#allocation2 + $0xe8] sm:$0xff] %v660
        %665 = vst [vmem:[#allocation2 + $0xf0] sm:$0xff] %v661
        %666 = vst [vmem:[#allocation2 + $0xf8] sm:$0xff] %v662
        %667 = vrot.lane.b32.xlu0 %v261, 55
        %v668 = vpop.permute.xlu0 %667
        %669 = vrot.lane.b32.xlu0 %v265, 55
        %v670 = vpop.permute.xlu0 %669
        %671 = vrot.lane.b32.xlu0 %v262, 55
        %v672 = vpop.permute.xlu0 %671
        %673 = vrot.lane.b32.xlu0 %v266, 55
        %v674 = vpop.permute.xlu0 %673
        %675 = vrot.lane.b32.xlu0 %v263, 55
        %v676 = vpop.permute.xlu0 %675
        %677 = vrot.lane.b32.xlu0 %v267, 55
        %v678 = vpop.permute.xlu0 %677
        %679 = vrot.lane.b32.xlu0 %v264, 55
        %v680 = vpop.permute.xlu0 %679
        %681 = vrot.lane.b32.xlu0 %v268, 55
        %v682 = vpop.permute.xlu0 %681
        %vm683 = vcmp.lt.s32.totalorder %v290, 55
        %v684 = vsel %vm683, %v676, %v680
        %v685 = vsel %vm683, %v678, %v682
        %v686 = vsel %vm683, %v672, %v676
        %v687 = vsel %vm683, %v674, %v678
        %v688 = vsel %vm683, %v668, %v672
        %v689 = vsel %vm683, %v670, %v674
        %v690 = vsel %vm683, %v680, %v668
        %v691 = vsel %vm683, %v682, %v670
        %v692 = vld [vmem:[#allocation9 + $0x200] sm:$0xff]
        %v693 = vld [vmem:[#allocation9 + $0x208] sm:$0xff]
        %v694 = vld [vmem:[#allocation9 + $0x210] sm:$0xff]
        %v695 = vld [vmem:[#allocation9 + $0x218] sm:$0xff]
        %v696 = vld [vmem:[#allocation9 + $0x220] sm:$0xff]
        %v697 = vld [vmem:[#allocation9 + $0x228] sm:$0xff]
        %v698 = vld [vmem:[#allocation9 + $0x230] sm:$0xff]
        %v699 = vld [vmem:[#allocation9 + $0x238] sm:$0xff]
        %v700 = vmul.f32 %v690, %v692
        %v701 = vmul.f32 %v688, %v693
        %v702 = vmul.f32 %v686, %v694
        %v703 = vmul.f32 %v684, %v695
        %v704 = vmul.f32 %v691, %v696
        %v705 = vmul.f32 %v689, %v697
        %v706 = vmul.f32 %v687, %v698
        %v707 = vmul.f32 %v685, %v699
        %v708 = vpack.c.bf16 %v704, %v700
        %v709 = vpack.c.bf16 %v705, %v701
        %v710 = vpack.c.bf16 %v706, %v702
        %v711 = vpack.c.bf16 %v707, %v703
        %712 = vst [vmem:[#allocation2 + $0x100] sm:$0xff] %v708
        %713 = vst [vmem:[#allocation2 + $0x108] sm:$0xff] %v709
        %714 = vst [vmem:[#allocation2 + $0x110] sm:$0xff] %v710
        %715 = vst [vmem:[#allocation2 + $0x118] sm:$0xff] %v711
        %716 = vrot.lane.b32.xlu0 %v261, 9
        %v717 = vpop.permute.xlu0 %716
        %718 = vrot.lane.b32.xlu0 %v265, 9
        %v719 = vpop.permute.xlu0 %718
        %720 = vrot.lane.b32.xlu0 %v262, 9
        %v721 = vpop.permute.xlu0 %720
        %722 = vrot.lane.b32.xlu0 %v266, 9
        %v723 = vpop.permute.xlu0 %722
        %724 = vrot.lane.b32.xlu0 %v263, 9
        %v725 = vpop.permute.xlu0 %724
        %726 = vrot.lane.b32.xlu0 %v267, 9
        %v727 = vpop.permute.xlu0 %726
        %728 = vrot.lane.b32.xlu0 %v264, 9
        %v729 = vpop.permute.xlu0 %728
        %730 = vrot.lane.b32.xlu0 %v268, 9
        %v731 = vpop.permute.xlu0 %730
        %vm732 = vcmp.lt.s32.totalorder %v290, 9
        %v733 = vsel %vm732, %v725, %v729
        %v734 = vsel %vm732, %v727, %v731
        %v735 = vsel %vm732, %v721, %v725
        %v736 = vsel %vm732, %v723, %v727
        %v737 = vsel %vm732, %v717, %v721
        %v738 = vsel %vm732, %v719, %v723
        %v739 = vsel %vm732, %v729, %v717
        %v740 = vsel %vm732, %v731, %v719
        %v741 = vld [vmem:[#allocation9 + $0x240] sm:$0xff]
        %v742 = vld [vmem:[#allocation9 + $0x248] sm:$0xff]
        %v743 = vld [vmem:[#allocation9 + $0x250] sm:$0xff]
        %v744 = vld [vmem:[#allocation9 + $0x258] sm:$0xff]
        %v745 = vld [vmem:[#allocation9 + $0x260] sm:$0xff]
        %v746 = vld [vmem:[#allocation9 + $0x268] sm:$0xff]
        %v747 = vld [vmem:[#allocation9 + $0x270] sm:$0xff]
        %v748 = vld [vmem:[#allocation9 + $0x278] sm:$0xff]
        %v749 = vmul.f32 %v739, %v741
        %v750 = vmul.f32 %v737, %v742
        %v751 = vmul.f32 %v735, %v743
        %v752 = vmul.f32 %v733, %v744
        %v753 = vmul.f32 %v740, %v745
        %v754 = vmul.f32 %v738, %v746
        %v755 = vmul.f32 %v736, %v747
        %v756 = vmul.f32 %v734, %v748
        %v757 = vpack.c.bf16 %v753, %v749
        %v758 = vpack.c.bf16 %v754, %v750
        %v759 = vpack.c.bf16 %v755, %v751
        %v760 = vpack.c.bf16 %v756, %v752
        %761 = vst [vmem:[#allocation2 + $0x120] sm:$0xff] %v757
        %762 = vst [vmem:[#allocation2 + $0x128] sm:$0xff] %v758
        %763 = vst [vmem:[#allocation2 + $0x130] sm:$0xff] %v759
        %764 = vst [vmem:[#allocation2 + $0x138] sm:$0xff] %v760
        %765 = vrot.lane.b32.xlu0 %v261, 8
        %v766 = vpop.permute.xlu0 %765
        %767 = vrot.lane.b32.xlu0 %v265, 8
        %v768 = vpop.permute.xlu0 %767
        %769 = vrot.lane.b32.xlu0 %v262, 8
        %v770 = vpop.permute.xlu0 %769
        %771 = vrot.lane.b32.xlu0 %v266, 8
        %v772 = vpop.permute.xlu0 %771
        %773 = vrot.lane.b32.xlu0 %v263, 8
        %v774 = vpop.permute.xlu0 %773
        %775 = vrot.lane.b32.xlu0 %v267, 8
        %v776 = vpop.permute.xlu0 %775
        %777 = vrot.lane.b32.xlu0 %v264, 8
        %v778 = vpop.permute.xlu0 %777
        %779 = vrot.lane.b32.xlu0 %v268, 8
        %v780 = vpop.permute.xlu0 %779
        %vm781 = vcmp.lt.s32.totalorder %v290, 8
        %v782 = vsel %vm781, %v774, %v778
        %v783 = vsel %vm781, %v776, %v780
        %v784 = vsel %vm781, %v770, %v774
        %v785 = vsel %vm781, %v772, %v776
        %v786 = vsel %vm781, %v766, %v770
        %v787 = vsel %vm781, %v768, %v772
        %v788 = vsel %vm781, %v778, %v766
        %v789 = vsel %vm781, %v780, %v768
        %v790 = vld [vmem:[#allocation9 + $0x280] sm:$0xff]
        %v791 = vld [vmem:[#allocation9 + $0x288] sm:$0xff]
        %v792 = vld [vmem:[#allocation9 + $0x290] sm:$0xff]
        %v793 = vld [vmem:[#allocation9 + $0x298] sm:$0xff]
        %v794 = vld [vmem:[#allocation9 + $0x2a0] sm:$0xff]
        %v795 = vld [vmem:[#allocation9 + $0x2a8] sm:$0xff]
        %v796 = vld [vmem:[#allocation9 + $0x2b0] sm:$0xff]
        %v797 = vld [vmem:[#allocation9 + $0x2b8] sm:$0xff]
        %v798 = vmul.f32 %v788, %v790
        %v799 = vmul.f32 %v786, %v791
        %v800 = vmul.f32 %v784, %v792
        %v801 = vmul.f32 %v782, %v793
        %v802 = vmul.f32 %v789, %v794
        %v803 = vmul.f32 %v787, %v795
        %v804 = vmul.f32 %v785, %v796
        %v805 = vmul.f32 %v783, %v797
        %v806 = vpack.c.bf16 %v802, %v798
        %v807 = vpack.c.bf16 %v803, %v799
        %v808 = vpack.c.bf16 %v804, %v800
        %v809 = vpack.c.bf16 %v805, %v801
        %810 = vst [vmem:[#allocation2 + $0x140] sm:$0xff] %v806
        %811 = vst [vmem:[#allocation2 + $0x148] sm:$0xff] %v807
        %812 = vst [vmem:[#allocation2 + $0x150] sm:$0xff] %v808
        %813 = vst [vmem:[#allocation2 + $0x158] sm:$0xff] %v809
        %814 = vrot.lane.b32.xlu0 %v261, 7
        %v815 = vpop.permute.xlu0 %814
        %816 = vrot.lane.b32.xlu0 %v265, 7
        %v817 = vpop.permute.xlu0 %816
        %818 = vrot.lane.b32.xlu0 %v262, 7
        %v819 = vpop.permute.xlu0 %818
        %820 = vrot.lane.b32.xlu0 %v266, 7
        %v821 = vpop.permute.xlu0 %820
        %822 = vrot.lane.b32.xlu0 %v263, 7
        %v823 = vpop.permute.xlu0 %822
        %824 = vrot.lane.b32.xlu0 %v267, 7
        %v825 = vpop.permute.xlu0 %824
        %826 = vrot.lane.b32.xlu0 %v264, 7
        %v827 = vpop.permute.xlu0 %826
        %828 = vrot.lane.b32.xlu0 %v268, 7
        %v829 = vpop.permute.xlu0 %828
        %vm830 = vcmp.lt.s32.totalorder %v290, 7
        %v831 = vsel %vm830, %v823, %v827
        %v832 = vsel %vm830, %v825, %v829
        %v833 = vsel %vm830, %v819, %v823
        %v834 = vsel %vm830, %v821, %v825
        %v835 = vsel %vm830, %v815, %v819
        %v836 = vsel %vm830, %v817, %v821
        %v837 = vsel %vm830, %v827, %v815
        %v838 = vsel %vm830, %v829, %v817
        %v839 = vld [vmem:[#allocation9 + $0x2c0] sm:$0xff]
        %v840 = vld [vmem:[#allocation9 + $0x2c8] sm:$0xff]
        %v841 = vld [vmem:[#allocation9 + $0x2d0] sm:$0xff]
        %v842 = vld [vmem:[#allocation9 + $0x2d8] sm:$0xff]
        %v843 = vld [vmem:[#allocation9 + $0x2e0] sm:$0xff]
        %v844 = vld [vmem:[#allocation9 + $0x2e8] sm:$0xff]
        %v845 = vld [vmem:[#allocation9 + $0x2f0] sm:$0xff]
        %v846 = vld [vmem:[#allocation9 + $0x2f8] sm:$0xff]
        %v847 = vmul.f32 %v837, %v839
        %v848 = vmul.f32 %v835, %v840
        %v849 = vmul.f32 %v833, %v841
        %v850 = vmul.f32 %v831, %v842
        %v851 = vmul.f32 %v838, %v843
        %v852 = vmul.f32 %v836, %v844
        %v853 = vmul.f32 %v834, %v845
        %v854 = vmul.f32 %v832, %v846
        %v855 = vpack.c.bf16 %v851, %v847
        %v856 = vpack.c.bf16 %v852, %v848
        %v857 = vpack.c.bf16 %v853, %v849
        %v858 = vpack.c.bf16 %v854, %v850
        %859 = vst [vmem:[#allocation2 + $0x160] sm:$0xff] %v855
        %860 = vst [vmem:[#allocation2 + $0x168] sm:$0xff] %v856
        %861 = vst [vmem:[#allocation2 + $0x170] sm:$0xff] %v857
        %862 = vst [vmem:[#allocation2 + $0x178] sm:$0xff] %v858
        %863 = vrot.lane.b32.xlu0 %v261, 1
        %v864 = vpop.permute.xlu0 %863
        %865 = vrot.lane.b32.xlu0 %v265, 1
        %v866 = vpop.permute.xlu0 %865
        %867 = vrot.lane.b32.xlu0 %v262, 1
        %v868 = vpop.permute.xlu0 %867
        %869 = vrot.lane.b32.xlu0 %v266, 1
        %v870 = vpop.permute.xlu0 %869
        %871 = vrot.lane.b32.xlu0 %v263, 1
        %v872 = vpop.permute.xlu0 %871
        %873 = vrot.lane.b32.xlu0 %v267, 1
        %v874 = vpop.permute.xlu0 %873
        %875 = vrot.lane.b32.xlu0 %v264, 1
        %v876 = vpop.permute.xlu0 %875
        %877 = vrot.lane.b32.xlu0 %v268, 1
        %v878 = vpop.permute.xlu0 %877
        %vm879 = vcmp.lt.s32.totalorder %v290, 1
        %v880 = vsel %vm879, %v872, %v876
        %v881 = vsel %vm879, %v874, %v878
        %v882 = vsel %vm879, %v868, %v872
        %v883 = vsel %vm879, %v870, %v874
        %v884 = vsel %vm879, %v864, %v868
        %v885 = vsel %vm879, %v866, %v870
        %v886 = vsel %vm879, %v876, %v864
        %v887 = vsel %vm879, %v878, %v866
        %v888 = vld [vmem:[#allocation9 + $0x300] sm:$0xff]
        %v889 = vld [vmem:[#allocation9 + $0x308] sm:$0xff]
        %v890 = vld [vmem:[#allocation9 + $0x310] sm:$0xff]
        %v891 = vld [vmem:[#allocation9 + $0x318] sm:$0xff]
        %v892 = vld [vmem:[#allocation9 + $0x320] sm:$0xff]
        %v893 = vld [vmem:[#allocation9 + $0x328] sm:$0xff]
        %v894 = vld [vmem:[#allocation9 + $0x330] sm:$0xff]
        %v895 = vld [vmem:[#allocation9 + $0x338] sm:$0xff]
        %v896 = vmul.f32 %v886, %v888
        %v897 = vmul.f32 %v884, %v889
        %v898 = vmul.f32 %v882, %v890
        %v899 = vmul.f32 %v880, %v891
        %v900 = vmul.f32 %v887, %v892
        %v901 = vmul.f32 %v885, %v893
        %v902 = vmul.f32 %v883, %v894
        %v903 = vmul.f32 %v881, %v895
        %v904 = vpack.c.bf16 %v900, %v896
        %v905 = vpack.c.bf16 %v901, %v897
        %v906 = vpack.c.bf16 %v902, %v898
        %v907 = vpack.c.bf16 %v903, %v899
        %908 = vst [vmem:[#allocation2 + $0x180] sm:$0xff] %v904
        %909 = vst [vmem:[#allocation2 + $0x188] sm:$0xff] %v905
        %910 = vst [vmem:[#allocation2 + $0x190] sm:$0xff] %v906
        %911 = vst [vmem:[#allocation2 + $0x198] sm:$0xff] %v907
        %v912 = vpack.c.bf16 %v265, %v261
        %v913 = vpack.c.bf16 %v266, %v262
        %v914 = vpack.c.bf16 %v267, %v263
        %v915 = vpack.c.bf16 %v268, %v264
        %916 = vst [vmem:[#allocation2 + $0x1a0] sm:$0xff] %v912
        %917 = vst [vmem:[#allocation2 + $0x1a8] sm:$0xff] %v913
        %918 = vst [vmem:[#allocation2 + $0x1b0] sm:$0xff] %v914
        %919 = vst [vmem:[#allocation2 + $0x1b8] sm:$0xff] %v915
        %920 = vrot.lane.b32.xlu0 %v261, 127
        %v921 = vpop.permute.xlu0 %920
        %922 = vrot.lane.b32.xlu0 %v265, 127
        %v923 = vpop.permute.xlu0 %922
        %924 = vrot.lane.b32.xlu0 %v262, 127
        %v925 = vpop.permute.xlu0 %924
        %926 = vrot.lane.b32.xlu0 %v266, 127
        %v927 = vpop.permute.xlu0 %926
        %928 = vrot.lane.b32.xlu0 %v263, 127
        %v929 = vpop.permute.xlu0 %928
        %930 = vrot.lane.b32.xlu0 %v267, 127
        %v931 = vpop.permute.xlu0 %930
        %932 = vrot.lane.b32.xlu0 %v264, 127
        %v933 = vpop.permute.xlu0 %932
        %934 = vrot.lane.b32.xlu0 %v268, 127
        %v935 = vpop.permute.xlu0 %934
        %vm936 = vcmp.lt.s32.totalorder %v290, 127
        %v937 = vsel %vm936, %v929, %v933
        %v938 = vsel %vm936, %v931, %v935
        %v939 = vsel %vm936, %v925, %v929
        %v940 = vsel %vm936, %v927, %v931
        %v941 = vsel %vm936, %v921, %v925
        %v942 = vsel %vm936, %v923, %v927
        %v943 = vsel %vm936, %v933, %v921
        %v944 = vsel %vm936, %v935, %v923
        %v945 = vld [vmem:[#allocation9 + $0x380] sm:$0xff]
        %v946 = vld [vmem:[#allocation9 + $0x388] sm:$0xff]
        %v947 = vld [vmem:[#allocation9 + $0x390] sm:$0xff]
        %v948 = vld [vmem:[#allocation9 + $0x398] sm:$0xff]
        %v949 = vld [vmem:[#allocation9 + $0x3a0] sm:$0xff]
        %v950 = vld [vmem:[#allocation9 + $0x3a8] sm:$0xff]
        %v951 = vld [vmem:[#allocation9 + $0x3b0] sm:$0xff]
        %v952 = vld [vmem:[#allocation9 + $0x3b8] sm:$0xff]
        %v953 = vmul.f32 %v941, %v945
        %v954 = vmul.f32 %v939, %v946
        %v955 = vmul.f32 %v937, %v947
        %v956 = vmul.f32 %v943, %v948
        %v957 = vmul.f32 %v942, %v949
        %v958 = vmul.f32 %v940, %v950
        %v959 = vmul.f32 %v938, %v951
        %v960 = vmul.f32 %v944, %v952
        %v961 = vpack.c.bf16 %v957, %v953
        %v962 = vpack.c.bf16 %v958, %v954
        %v963 = vpack.c.bf16 %v959, %v955
        %v964 = vpack.c.bf16 %v960, %v956
        %965 = vst [vmem:[#allocation2 + $0x1c0] sm:$0xff] %v961
        %966 = vst [vmem:[#allocation2 + $0x1c8] sm:$0xff] %v962
        %967 = vst [vmem:[#allocation2 + $0x1d0] sm:$0xff] %v963
        %968 = vst [vmem:[#allocation2 + $0x1d8] sm:$0xff] %v964
        %969 = vrot.lane.b32.xlu0 %v261, 121
        %v970 = vpop.permute.xlu0 %969
        %971 = vrot.lane.b32.xlu0 %v265, 121
        %v972 = vpop.permute.xlu0 %971
        %973 = vrot.lane.b32.xlu0 %v262, 121
        %v974 = vpop.permute.xlu0 %973
        %975 = vrot.lane.b32.xlu0 %v266, 121
        %v976 = vpop.permute.xlu0 %975
        %977 = vrot.lane.b32.xlu0 %v263, 121
        %v978 = vpop.permute.xlu0 %977
        %979 = vrot.lane.b32.xlu0 %v267, 121
        %v980 = vpop.permute.xlu0 %979
        %981 = vrot.lane.b32.xlu0 %v264, 121
        %v982 = vpop.permute.xlu0 %981
        %983 = vrot.lane.b32.xlu0 %v268, 121
        %v984 = vpop.permute.xlu0 %983
        %vm985 = vcmp.lt.s32.totalorder %v290, 121
        %v986 = vsel %vm985, %v978, %v982
        %v987 = vsel %vm985, %v980, %v984
        %v988 = vsel %vm985, %v974, %v978
        %v989 = vsel %vm985, %v976, %v980
        %v990 = vsel %vm985, %v970, %v974
        %v991 = vsel %vm985, %v972, %v976
        %v992 = vsel %vm985, %v982, %v970
        %v993 = vsel %vm985, %v984, %v972
        %v994 = vld [vmem:[#allocation9 + $0x3c0] sm:$0xff]
        %v995 = vld [vmem:[#allocation9 + $0x3c8] sm:$0xff]
        %v996 = vld [vmem:[#allocation9 + $0x3d0] sm:$0xff]
        %v997 = vld [vmem:[#allocation9 + $0x3d8] sm:$0xff]
        %v998 = vld [vmem:[#allocation9 + $0x3e0] sm:$0xff]
        %v999 = vld [vmem:[#allocation9 + $0x3e8] sm:$0xff]
        %v1000 = vld [vmem:[#allocation9 + $0x3f0] sm:$0xff]
        %v1001 = vld [vmem:[#allocation9 + $0x3f8] sm:$0xff]
        %v1002 = vmul.f32 %v990, %v994
        %v1003 = vmul.f32 %v988, %v995
        %v1004 = vmul.f32 %v986, %v996
        %v1005 = vmul.f32 %v992, %v997
        %v1006 = vmul.f32 %v991, %v998
        %v1007 = vmul.f32 %v989, %v999
        %v1008 = vmul.f32 %v987, %v1000
        %v1009 = vmul.f32 %v993, %v1001
        %v1010 = vpack.c.bf16 %v1006, %v1002
        %v1011 = vpack.c.bf16 %v1007, %v1003
        %v1012 = vpack.c.bf16 %v1008, %v1004
        %v1013 = vpack.c.bf16 %v1009, %v1005
        %1014 = vst [vmem:[#allocation2 + $0x1e0] sm:$0xff] %v1010
        %1015 = vst [vmem:[#allocation2 + $0x1e8] sm:$0xff] %v1011
        %1016 = vst [vmem:[#allocation2 + $0x1f0] sm:$0xff] %v1012
        %1017 = vst [vmem:[#allocation2 + $0x1f8] sm:$0xff] %v1013
        %1018 = vrot.lane.b32.xlu0 %v261, 120
        %v1019 = vpop.permute.xlu0 %1018
        %1020 = vrot.lane.b32.xlu0 %v265, 120
        %v1021 = vpop.permute.xlu0 %1020
        %1022 = vrot.lane.b32.xlu0 %v262, 120
        %v1023 = vpop.permute.xlu0 %1022
        %1024 = vrot.lane.b32.xlu0 %v266, 120
        %v1025 = vpop.permute.xlu0 %1024
        %1026 = vrot.lane.b32.xlu0 %v263, 120
        %v1027 = vpop.permute.xlu0 %1026
        %1028 = vrot.lane.b32.xlu0 %v267, 120
        %v1029 = vpop.permute.xlu0 %1028
        %1030 = vrot.lane.b32.xlu0 %v264, 120
        %v1031 = vpop.permute.xlu0 %1030
        %1032 = vrot.lane.b32.xlu0 %v268, 120
        %v1033 = vpop.permute.xlu0 %1032
        %vm1034 = vcmp.lt.s32.totalorder %v290, 120
        %v1035 = vsel %vm1034, %v1027, %v1031
        %v1036 = vsel %vm1034, %v1029, %v1033
        %v1037 = vsel %vm1034, %v1023, %v1027
        %v1038 = vsel %vm1034, %v1025, %v1029
        %v1039 = vsel %vm1034, %v1019, %v1023
        %v1040 = vsel %vm1034, %v1021, %v1025
        %v1041 = vsel %vm1034, %v1031, %v1019
        %v1042 = vsel %vm1034, %v1033, %v1021
        %v1043 = vld [vmem:[#allocation9 + $0x400] sm:$0xff]
        %v1044 = vld [vmem:[#allocation9 + $0x408] sm:$0xff]
        %v1045 = vld [vmem:[#allocation9 + $0x410] sm:$0xff]
        %v1046 = vld [vmem:[#allocation9 + $0x418] sm:$0xff]
        %v1047 = vld [vmem:[#allocation9 + $0x420] sm:$0xff]
        %v1048 = vld [vmem:[#allocation9 + $0x428] sm:$0xff]
        %v1049 = vld [vmem:[#allocation9 + $0x430] sm:$0xff]
        %v1050 = vld [vmem:[#allocation9 + $0x438] sm:$0xff]
        %v1051 = vmul.f32 %v1039, %v1043
        %v1052 = vmul.f32 %v1037, %v1044
        %v1053 = vmul.f32 %v1035, %v1045
        %v1054 = vmul.f32 %v1041, %v1046
        %v1055 = vmul.f32 %v1040, %v1047
        %v1056 = vmul.f32 %v1038, %v1048
        %v1057 = vmul.f32 %v1036, %v1049
        %v1058 = vmul.f32 %v1042, %v1050
        %v1059 = vpack.c.bf16 %v1055, %v1051
        %v1060 = vpack.c.bf16 %v1056, %v1052
        %v1061 = vpack.c.bf16 %v1057, %v1053
        %v1062 = vpack.c.bf16 %v1058, %v1054
        %1063 = vst [vmem:[#allocation2 + $0x200] sm:$0xff] %v1059
        %1064 = vst [vmem:[#allocation2 + $0x208] sm:$0xff] %v1060
        %1065 = vst [vmem:[#allocation2 + $0x210] sm:$0xff] %v1061
        %1066 = vst [vmem:[#allocation2 + $0x218] sm:$0xff] %v1062
        %1067 = vrot.lane.b32.xlu0 %v261, 119
        %v1068 = vpop.permute.xlu0 %1067
        %1069 = vrot.lane.b32.xlu0 %v265, 119
        %v1070 = vpop.permute.xlu0 %1069
        %1071 = vrot.lane.b32.xlu0 %v262, 119
        %v1072 = vpop.permute.xlu0 %1071
        %1073 = vrot.lane.b32.xlu0 %v266, 119
        %v1074 = vpop.permute.xlu0 %1073
        %1075 = vrot.lane.b32.xlu0 %v263, 119
        %v1076 = vpop.permute.xlu0 %1075
        %1077 = vrot.lane.b32.xlu0 %v267, 119
        %v1078 = vpop.permute.xlu0 %1077
        %1079 = vrot.lane.b32.xlu0 %v264, 119
        %v1080 = vpop.permute.xlu0 %1079
        %1081 = vrot.lane.b32.xlu0 %v268, 119
        %v1082 = vpop.permute.xlu0 %1081
        %vm1083 = vcmp.lt.s32.totalorder %v290, 119
        %v1084 = vsel %vm1083, %v1076, %v1080
        %v1085 = vsel %vm1083, %v1078, %v1082
        %v1086 = vsel %vm1083, %v1072, %v1076
        %v1087 = vsel %vm1083, %v1074, %v1078
        %v1088 = vsel %vm1083, %v1068, %v1072
        %v1089 = vsel %vm1083, %v1070, %v1074
        %v1090 = vsel %vm1083, %v1080, %v1068
        %v1091 = vsel %vm1083, %v1082, %v1070
        %v1092 = vld [vmem:[#allocation9 + $0x440] sm:$0xff]
        %v1093 = vld [vmem:[#allocation9 + $0x448] sm:$0xff]
        %v1094 = vld [vmem:[#allocation9 + $0x450] sm:$0xff]
        %v1095 = vld [vmem:[#allocation9 + $0x458] sm:$0xff]
        %v1096 = vld [vmem:[#allocation9 + $0x460] sm:$0xff]
        %v1097 = vld [vmem:[#allocation9 + $0x468] sm:$0xff]
        %v1098 = vld [vmem:[#allocation9 + $0x470] sm:$0xff]
        %v1099 = vld [vmem:[#allocation9 + $0x478] sm:$0xff]
        %v1100 = vmul.f32 %v1088, %v1092
        %v1101 = vmul.f32 %v1086, %v1093
        %v1102 = vmul.f32 %v1084, %v1094
        %v1103 = vmul.f32 %v1090, %v1095
        %v1104 = vmul.f32 %v1089, %v1096
        %v1105 = vmul.f32 %v1087, %v1097
        %v1106 = vmul.f32 %v1085, %v1098
        %v1107 = vmul.f32 %v1091, %v1099
        %v1108 = vpack.c.bf16 %v1104, %v1100
        %v1109 = vpack.c.bf16 %v1105, %v1101
        %v1110 = vpack.c.bf16 %v1106, %v1102
        %v1111 = vpack.c.bf16 %v1107, %v1103
        %1112 = vst [vmem:[#allocation2 + $0x220] sm:$0xff] %v1108
        %1113 = vst [vmem:[#allocation2 + $0x228] sm:$0xff] %v1109
        %1114 = vst [vmem:[#allocation2 + $0x230] sm:$0xff] %v1110
        %1115 = vst [vmem:[#allocation2 + $0x238] sm:$0xff] %v1111
        %v1116 = vld [vmem:[#allocation9 + $0x480] sm:$0xff]
        %v1117 = vld [vmem:[#allocation9 + $0x488] sm:$0xff]
        %v1118 = vld [vmem:[#allocation9 + $0x490] sm:$0xff]
        %v1119 = vld [vmem:[#allocation9 + $0x498] sm:$0xff]
        %v1120 = vld [vmem:[#allocation9 + $0x4a0] sm:$0xff]
        %v1121 = vld [vmem:[#allocation9 + $0x4a8] sm:$0xff]
        %v1122 = vld [vmem:[#allocation9 + $0x4b0] sm:$0xff]
        %v1123 = vld [vmem:[#allocation9 + $0x4b8] sm:$0xff]
        %v1124 = vmul.f32 %v296, %v1116
        %v1125 = vmul.f32 %v294, %v1117
        %v1126 = vmul.f32 %v292, %v1118
        %v1127 = vmul.f32 %v298, %v1119
        %v1128 = vmul.f32 %v297, %v1120
        %v1129 = vmul.f32 %v295, %v1121
        %v1130 = vmul.f32 %v293, %v1122
        %v1131 = vmul.f32 %v299, %v1123
        %v1132 = vpack.c.bf16 %v1128, %v1124
        %v1133 = vpack.c.bf16 %v1129, %v1125
        %v1134 = vpack.c.bf16 %v1130, %v1126
        %v1135 = vpack.c.bf16 %v1131, %v1127
        %1136 = vst [vmem:[#allocation2 + $0x240] sm:$0xff] %v1132
        %1137 = vst [vmem:[#allocation2 + $0x248] sm:$0xff] %v1133
        %1138 = vst [vmem:[#allocation2 + $0x250] sm:$0xff] %v1134
        %1139 = vst [vmem:[#allocation2 + $0x258] sm:$0xff] %v1135
        %v1140 = vld [vmem:[#allocation9 + $0x4c0] sm:$0xff]
        %v1141 = vld [vmem:[#allocation9 + $0x4c8] sm:$0xff]
        %v1142 = vld [vmem:[#allocation9 + $0x4d0] sm:$0xff]
        %v1143 = vld [vmem:[#allocation9 + $0x4d8] sm:$0xff]
        %v1144 = vld [vmem:[#allocation9 + $0x4e0] sm:$0xff]
        %v1145 = vld [vmem:[#allocation9 + $0x4e8] sm:$0xff]
        %v1146 = vld [vmem:[#allocation9 + $0x4f0] sm:$0xff]
        %v1147 = vld [vmem:[#allocation9 + $0x4f8] sm:$0xff]
        %v1148 = vmul.f32 %v345, %v1140
        %v1149 = vmul.f32 %v343, %v1141
        %v1150 = vmul.f32 %v341, %v1142
        %v1151 = vmul.f32 %v347, %v1143
        %v1152 = vmul.f32 %v346, %v1144
        %v1153 = vmul.f32 %v344, %v1145
        %v1154 = vmul.f32 %v342, %v1146
        %v1155 = vmul.f32 %v348, %v1147
        %v1156 = vpack.c.bf16 %v1152, %v1148
        %v1157 = vpack.c.bf16 %v1153, %v1149
        %v1158 = vpack.c.bf16 %v1154, %v1150
        %v1159 = vpack.c.bf16 %v1155, %v1151
        %1160 = vst [vmem:[#allocation2 + $0x260] sm:$0xff] %v1156
        %1161 = vst [vmem:[#allocation2 + $0x268] sm:$0xff] %v1157
        %1162 = vst [vmem:[#allocation2 + $0x270] sm:$0xff] %v1158
        %1163 = vst [vmem:[#allocation2 + $0x278] sm:$0xff] %v1159
        %v1164 = vld [vmem:[#allocation9 + $0x500] sm:$0xff]
        %v1165 = vld [vmem:[#allocation9 + $0x508] sm:$0xff]
        %v1166 = vld [vmem:[#allocation9 + $0x510] sm:$0xff]
        %v1167 = vld [vmem:[#allocation9 + $0x518] sm:$0xff]
        %v1168 = vld [vmem:[#allocation9 + $0x520] sm:$0xff]
        %v1169 = vld [vmem:[#allocation9 + $0x528] sm:$0xff]
        %v1170 = vld [vmem:[#allocation9 + $0x530] sm:$0xff]
        %v1171 = vld [vmem:[#allocation9 + $0x538] sm:$0xff]
        %v1172 = vmul.f32 %v394, %v1164
        %v1173 = vmul.f32 %v392, %v1165
        %v1174 = vmul.f32 %v390, %v1166
        %v1175 = vmul.f32 %v396, %v1167
        %v1176 = vmul.f32 %v395, %v1168
        %v1177 = vmul.f32 %v393, %v1169
        %v1178 = vmul.f32 %v391, %v1170
        %v1179 = vmul.f32 %v397, %v1171
        %v1180 = vpack.c.bf16 %v1176, %v1172
        %v1181 = vpack.c.bf16 %v1177, %v1173
        %v1182 = vpack.c.bf16 %v1178, %v1174
        %v1183 = vpack.c.bf16 %v1179, %v1175
        %1184 = vst [vmem:[#allocation2 + $0x280] sm:$0xff] %v1180
        %1185 = vst [vmem:[#allocation2 + $0x288] sm:$0xff] %v1181
        %1186 = vst [vmem:[#allocation2 + $0x290] sm:$0xff] %v1182
        %1187 = vst [vmem:[#allocation2 + $0x298] sm:$0xff] %v1183
        %v1188 = vld [vmem:[#allocation9 + $0x540] sm:$0xff]
        %v1189 = vld [vmem:[#allocation9 + $0x548] sm:$0xff]
        %v1190 = vld [vmem:[#allocation9 + $0x550] sm:$0xff]
        %v1191 = vld [vmem:[#allocation9 + $0x558] sm:$0xff]
        %v1192 = vld [vmem:[#allocation9 + $0x560] sm:$0xff]
        %v1193 = vld [vmem:[#allocation9 + $0x568] sm:$0xff]
        %v1194 = vld [vmem:[#allocation9 + $0x570] sm:$0xff]
        %v1195 = vld [vmem:[#allocation9 + $0x578] sm:$0xff]
        %v1196 = vmul.f32 %v443, %v1188
        %v1197 = vmul.f32 %v441, %v1189
        %v1198 = vmul.f32 %v439, %v1190
        %v1199 = vmul.f32 %v445, %v1191
        %v1200 = vmul.f32 %v444, %v1192
        %v1201 = vmul.f32 %v442, %v1193
        %v1202 = vmul.f32 %v440, %v1194
        %v1203 = vmul.f32 %v446, %v1195
        %v1204 = vpack.c.bf16 %v1200, %v1196
        %v1205 = vpack.c.bf16 %v1201, %v1197
        %v1206 = vpack.c.bf16 %v1202, %v1198
        %v1207 = vpack.c.bf16 %v1203, %v1199
        %1208 = vst [vmem:[#allocation2 + $0x2a0] sm:$0xff] %v1204
        %1209 = vst [vmem:[#allocation2 + $0x2a8] sm:$0xff] %v1205
        %1210 = vst [vmem:[#allocation2 + $0x2b0] sm:$0xff] %v1206
        %1211 = vst [vmem:[#allocation2 + $0x2b8] sm:$0xff] %v1207
        %v1212 = vld [vmem:[#allocation9 + $0x580] sm:$0xff]
        %v1213 = vld [vmem:[#allocation9 + $0x588] sm:$0xff]
        %v1214 = vld [vmem:[#allocation9 + $0x590] sm:$0xff]
        %v1215 = vld [vmem:[#allocation9 + $0x598] sm:$0xff]
        %v1216 = vld [vmem:[#allocation9 + $0x5a0] sm:$0xff]
        %v1217 = vld [vmem:[#allocation9 + $0x5a8] sm:$0xff]
        %v1218 = vld [vmem:[#allocation9 + $0x5b0] sm:$0xff]
        %v1219 = vld [vmem:[#allocation9 + $0x5b8] sm:$0xff]
        %v1220 = vmul.f32 %v492, %v1212
        %v1221 = vmul.f32 %v490, %v1213
        %v1222 = vmul.f32 %v488, %v1214
        %v1223 = vmul.f32 %v494, %v1215
        %v1224 = vmul.f32 %v493, %v1216
        %v1225 = vmul.f32 %v491, %v1217
        %v1226 = vmul.f32 %v489, %v1218
        %v1227 = vmul.f32 %v495, %v1219
        %v1228 = vpack.c.bf16 %v1224, %v1220
        %v1229 = vpack.c.bf16 %v1225, %v1221
        %v1230 = vpack.c.bf16 %v1226, %v1222
        %v1231 = vpack.c.bf16 %v1227, %v1223
        %1232 = vst [vmem:[#allocation2 + $0x2c0] sm:$0xff] %v1228
        %1233 = vst [vmem:[#allocation2 + $0x2c8] sm:$0xff] %v1229
        %1234 = vst [vmem:[#allocation2 + $0x2d0] sm:$0xff] %v1230
        %1235 = vst [vmem:[#allocation2 + $0x2d8] sm:$0xff] %v1231
        %v1236 = vld [vmem:[#allocation9 + $0x5c0] sm:$0xff]
        %v1237 = vld [vmem:[#allocation9 + $0x5c8] sm:$0xff]
        %v1238 = vld [vmem:[#allocation9 + $0x5d0] sm:$0xff]
        %v1239 = vld [vmem:[#allocation9 + $0x5d8] sm:$0xff]
        %v1240 = vld [vmem:[#allocation9 + $0x5e0] sm:$0xff]
        %v1241 = vld [vmem:[#allocation9 + $0x5e8] sm:$0xff]
        %v1242 = vld [vmem:[#allocation9 + $0x5f0] sm:$0xff]
        %v1243 = vld [vmem:[#allocation9 + $0x5f8] sm:$0xff]
        %v1244 = vmul.f32 %v541, %v1236
        %v1245 = vmul.f32 %v539, %v1237
        %v1246 = vmul.f32 %v537, %v1238
        %v1247 = vmul.f32 %v543, %v1239
        %v1248 = vmul.f32 %v542, %v1240
        %v1249 = vmul.f32 %v540, %v1241
        %v1250 = vmul.f32 %v538, %v1242
        %v1251 = vmul.f32 %v544, %v1243
        %v1252 = vpack.c.bf16 %v1248, %v1244
        %v1253 = vpack.c.bf16 %v1249, %v1245
        %v1254 = vpack.c.bf16 %v1250, %v1246
        %v1255 = vpack.c.bf16 %v1251, %v1247
        %1256 = vst [vmem:[#allocation2 + $0x2e0] sm:$0xff] %v1252
        %1257 = vst [vmem:[#allocation2 + $0x2e8] sm:$0xff] %v1253
        %1258 = vst [vmem:[#allocation2 + $0x2f0] sm:$0xff] %v1254
        %1259 = vst [vmem:[#allocation2 + $0x2f8] sm:$0xff] %v1255
        %v1260 = vld [vmem:[#allocation9 + $0x600] sm:$0xff]
        %v1261 = vld [vmem:[#allocation9 + $0x608] sm:$0xff]
        %v1262 = vld [vmem:[#allocation9 + $0x610] sm:$0xff]
        %v1263 = vld [vmem:[#allocation9 + $0x618] sm:$0xff]
        %v1264 = vld [vmem:[#allocation9 + $0x620] sm:$0xff]
        %v1265 = vld [vmem:[#allocation9 + $0x628] sm:$0xff]
        %v1266 = vld [vmem:[#allocation9 + $0x630] sm:$0xff]
        %v1267 = vld [vmem:[#allocation9 + $0x638] sm:$0xff]
        %v1268 = vmul.f32 %v590, %v1260
        %v1269 = vmul.f32 %v588, %v1261
        %v1270 = vmul.f32 %v586, %v1262
        %v1271 = vmul.f32 %v592, %v1263
        %v1272 = vmul.f32 %v591, %v1264
        %v1273 = vmul.f32 %v589, %v1265
        %v1274 = vmul.f32 %v587, %v1266
        %v1275 = vmul.f32 %v593, %v1267
        %v1276 = vpack.c.bf16 %v1272, %v1268
        %v1277 = vpack.c.bf16 %v1273, %v1269
        %v1278 = vpack.c.bf16 %v1274, %v1270
        %v1279 = vpack.c.bf16 %v1275, %v1271
        %1280 = vst [vmem:[#allocation2 + $0x300] sm:$0xff] %v1276
        %1281 = vst [vmem:[#allocation2 + $0x308] sm:$0xff] %v1277
        %1282 = vst [vmem:[#allocation2 + $0x310] sm:$0xff] %v1278
        %1283 = vst [vmem:[#allocation2 + $0x318] sm:$0xff] %v1279
        %v1284 = vld [vmem:[#allocation9 + $0x640] sm:$0xff]
        %v1285 = vld [vmem:[#allocation9 + $0x648] sm:$0xff]
        %v1286 = vld [vmem:[#allocation9 + $0x650] sm:$0xff]
        %v1287 = vld [vmem:[#allocation9 + $0x658] sm:$0xff]
        %v1288 = vld [vmem:[#allocation9 + $0x660] sm:$0xff]
        %v1289 = vld [vmem:[#allocation9 + $0x668] sm:$0xff]
        %v1290 = vld [vmem:[#allocation9 + $0x670] sm:$0xff]
        %v1291 = vld [vmem:[#allocation9 + $0x678] sm:$0xff]
        %v1292 = vmul.f32 %v639, %v1284
        %v1293 = vmul.f32 %v637, %v1285
        %v1294 = vmul.f32 %v635, %v1286
        %v1295 = vmul.f32 %v641, %v1287
        %v1296 = vmul.f32 %v640, %v1288
        %v1297 = vmul.f32 %v638, %v1289
        %v1298 = vmul.f32 %v636, %v1290
        %v1299 = vmul.f32 %v642, %v1291
        %v1300 = vpack.c.bf16 %v1296, %v1292
        %v1301 = vpack.c.bf16 %v1297, %v1293
        %v1302 = vpack.c.bf16 %v1298, %v1294
        %v1303 = vpack.c.bf16 %v1299, %v1295
        %1304 = vst [vmem:[#allocation2 + $0x320] sm:$0xff] %v1300
        %1305 = vst [vmem:[#allocation2 + $0x328] sm:$0xff] %v1301
        %1306 = vst [vmem:[#allocation2 + $0x330] sm:$0xff] %v1302
        %1307 = vst [vmem:[#allocation2 + $0x338] sm:$0xff] %v1303
        %v1308 = vld [vmem:[#allocation9 + $0x680] sm:$0xff]
        %v1309 = vld [vmem:[#allocation9 + $0x688] sm:$0xff]
        %v1310 = vld [vmem:[#allocation9 + $0x690] sm:$0xff]
        %v1311 = vld [vmem:[#allocation9 + $0x698] sm:$0xff]
        %v1312 = vld [vmem:[#allocation9 + $0x6a0] sm:$0xff]
        %v1313 = vld [vmem:[#allocation9 + $0x6a8] sm:$0xff]
        %v1314 = vld [vmem:[#allocation9 + $0x6b0] sm:$0xff]
        %v1315 = vld [vmem:[#allocation9 + $0x6b8] sm:$0xff]
        %v1316 = vmul.f32 %v688, %v1308
        %v1317 = vmul.f32 %v686, %v1309
        %v1318 = vmul.f32 %v684, %v1310
        %v1319 = vmul.f32 %v690, %v1311
        %v1320 = vmul.f32 %v689, %v1312
        %v1321 = vmul.f32 %v687, %v1313
        %v1322 = vmul.f32 %v685, %v1314
        %v1323 = vmul.f32 %v691, %v1315
        %v1324 = vpack.c.bf16 %v1320, %v1316
        %v1325 = vpack.c.bf16 %v1321, %v1317
        %v1326 = vpack.c.bf16 %v1322, %v1318
        %v1327 = vpack.c.bf16 %v1323, %v1319
        %1328 = vst [vmem:[#allocation2 + $0x340] sm:$0xff] %v1324
        %1329 = vst [vmem:[#allocation2 + $0x348] sm:$0xff] %v1325
        %1330 = vst [vmem:[#allocation2 + $0x350] sm:$0xff] %v1326
        %1331 = vst [vmem:[#allocation2 + $0x358] sm:$0xff] %v1327
        %v1332 = vld [vmem:[#allocation2] sm:$0xff]
        %v1333 = vld [vmem:[#allocation2 + $0x8] sm:$0xff]
        %v1334 = vld [vmem:[#allocation2 + $0x10] sm:$0xff]
        %v1335 = vld [vmem:[#allocation2 + $0x18] sm:$0xff]
        %v1336 = vld [vmem:[#allocation2 + $0x20] sm:$0xff]
        %v1337 = vld [vmem:[#allocation2 + $0x28] sm:$0xff]
        %v1338 = vld [vmem:[#allocation2 + $0x30] sm:$0xff]
        %v1339 = vld [vmem:[#allocation2 + $0x38] sm:$0xff]
        %v1340 = vld [vmem:[#allocation2 + $0x40] sm:$0xff]
        %v1341 = vld [vmem:[#allocation2 + $0x48] sm:$0xff]
        %v1342 = vld [vmem:[#allocation2 + $0x50] sm:$0xff]
        %v1343 = vld [vmem:[#allocation2 + $0x58] sm:$0xff]
        %v1344 = vld [vmem:[#allocation2 + $0x60] sm:$0xff]
        %v1345 = vld [vmem:[#allocation2 + $0x68] sm:$0xff]
        %v1346 = vld [vmem:[#allocation2 + $0x70] sm:$0xff]
        %v1347 = vld [vmem:[#allocation2 + $0x78] sm:$0xff]
        %v1348 = vld [vmem:[#allocation2 + $0x80] sm:$0xff]
        %v1349 = vld [vmem:[#allocation2 + $0x88] sm:$0xff]
        %v1350 = vld [vmem:[#allocation2 + $0x90] sm:$0xff]
        %v1351 = vld [vmem:[#allocation2 + $0x98] sm:$0xff]
        %v1352 = vld [vmem:[#allocation2 + $0xa0] sm:$0xff]
        %v1353 = vld [vmem:[#allocation2 + $0xa8] sm:$0xff]
        %v1354 = vld [vmem:[#allocation2 + $0xb0] sm:$0xff]
        %v1355 = vld [vmem:[#allocation2 + $0xb8] sm:$0xff]
        %v1356 = vld [vmem:[#allocation2 + $0xc0] sm:$0xff]
        %v1357 = vld [vmem:[#allocation2 + $0xc8] sm:$0xff]
        %v1358 = vld [vmem:[#allocation2 + $0xd0] sm:$0xff]
        %v1359 = vld [vmem:[#allocation2 + $0xd8] sm:$0xff]
        %v1360 = vld [vmem:[#allocation2 + $0xe0] sm:$0xff]
        %v1361 = vld [vmem:[#allocation2 + $0xe8] sm:$0xff]
        %v1362 = vld [vmem:[#allocation2 + $0xf0] sm:$0xff]
        %v1363 = vld [vmem:[#allocation2 + $0xf8] sm:$0xff]
        %v1364 = vld [vmem:[#allocation2 + $0x100] sm:$0xff]
        %v1365 = vld [vmem:[#allocation2 + $0x108] sm:$0xff]
        %v1366 = vld [vmem:[#allocation2 + $0x110] sm:$0xff]
        %v1367 = vld [vmem:[#allocation2 + $0x118] sm:$0xff]
        %v1368 = vld [vmem:[#allocation2 + $0x120] sm:$0xff]
        %v1369 = vld [vmem:[#allocation2 + $0x128] sm:$0xff]
        %v1370 = vld [vmem:[#allocation2 + $0x130] sm:$0xff]
        %v1371 = vld [vmem:[#allocation2 + $0x138] sm:$0xff]
        %v1372 = vld [vmem:[#allocation2 + $0x140] sm:$0xff]
        %v1373 = vld [vmem:[#allocation2 + $0x148] sm:$0xff]
        %v1374 = vld [vmem:[#allocation2 + $0x150] sm:$0xff]
        %v1375 = vld [vmem:[#allocation2 + $0x158] sm:$0xff]
        %v1376 = vld [vmem:[#allocation2 + $0x160] sm:$0xff]
        %v1377 = vld [vmem:[#allocation2 + $0x168] sm:$0xff]
        %v1378 = vld [vmem:[#allocation2 + $0x170] sm:$0xff]
        %v1379 = vld [vmem:[#allocation2 + $0x178] sm:$0xff]
        %v1380 = vld [vmem:[#allocation2 + $0x180] sm:$0xff]
        %v1381 = vld [vmem:[#allocation2 + $0x188] sm:$0xff]
        %v1382 = vld [vmem:[#allocation2 + $0x190] sm:$0xff]
        %v1383 = vld [vmem:[#allocation2 + $0x198] sm:$0xff]
        %v1384 = vld [vmem:[#allocation2 + $0x1a0] sm:$0xff]
        %v1385 = vld [vmem:[#allocation2 + $0x1a8] sm:$0xff]
        %v1386 = vld [vmem:[#allocation2 + $0x1b0] sm:$0xff]
        %v1387 = vld [vmem:[#allocation2 + $0x1b8] sm:$0xff]
        %v1388 = vld [vmem:[#allocation2 + $0x1c0] sm:$0xff]
        %v1389 = vld [vmem:[#allocation2 + $0x1c8] sm:$0xff]
        %v1390 = vld [vmem:[#allocation2 + $0x1d0] sm:$0xff]
        %v1391 = vld [vmem:[#allocation2 + $0x1d8] sm:$0xff]
        %v1392 = vld [vmem:[#allocation2 + $0x1e0] sm:$0xff]
        %v1393 = vld [vmem:[#allocation2 + $0x1e8] sm:$0xff]
        %v1394 = vld [vmem:[#allocation2 + $0x1f0] sm:$0xff]
        %v1395 = vld [vmem:[#allocation2 + $0x1f8] sm:$0xff]
        %v1396 = vld [vmem:[#allocation2 + $0x200] sm:$0xff]
        %v1397 = vld [vmem:[#allocation2 + $0x208] sm:$0xff]
        %v1398 = vld [vmem:[#allocation2 + $0x210] sm:$0xff]
        %v1399 = vld [vmem:[#allocation2 + $0x218] sm:$0xff]
        %v1400 = vld [vmem:[#allocation2 + $0x220] sm:$0xff]
        %v1401 = vld [vmem:[#allocation2 + $0x228] sm:$0xff]
        %v1402 = vld [vmem:[#allocation2 + $0x230] sm:$0xff]
        %v1403 = vld [vmem:[#allocation2 + $0x238] sm:$0xff]
        %v1404 = vld [vmem:[#allocation2 + $0x240] sm:$0xff]
        %v1405 = vld [vmem:[#allocation2 + $0x248] sm:$0xff]
        %v1406 = vld [vmem:[#allocation2 + $0x250] sm:$0xff]
        %v1407 = vld [vmem:[#allocation2 + $0x258] sm:$0xff]
        %v1408 = vld [vmem:[#allocation2 + $0x260] sm:$0xff]
        %v1409 = vld [vmem:[#allocation2 + $0x268] sm:$0xff]
        %v1410 = vld [vmem:[#allocation2 + $0x270] sm:$0xff]
        %v1411 = vld [vmem:[#allocation2 + $0x278] sm:$0xff]
        %v1412 = vld [vmem:[#allocation2 + $0x280] sm:$0xff]
        %v1413 = vld [vmem:[#allocation2 + $0x288] sm:$0xff]
        %v1414 = vld [vmem:[#allocation2 + $0x290] sm:$0xff]
        %v1415 = vld [vmem:[#allocation2 + $0x298] sm:$0xff]
        %v1416 = vld [vmem:[#allocation2 + $0x2a0] sm:$0xff]
        %v1417 = vld [vmem:[#allocation2 + $0x2a8] sm:$0xff]
        %v1418 = vld [vmem:[#allocation2 + $0x2b0] sm:$0xff]
        %v1419 = vld [vmem:[#allocation2 + $0x2b8] sm:$0xff]
        %v1420 = vld [vmem:[#allocation2 + $0x2c0] sm:$0xff]
        %v1421 = vld [vmem:[#allocation2 + $0x2c8] sm:$0xff]
        %v1422 = vld [vmem:[#allocation2 + $0x2d0] sm:$0xff]
        %v1423 = vld [vmem:[#allocation2 + $0x2d8] sm:$0xff]
        %v1424 = vld [vmem:[#allocation2 + $0x2e0] sm:$0xff]
        %v1425 = vld [vmem:[#allocation2 + $0x2e8] sm:$0xff]
        %v1426 = vld [vmem:[#allocation2 + $0x2f0] sm:$0xff]
        %v1427 = vld [vmem:[#allocation2 + $0x2f8] sm:$0xff]
        %v1428 = vld [vmem:[#allocation2 + $0x300] sm:$0xff]
        %v1429 = vld [vmem:[#allocation2 + $0x308] sm:$0xff]
        %v1430 = vld [vmem:[#allocation2 + $0x310] sm:$0xff]
        %v1431 = vld [vmem:[#allocation2 + $0x318] sm:$0xff]
        %v1432 = vld [vmem:[#allocation2 + $0x320] sm:$0xff]
        %v1433 = vld [vmem:[#allocation2 + $0x328] sm:$0xff]
        %v1434 = vld [vmem:[#allocation2 + $0x330] sm:$0xff]
        %v1435 = vld [vmem:[#allocation2 + $0x338] sm:$0xff]
        %v1436 = vld [vmem:[#allocation2 + $0x340] sm:$0xff]
        %v1437 = vld [vmem:[#allocation2 + $0x348] sm:$0xff]
        %v1438 = vld [vmem:[#allocation2 + $0x350] sm:$0xff]
        %v1439 = vld [vmem:[#allocation2 + $0x358] sm:$0xff]
        %v1444 = vunpack.c.l.b16 %v269
        %v1445 = vunpack.c.h.b16 %v269
        %v1446 = vunpack.c.l.b16 %v270
        %v1447 = vunpack.c.h.b16 %v270
        %v1448 = vunpack.c.l.b16 %v271
        %v1449 = vunpack.c.h.b16 %v271
        %v1450 = vunpack.c.l.b16 %v272
        %v1451 = vunpack.c.h.b16 %v272
        %v1452 = vpack.c.b16 %v1448, %v1444
        %v1453 = vpack.c.b16 %v1449, %v1445
        %v1454 = vpack.c.b16 %v1450, %v1446
        %v1455 = vpack.c.b16 %v1451, %v1447
        %vm1459 = vcmask 392192
        %v1461 = vsel %vm1459, %v1455, 0
        %1463 = vmatprep.subr.bf16.mxu0 %v1333
        %1464 = vmatpush1.bf16.msra.mxu0 %v1332
        %1465 = vmatprep.subr.bf16.mxu0 %v1337
        %1466 = vmatpush1.bf16.msra.mxu0 %v1336
        %1467 = vmatprep.subr.bf16.mxu0 %v1341
        %1468 = vmatpush1.bf16.msra.mxu0 %v1340
        %1469 = vmatprep.subr.bf16.mxu0 %v1345
        %1470 = vmatpush1.bf16.msra.mxu0 %v1344
        %1471 = vmatprep.subr.bf16.mxu0 %v1349
        %1472 = vmatpush1.bf16.msra.mxu0 %v1348
        %1473 = vmatprep.subr.bf16.mxu0 %v1353
        %1474 = vmatpush1.bf16.msra.mxu0 %v1352
        %1475 = vmatprep.subr.bf16.mxu0 %v1357
        %1476 = vmatpush1.bf16.msra.mxu0 %v1356
        %1477 = vmatprep.subr.bf16.mxu0 %v1361
        %1478 = vmatpush1.bf16.msra.mxu0 %v1360
        %1479 = vmatprep.subr.bf16.mxu0 %v1365
        %1480 = vmatpush1.bf16.msra.mxu0 %v1364
        %1481 = vmatprep.subr.bf16.mxu0 %v1369
        %1482 = vmatpush1.bf16.msra.mxu0 %v1368
        %1483 = vmatprep.subr.bf16.mxu0 %v1373
        %1484 = vmatpush1.bf16.msra.mxu0 %v1372
        %1485 = vmatprep.subr.bf16.mxu0 %v1377
        %1486 = vmatpush1.bf16.msra.mxu0 %v1376
        %1487 = vmatprep.subr.bf16.mxu0 %v1381
        %1488 = vmatpush1.bf16.msra.mxu0 %v1380
        %1489 = vmatprep.subr.bf16.mxu0 %v1385
        %1490 = vmatpush1.bf16.msra.mxu0 %v1384
        %1491 = vmatprep.subr.bf16.mxu0 %v1389
        %1492 = vmatpush1.bf16.msra.mxu0 %v1388
        %1493 = vmatprep.subr.bf16.mxu0 %v1393
        %1494 = vmatpush1.bf16.msra.mxu0 %v1392
        %1495 = vmatprep.mubr.bf16.mxu0 %v1453
        %1496 = vmatmul.mubr.bf16.gmra.mrb[0].mxu0 %v1452
        %v1497 = vpop.f32.mrb[0].mxu0
        %v1498 = vadd.f32 0.0, %v1497
        %v1499 = vpop.f32.mrb[0].mxu0
        %v1500 = vadd.f32 0.0, %v1499
        %v1501 = vpop.f32.mrb[0].mxu0
        %v1502 = vadd.f32 0.0, %v1501
        %v1503 = vpop.f32.mrb[0].mxu0
        %v1504 = vadd.f32 0.0, %v1503
        %1505 = vdwg.mxu0
        %1506 = vmatprep.subr.bf16.mxu0 %v1397
        %1507 = vmatpush1.bf16.msra.mxu0 %v1396
        %1508 = vmatprep.subr.bf16.mxu0 %v1401
        %1509 = vmatpush1.bf16.msra.mxu0 %v1400
        %1510 = vmatprep.subr.bf16.mxu0 %v1405
        %1511 = vmatpush1.bf16.msra.mxu0 %v1404
        %1512 = vmatprep.subr.bf16.mxu0 %v1409
        %1513 = vmatpush1.bf16.msra.mxu0 %v1408
        %1514 = vmatprep.subr.bf16.mxu0 %v1413
        %1515 = vmatpush1.bf16.msra.mxu0 %v1412
        %1516 = vmatprep.subr.bf16.mxu0 %v1417
        %1517 = vmatpush1.bf16.msra.mxu0 %v1416
        %1518 = vmatprep.subr.bf16.mxu0 %v1421
        %1519 = vmatpush1.bf16.msra.mxu0 %v1420
        %1520 = vmatprep.subr.bf16.mxu0 %v1425
        %1521 = vmatpush1.bf16.msra.mxu0 %v1424
        %1522 = vmatprep.subr.bf16.mxu0 %v1429
        %1523 = vmatpush1.bf16.msra.mxu0 %v1428
        %1524 = vmatprep.subr.bf16.mxu0 %v1433
        %1525 = vmatpush1.bf16.msra.mxu0 %v1432
        %1526 = vmatprep.subr.bf16.mxu0 %v1437
        %1527 = vmatpush1.bf16.msra.mxu0 %v1436
        %1528 = vmatprep.subr.bf16.mxu0 0
        %1529 = vmatpush1.bf16.msra.mxu0 0
        %1530 = vmatprep.subr.bf16.mxu0 0
        %1531 = vmatpush1.bf16.msra.mxu0 0
        %1532 = vmatprep.subr.bf16.mxu0 0
        %1533 = vmatpush1.bf16.msra.mxu0 0
        %1534 = vmatprep.subr.bf16.mxu0 0
        %1535 = vmatpush1.bf16.msra.mxu0 0
        %1536 = vmatprep.subr.bf16.mxu0 0
        %1537 = vmatpush1.bf16.msra.mxu0 0
        %1538 = vmatprep.mubr.bf16.mxu0 %v1461
        %1539 = vmatmul.mubr.bf16.gmra.mrb[0].mxu0 %v1454
        %v1540 = vpop.f32.mrb[0].mxu0
        %v1541 = vadd.f32 %v1498, %v1540
        %v1542 = vpop.f32.mrb[0].mxu0
        %v1543 = vadd.f32 %v1500, %v1542
        %v1544 = vpop.f32.mrb[0].mxu0
        %v1545 = vadd.f32 %v1502, %v1544
        %v1546 = vpop.f32.mrb[0].mxu0
        %v1547 = vadd.f32 %v1504, %v1546
        %1548 = vdwg.mxu0
        %1549 = vmatprep.subr.bf16.mxu0 %v1335
        %1550 = vmatpush1.bf16.msra.mxu0 %v1334
        %1551 = vmatprep.subr.bf16.mxu0 %v1339
        %1552 = vmatpush1.bf16.msra.mxu0 %v1338
        %1553 = vmatprep.subr.bf16.mxu0 %v1343
        %1554 = vmatpush1.bf16.msra.mxu0 %v1342
        %1555 = vmatprep.subr.bf16.mxu0 %v1347
        %1556 = vmatpush1.bf16.msra.mxu0 %v1346
        %1557 = vmatprep.subr.bf16.mxu0 %v1351
        %1558 = vmatpush1.bf16.msra.mxu0 %v1350
        %1559 = vmatprep.subr.bf16.mxu0 %v1355
        %1560 = vmatpush1.bf16.msra.mxu0 %v1354
        %1561 = vmatprep.subr.bf16.mxu0 %v1359
        %1562 = vmatpush1.bf16.msra.mxu0 %v1358
        %1563 = vmatprep.subr.bf16.mxu0 %v1363
        %1564 = vmatpush1.bf16.msra.mxu0 %v1362
        %1565 = vmatprep.subr.bf16.mxu0 %v1367
        %1566 = vmatpush1.bf16.msra.mxu0 %v1366
        %1567 = vmatprep.subr.bf16.mxu0 %v1371
        %1568 = vmatpush1.bf16.msra.mxu0 %v1370
        %1569 = vmatprep.subr.bf16.mxu0 %v1375
        %1570 = vmatpush1.bf16.msra.mxu0 %v1374
        %1571 = vmatprep.subr.bf16.mxu0 %v1379
        %1572 = vmatpush1.bf16.msra.mxu0 %v1378
        %1573 = vmatprep.subr.bf16.mxu0 %v1383
        %1574 = vmatpush1.bf16.msra.mxu0 %v1382
        %1575 = vmatprep.subr.bf16.mxu0 %v1387
        %1576 = vmatpush1.bf16.msra.mxu0 %v1386
        %1577 = vmatprep.subr.bf16.mxu0 %v1391
        %1578 = vmatpush1.bf16.msra.mxu0 %v1390
        %1579 = vmatprep.subr.bf16.mxu0 %v1395
        %1580 = vmatpush1.bf16.msra.mxu0 %v1394
        %1581 = vmatprep.mubr.bf16.mxu0 %v1453
        %1582 = vmatmul.mubr.bf16.gmra.mrb[0].mxu0 %v1452
        %v1583 = vpop.f32.mrb[0].mxu0
        %v1584 = vadd.f32 0.0, %v1583
        %v1585 = vpop.f32.mrb[0].mxu0
        %v1586 = vadd.f32 0.0, %v1585
        %v1587 = vpop.f32.mrb[0].mxu0
        %v1588 = vadd.f32 0.0, %v1587
        %v1589 = vpop.f32.mrb[0].mxu0
        %v1590 = vadd.f32 0.0, %v1589
        %1591 = vdwg.mxu0
        %1592 = vmatprep.subr.bf16.mxu0 %v1399
        %1593 = vmatpush1.bf16.msra.mxu0 %v1398
        %1594 = vmatprep.subr.bf16.mxu0 %v1403
        %1595 = vmatpush1.bf16.msra.mxu0 %v1402
        %1596 = vmatprep.subr.bf16.mxu0 %v1407
        %1597 = vmatpush1.bf16.msra.mxu0 %v1406
        %1598 = vmatprep.subr.bf16.mxu0 %v1411
        %1599 = vmatpush1.bf16.msra.mxu0 %v1410
        %1600 = vmatprep.subr.bf16.mxu0 %v1415
        %1601 = vmatpush1.bf16.msra.mxu0 %v1414
        %1602 = vmatprep.subr.bf16.mxu0 %v1419
        %1603 = vmatpush1.bf16.msra.mxu0 %v1418
        %1604 = vmatprep.subr.bf16.mxu0 %v1423
        %1605 = vmatpush1.bf16.msra.mxu0 %v1422
        %1606 = vmatprep.subr.bf16.mxu0 %v1427
        %1607 = vmatpush1.bf16.msra.mxu0 %v1426
        %1608 = vmatprep.subr.bf16.mxu0 %v1431
        %1609 = vmatpush1.bf16.msra.mxu0 %v1430
        %1610 = vmatprep.subr.bf16.mxu0 %v1435
        %1611 = vmatpush1.bf16.msra.mxu0 %v1434
        %1612 = vmatprep.subr.bf16.mxu0 %v1439
        %1613 = vmatpush1.bf16.msra.mxu0 %v1438
        %1614 = vmatprep.subr.bf16.mxu0 0
        %1615 = vmatpush1.bf16.msra.mxu0 0
        %1616 = vmatprep.subr.bf16.mxu0 0
        %1617 = vmatpush1.bf16.msra.mxu0 0
        %1618 = vmatprep.subr.bf16.mxu0 0
        %1619 = vmatpush1.bf16.msra.mxu0 0
        %1620 = vmatprep.subr.bf16.mxu0 0
        %1621 = vmatpush1.bf16.msra.mxu0 0
        %1622 = vmatprep.subr.bf16.mxu0 0
        %1623 = vmatpush1.bf16.msra.mxu0 0
        %1624 = vmatprep.mubr.bf16.mxu0 %v1461
        %1625 = vmatmul.mubr.bf16.gmra.mrb[0].mxu0 %v1454
        %v1626 = vpop.f32.mrb[0].mxu0
        %v1627 = vadd.f32 %v1584, %v1626
        %v1628 = vpop.f32.mrb[0].mxu0
        %v1629 = vadd.f32 %v1586, %v1628
        %v1630 = vpop.f32.mrb[0].mxu0
        %v1631 = vadd.f32 %v1588, %v1630
        %v1632 = vpop.f32.mrb[0].mxu0
        %v1633 = vadd.f32 %v1590, %v1632
        %1634 = vdwg.mxu0
        %v1635 = vadd.f32 %v1541, %v1543
        %v1636 = vadd.f32 %v1635, %v1627
        %v1637 = vadd.f32 %v1636, %v1629
        %1638 = vadd.xlane.f32.xlu0 %v1637
        %v1639 = vpop.xlane.xlu0 %1638
        %v1640 = vadd.f32 %v1545, %v1547
        %v1641 = vadd.f32 %v1640, %v1631
        %v1642 = vadd.f32 %v1641, %v1633
        %1643 = vadd.xlane.f32.xlu0 %v1642
        %v1644 = vpop.xlane.xlu0 %1643
        %v1645 = vmul.f32 %v1639, 0.001953125
        %v1646 = vmul.f32 %v1644, 0.001953125
        %v1647 = vmul.f32 %v1541, %v1541
        %v1648 = vmul.f32 %v1543, %v1543
        %v1649 = vmul.f32 %v1627, %v1627
        %v1650 = vmul.f32 %v1629, %v1629
        %v1651 = vmul.f32 %v1545, %v1545
        %v1652 = vmul.f32 %v1547, %v1547
        %v1653 = vmul.f32 %v1631, %v1631
        %v1654 = vmul.f32 %v1633, %v1633
        %v1655 = vadd.f32 %v1647, %v1648
        %v1656 = vadd.f32 %v1655, %v1649
        %v1657 = vadd.f32 %v1656, %v1650
        %1658 = vadd.xlane.f32.xlu0 %v1657
        %v1659 = vpop.xlane.xlu0 %1658
        %v1660 = vadd.f32 %v1651, %v1652
        %v1661 = vadd.f32 %v1660, %v1653
        %v1662 = vadd.f32 %v1661, %v1654
        %1663 = vadd.xlane.f32.xlu0 %v1662
        %v1664 = vpop.xlane.xlu0 %1663
        %v1665 = vmul.f32 %v1659, 0.001953125
        %v1666 = vmul.f32 %v1664, 0.001953125
        %v1667 = vmul.f32 %v1645, %v1645
        %v1668 = vmul.f32 %v1646, %v1646
        %v1669 = vsub.f32 %v1665, %v1667
        %v1670 = vsub.f32 %v1666, %v1668
        %v1671 = vmax.f32 %v1669, 0.0
        %v1672 = vmax.f32 %v1670, 0.0
        %v1673 = vsub.f32 %v1541, %v1645
        %v1674 = vsub.f32 %v1543, %v1645
        %v1675 = vsub.f32 %v1627, %v1645
        %v1676 = vsub.f32 %v1629, %v1645
        %v1677 = vsub.f32 %v1545, %v1646
        %v1678 = vsub.f32 %v1547, %v1646
        %v1679 = vsub.f32 %v1631, %v1646
        %v1680 = vsub.f32 %v1633, %v1646
        %v1681 = vadd.f32 %v1671, 1e-05
        %v1682 = vadd.f32 %v1672, 1e-05
        %v1683 = vrsqrt.pop %v1681
        %v1684 = vrsqrt.pop %v1682
        %v1685 = vmul.f32 %v1673, %v1683
        %v1686 = vmul.f32 %v1674, %v1683
        %v1687 = vmul.f32 %v1675, %v1683
        %v1688 = vmul.f32 %v1676, %v1683
        %v1689 = vmul.f32 %v1677, %v1684
        %v1690 = vmul.f32 %v1678, %v1684
        %v1691 = vmul.f32 %v1679, %v1684
        %v1692 = vmul.f32 %v1680, %v1684
        %vm1693 = vcmp.ge.f32.partialorder %v1685, 0.0
        %vm1694 = vcmp.ge.f32.partialorder %v1686, 0.0
        %vm1695 = vcmp.ge.f32.partialorder %v1687, 0.0
        %vm1696 = vcmp.ge.f32.partialorder %v1688, 0.0
        %vm1697 = vcmp.ge.f32.partialorder %v1689, 0.0
        %vm1698 = vcmp.ge.f32.partialorder %v1690, 0.0
        %vm1699 = vcmp.ge.f32.partialorder %v1691, 0.0
        %vm1700 = vcmp.ge.f32.partialorder %v1692, 0.0
        %v1701 = vmul.f32 %v1685, 0.01
        %v1702 = vmul.f32 %v1686, 0.01
        %v1703 = vmul.f32 %v1687, 0.01
        %v1704 = vmul.f32 %v1688, 0.01
        %v1705 = vmul.f32 %v1689, 0.01
        %v1706 = vmul.f32 %v1690, 0.01
        %v1707 = vmul.f32 %v1691, 0.01
        %v1708 = vmul.f32 %v1692, 0.01
        %v1709 = vsel %vm1693, %v1685, %v1701
        %v1710 = vsel %vm1694, %v1686, %v1702
        %v1711 = vsel %vm1695, %v1687, %v1703
        %v1712 = vsel %vm1696, %v1688, %v1704
        %v1713 = vsel %vm1697, %v1689, %v1705
        %v1714 = vsel %vm1698, %v1690, %v1706
        %v1715 = vsel %vm1699, %v1691, %v1707
        %v1716 = vsel %vm1700, %v1692, %v1708
        %v1717 = vld [vmem:[#allocation8] sm:$0xff]
        %v1718 = vld [vmem:[#allocation8 + $0x8] sm:$0xff]
        %v1719 = vld [vmem:[#allocation8 + $0x10] sm:$0xff]
        %v1720 = vld [vmem:[#allocation8 + $0x18] sm:$0xff]
        %1721 = vrot.lane.b32.xlu0 %v1709, 73
        %v1722 = vpop.permute.xlu0 %1721
        %1723 = vrot.lane.b32.xlu0 %v1713, 73
        %v1724 = vpop.permute.xlu0 %1723
        %1725 = vrot.lane.b32.xlu0 %v1710, 73
        %v1726 = vpop.permute.xlu0 %1725
        %1727 = vrot.lane.b32.xlu0 %v1714, 73
        %v1728 = vpop.permute.xlu0 %1727
        %1729 = vrot.lane.b32.xlu0 %v1711, 73
        %v1730 = vpop.permute.xlu0 %1729
        %1731 = vrot.lane.b32.xlu0 %v1715, 73
        %v1732 = vpop.permute.xlu0 %1731
        %1733 = vrot.lane.b32.xlu0 %v1712, 73
        %v1734 = vpop.permute.xlu0 %1733
        %1735 = vrot.lane.b32.xlu0 %v1716, 73
        %v1736 = vpop.permute.xlu0 %1735
        %v1737 = vsel %vm291, %v1730, %v1734
        %v1738 = vsel %vm291, %v1732, %v1736
        %v1739 = vsel %vm291, %v1726, %v1730
        %v1740 = vsel %vm291, %v1728, %v1732
        %v1741 = vsel %vm291, %v1722, %v1726
        %v1742 = vsel %vm291, %v1724, %v1728
        %v1743 = vsel %vm291, %v1734, %v1722
        %v1744 = vsel %vm291, %v1736, %v1724
        %v1745 = vld [vmem:[#allocation9] sm:$0xff]
        %v1746 = vld [vmem:[#allocation9 + $0x8] sm:$0xff]
        %v1747 = vld [vmem:[#allocation9 + $0x10] sm:$0xff]
        %v1748 = vld [vmem:[#allocation9 + $0x18] sm:$0xff]
        %v1749 = vld [vmem:[#allocation9 + $0x20] sm:$0xff]
        %v1750 = vld [vmem:[#allocation9 + $0x28] sm:$0xff]
        %v1751 = vld [vmem:[#allocation9 + $0x30] sm:$0xff]
        %v1752 = vld [vmem:[#allocation9 + $0x38] sm:$0xff]
        %v1753 = vmul.f32 %v1743, %v1745
        %v1754 = vmul.f32 %v1741, %v1746
        %v1755 = vmul.f32 %v1739, %v1747
        %v1756 = vmul.f32 %v1737, %v1748
        %v1757 = vmul.f32 %v1744, %v1749
        %v1758 = vmul.f32 %v1742, %v1750
        %v1759 = vmul.f32 %v1740, %v1751
        %v1760 = vmul.f32 %v1738, %v1752
        %v1761 = vpack.c.bf16 %v1757, %v1753
        %v1762 = vpack.c.bf16 %v1758, %v1754
        %v1763 = vpack.c.bf16 %v1759, %v1755
        %v1764 = vpack.c.bf16 %v1760, %v1756
        %1765 = vst [vmem:[#allocation2] sm:$0xff] %v1761
        %1766 = vst [vmem:[#allocation2 + $0x8] sm:$0xff] %v1762
        %1767 = vst [vmem:[#allocation2 + $0x10] sm:$0xff] %v1763
        %1768 = vst [vmem:[#allocation2 + $0x18] sm:$0xff] %v1764
        %1769 = vrot.lane.b32.xlu0 %v1709, 72
        %v1770 = vpop.permute.xlu0 %1769
        %1771 = vrot.lane.b32.xlu0 %v1713, 72
        %v1772 = vpop.permute.xlu0 %1771
        %1773 = vrot.lane.b32.xlu0 %v1710, 72
        %v1774 = vpop.permute.xlu0 %1773
        %1775 = vrot.lane.b32.xlu0 %v1714, 72
        %v1776 = vpop.permute.xlu0 %1775
        %1777 = vrot.lane.b32.xlu0 %v1711, 72
        %v1778 = vpop.permute.xlu0 %1777
        %1779 = vrot.lane.b32.xlu0 %v1715, 72
        %v1780 = vpop.permute.xlu0 %1779
        %1781 = vrot.lane.b32.xlu0 %v1712, 72
        %v1782 = vpop.permute.xlu0 %1781
        %1783 = vrot.lane.b32.xlu0 %v1716, 72
        %v1784 = vpop.permute.xlu0 %1783
        %v1785 = vsel %vm340, %v1778, %v1782
        %v1786 = vsel %vm340, %v1780, %v1784
        %v1787 = vsel %vm340, %v1774, %v1778
        %v1788 = vsel %vm340, %v1776, %v1780
        %v1789 = vsel %vm340, %v1770, %v1774
        %v1790 = vsel %vm340, %v1772, %v1776
        %v1791 = vsel %vm340, %v1782, %v1770
        %v1792 = vsel %vm340, %v1784, %v1772
        %v1793 = vld [vmem:[#allocation9 + $0x40] sm:$0xff]
        %v1794 = vld [vmem:[#allocation9 + $0x48] sm:$0xff]
        %v1795 = vld [vmem:[#allocation9 + $0x50] sm:$0xff]
        %v1796 = vld [vmem:[#allocation9 + $0x58] sm:$0xff]
        %v1797 = vld [vmem:[#allocation9 + $0x60] sm:$0xff]
        %v1798 = vld [vmem:[#allocation9 + $0x68] sm:$0xff]
        %v1799 = vld [vmem:[#allocation9 + $0x70] sm:$0xff]
        %v1800 = vld [vmem:[#allocation9 + $0x78] sm:$0xff]
        %v1801 = vmul.f32 %v1791, %v1793
        %v1802 = vmul.f32 %v1789, %v1794
        %v1803 = vmul.f32 %v1787, %v1795
        %v1804 = vmul.f32 %v1785, %v1796
        %v1805 = vmul.f32 %v1792, %v1797
        %v1806 = vmul.f32 %v1790, %v1798
        %v1807 = vmul.f32 %v1788, %v1799
        %v1808 = vmul.f32 %v1786, %v1800
        %v1809 = vpack.c.bf16 %v1805, %v1801
        %v1810 = vpack.c.bf16 %v1806, %v1802
        %v1811 = vpack.c.bf16 %v1807, %v1803
        %v1812 = vpack.c.bf16 %v1808, %v1804
        %1813 = vst [vmem:[#allocation2 + $0x20] sm:$0xff] %v1809
        %1814 = vst [vmem:[#allocation2 + $0x28] sm:$0xff] %v1810
        %1815 = vst [vmem:[#allocation2 + $0x30] sm:$0xff] %v1811
        %1816 = vst [vmem:[#allocation2 + $0x38] sm:$0xff] %v1812
        %1817 = vrot.lane.b32.xlu0 %v1709, 71
        %v1818 = vpop.permute.xlu0 %1817
        %1819 = vrot.lane.b32.xlu0 %v1713, 71
        %v1820 = vpop.permute.xlu0 %1819
        %1821 = vrot.lane.b32.xlu0 %v1710, 71
        %v1822 = vpop.permute.xlu0 %1821
        %1823 = vrot.lane.b32.xlu0 %v1714, 71
        %v1824 = vpop.permute.xlu0 %1823
        %1825 = vrot.lane.b32.xlu0 %v1711, 71
        %v1826 = vpop.permute.xlu0 %1825
        %1827 = vrot.lane.b32.xlu0 %v1715, 71
        %v1828 = vpop.permute.xlu0 %1827
        %1829 = vrot.lane.b32.xlu0 %v1712, 71
        %v1830 = vpop.permute.xlu0 %1829
        %1831 = vrot.lane.b32.xlu0 %v1716, 71
        %v1832 = vpop.permute.xlu0 %1831
        %v1833 = vsel %vm389, %v1826, %v1830
        %v1834 = vsel %vm389, %v1828, %v1832
        %v1835 = vsel %vm389, %v1822, %v1826
        %v1836 = vsel %vm389, %v1824, %v1828
        %v1837 = vsel %vm389, %v1818, %v1822
        %v1838 = vsel %vm389, %v1820, %v1824
        %v1839 = vsel %vm389, %v1830, %v1818
        %v1840 = vsel %vm389, %v1832, %v1820
        %v1841 = vld [vmem:[#allocation9 + $0x80] sm:$0xff]
        %v1842 = vld [vmem:[#allocation9 + $0x88] sm:$0xff]
        %v1843 = vld [vmem:[#allocation9 + $0x90] sm:$0xff]
        %v1844 = vld [vmem:[#allocation9 + $0x98] sm:$0xff]
        %v1845 = vld [vmem:[#allocation9 + $0xa0] sm:$0xff]
        %v1846 = vld [vmem:[#allocation9 + $0xa8] sm:$0xff]
        %v1847 = vld [vmem:[#allocation9 + $0xb0] sm:$0xff]
        %v1848 = vld [vmem:[#allocation9 + $0xb8] sm:$0xff]
        %v1849 = vmul.f32 %v1839, %v1841
        %v1850 = vmul.f32 %v1837, %v1842
        %v1851 = vmul.f32 %v1835, %v1843
        %v1852 = vmul.f32 %v1833, %v1844
        %v1853 = vmul.f32 %v1840, %v1845
        %v1854 = vmul.f32 %v1838, %v1846
        %v1855 = vmul.f32 %v1836, %v1847
        %v1856 = vmul.f32 %v1834, %v1848
        %v1857 = vpack.c.bf16 %v1853, %v1849
        %v1858 = vpack.c.bf16 %v1854, %v1850
        %v1859 = vpack.c.bf16 %v1855, %v1851
        %v1860 = vpack.c.bf16 %v1856, %v1852
        %1861 = vst [vmem:[#allocation2 + $0x40] sm:$0xff] %v1857
        %1862 = vst [vmem:[#allocation2 + $0x48] sm:$0xff] %v1858
        %1863 = vst [vmem:[#allocation2 + $0x50] sm:$0xff] %v1859
        %1864 = vst [vmem:[#allocation2 + $0x58] sm:$0xff] %v1860
        %1865 = vrot.lane.b32.xlu0 %v1709, 65
        %v1866 = vpop.permute.xlu0 %1865
        %1867 = vrot.lane.b32.xlu0 %v1713, 65
        %v1868 = vpop.permute.xlu0 %1867
        %1869 = vrot.lane.b32.xlu0 %v1710, 65
        %v1870 = vpop.permute.xlu0 %1869
        %1871 = vrot.lane.b32.xlu0 %v1714, 65
        %v1872 = vpop.permute.xlu0 %1871
        %1873 = vrot.lane.b32.xlu0 %v1711, 65
        %v1874 = vpop.permute.xlu0 %1873
        %1875 = vrot.lane.b32.xlu0 %v1715, 65
        %v1876 = vpop.permute.xlu0 %1875
        %1877 = vrot.lane.b32.xlu0 %v1712, 65
        %v1878 = vpop.permute.xlu0 %1877
        %1879 = vrot.lane.b32.xlu0 %v1716, 65
        %v1880 = vpop.permute.xlu0 %1879
        %v1881 = vsel %vm438, %v1874, %v1878
        %v1882 = vsel %vm438, %v1876, %v1880
        %v1883 = vsel %vm438, %v1870, %v1874
        %v1884 = vsel %vm438, %v1872, %v1876
        %v1885 = vsel %vm438, %v1866, %v1870
        %v1886 = vsel %vm438, %v1868, %v1872
        %v1887 = vsel %vm438, %v1878, %v1866
        %v1888 = vsel %vm438, %v1880, %v1868
        %v1889 = vld [vmem:[#allocation9 + $0xc0] sm:$0xff]
        %v1890 = vld [vmem:[#allocation9 + $0xc8] sm:$0xff]
        %v1891 = vld [vmem:[#allocation9 + $0xd0] sm:$0xff]
        %v1892 = vld [vmem:[#allocation9 + $0xd8] sm:$0xff]
        %v1893 = vld [vmem:[#allocation9 + $0xe0] sm:$0xff]
        %v1894 = vld [vmem:[#allocation9 + $0xe8] sm:$0xff]
        %v1895 = vld [vmem:[#allocation9 + $0xf0] sm:$0xff]
        %v1896 = vld [vmem:[#allocation9 + $0xf8] sm:$0xff]
        %v1897 = vmul.f32 %v1887, %v1889
        %v1898 = vmul.f32 %v1885, %v1890
        %v1899 = vmul.f32 %v1883, %v1891
        %v1900 = vmul.f32 %v1881, %v1892
        %v1901 = vmul.f32 %v1888, %v1893
        %v1902 = vmul.f32 %v1886, %v1894
        %v1903 = vmul.f32 %v1884, %v1895
        %v1904 = vmul.f32 %v1882, %v1896
        %v1905 = vpack.c.bf16 %v1901, %v1897
        %v1906 = vpack.c.bf16 %v1902, %v1898
        %v1907 = vpack.c.bf16 %v1903, %v1899
        %v1908 = vpack.c.bf16 %v1904, %v1900
        %1909 = vst [vmem:[#allocation2 + $0x60] sm:$0xff] %v1905
        %1910 = vst [vmem:[#allocation2 + $0x68] sm:$0xff] %v1906
        %1911 = vst [vmem:[#allocation2 + $0x70] sm:$0xff] %v1907
        %1912 = vst [vmem:[#allocation2 + $0x78] sm:$0xff] %v1908
        %1913 = vrot.lane.b32.xlu0 %v1709, 64
        %v1914 = vpop.permute.xlu0 %1913
        %1915 = vrot.lane.b32.xlu0 %v1713, 64
        %v1916 = vpop.permute.xlu0 %1915
        %1917 = vrot.lane.b32.xlu0 %v1710, 64
        %v1918 = vpop.permute.xlu0 %1917
        %1919 = vrot.lane.b32.xlu0 %v1714, 64
        %v1920 = vpop.permute.xlu0 %1919
        %1921 = vrot.lane.b32.xlu0 %v1711, 64
        %v1922 = vpop.permute.xlu0 %1921
        %1923 = vrot.lane.b32.xlu0 %v1715, 64
        %v1924 = vpop.permute.xlu0 %1923
        %1925 = vrot.lane.b32.xlu0 %v1712, 64
        %v1926 = vpop.permute.xlu0 %1925
        %1927 = vrot.lane.b32.xlu0 %v1716, 64
        %v1928 = vpop.permute.xlu0 %1927
        %v1929 = vsel %vm487, %v1922, %v1926
        %v1930 = vsel %vm487, %v1924, %v1928
        %v1931 = vsel %vm487, %v1918, %v1922
        %v1932 = vsel %vm487, %v1920, %v1924
        %v1933 = vsel %vm487, %v1914, %v1918
        %v1934 = vsel %vm487, %v1916, %v1920
        %v1935 = vsel %vm487, %v1926, %v1914
        %v1936 = vsel %vm487, %v1928, %v1916
        %v1937 = vld [vmem:[#allocation9 + $0x100] sm:$0xff]
        %v1938 = vld [vmem:[#allocation9 + $0x108] sm:$0xff]
        %v1939 = vld [vmem:[#allocation9 + $0x110] sm:$0xff]
        %v1940 = vld [vmem:[#allocation9 + $0x118] sm:$0xff]
        %v1941 = vld [vmem:[#allocation9 + $0x120] sm:$0xff]
        %v1942 = vld [vmem:[#allocation9 + $0x128] sm:$0xff]
        %v1943 = vld [vmem:[#allocation9 + $0x130] sm:$0xff]
        %v1944 = vld [vmem:[#allocation9 + $0x138] sm:$0xff]
        %v1945 = vmul.f32 %v1935, %v1937
        %v1946 = vmul.f32 %v1933, %v1938
        %v1947 = vmul.f32 %v1931, %v1939
        %v1948 = vmul.f32 %v1929, %v1940
        %v1949 = vmul.f32 %v1936, %v1941
        %v1950 = vmul.f32 %v1934, %v1942
        %v1951 = vmul.f32 %v1932, %v1943
        %v1952 = vmul.f32 %v1930, %v1944
        %v1953 = vpack.c.bf16 %v1949, %v1945
        %v1954 = vpack.c.bf16 %v1950, %v1946
        %v1955 = vpack.c.bf16 %v1951, %v1947
        %v1956 = vpack.c.bf16 %v1952, %v1948
        %1957 = vst [vmem:[#allocation2 + $0x80] sm:$0xff] %v1953
        %1958 = vst [vmem:[#allocation2 + $0x88] sm:$0xff] %v1954
        %1959 = vst [vmem:[#allocation2 + $0x90] sm:$0xff] %v1955
        %1960 = vst [vmem:[#allocation2 + $0x98] sm:$0xff] %v1956
        %1961 = vrot.lane.b32.xlu0 %v1709, 63
        %v1962 = vpop.permute.xlu0 %1961
        %1963 = vrot.lane.b32.xlu0 %v1713, 63
        %v1964 = vpop.permute.xlu0 %1963
        %1965 = vrot.lane.b32.xlu0 %v1710, 63
        %v1966 = vpop.permute.xlu0 %1965
        %1967 = vrot.lane.b32.xlu0 %v1714, 63
        %v1968 = vpop.permute.xlu0 %1967
        %1969 = vrot.lane.b32.xlu0 %v1711, 63
        %v1970 = vpop.permute.xlu0 %1969
        %1971 = vrot.lane.b32.xlu0 %v1715, 63
        %v1972 = vpop.permute.xlu0 %1971
        %1973 = vrot.lane.b32.xlu0 %v1712, 63
        %v1974 = vpop.permute.xlu0 %1973
        %1975 = vrot.lane.b32.xlu0 %v1716, 63
        %v1976 = vpop.permute.xlu0 %1975
        %v1977 = vsel %vm536, %v1970, %v1974
        %v1978 = vsel %vm536, %v1972, %v1976
        %v1979 = vsel %vm536, %v1966, %v1970
        %v1980 = vsel %vm536, %v1968, %v1972
        %v1981 = vsel %vm536, %v1962, %v1966
        %v1982 = vsel %vm536, %v1964, %v1968
        %v1983 = vsel %vm536, %v1974, %v1962
        %v1984 = vsel %vm536, %v1976, %v1964
        %v1985 = vld [vmem:[#allocation9 + $0x140] sm:$0xff]
        %v1986 = vld [vmem:[#allocation9 + $0x148] sm:$0xff]
        %v1987 = vld [vmem:[#allocation9 + $0x150] sm:$0xff]
        %v1988 = vld [vmem:[#allocation9 + $0x158] sm:$0xff]
        %v1989 = vld [vmem:[#allocation9 + $0x160] sm:$0xff]
        %v1990 = vld [vmem:[#allocation9 + $0x168] sm:$0xff]
        %v1991 = vld [vmem:[#allocation9 + $0x170] sm:$0xff]
        %v1992 = vld [vmem:[#allocation9 + $0x178] sm:$0xff]
        %v1993 = vmul.f32 %v1983, %v1985
        %v1994 = vmul.f32 %v1981, %v1986
        %v1995 = vmul.f32 %v1979, %v1987
        %v1996 = vmul.f32 %v1977, %v1988
        %v1997 = vmul.f32 %v1984, %v1989
        %v1998 = vmul.f32 %v1982, %v1990
        %v1999 = vmul.f32 %v1980, %v1991
        %v2000 = vmul.f32 %v1978, %v1992
        %v2001 = vpack.c.bf16 %v1997, %v1993
        %v2002 = vpack.c.bf16 %v1998, %v1994
        %v2003 = vpack.c.bf16 %v1999, %v1995
        %v2004 = vpack.c.bf16 %v2000, %v1996
        %2005 = vst [vmem:[#allocation2 + $0xa0] sm:$0xff] %v2001
        %2006 = vst [vmem:[#allocation2 + $0xa8] sm:$0xff] %v2002
        %2007 = vst [vmem:[#allocation2 + $0xb0] sm:$0xff] %v2003
        %2008 = vst [vmem:[#allocation2 + $0xb8] sm:$0xff] %v2004
        %2009 = vrot.lane.b32.xlu0 %v1709, 57
        %v2010 = vpop.permute.xlu0 %2009
        %2011 = vrot.lane.b32.xlu0 %v1713, 57
        %v2012 = vpop.permute.xlu0 %2011
        %2013 = vrot.lane.b32.xlu0 %v1710, 57
        %v2014 = vpop.permute.xlu0 %2013
        %2015 = vrot.lane.b32.xlu0 %v1714, 57
        %v2016 = vpop.permute.xlu0 %2015
        %2017 = vrot.lane.b32.xlu0 %v1711, 57
        %v2018 = vpop.permute.xlu0 %2017
        %2019 = vrot.lane.b32.xlu0 %v1715, 57
        %v2020 = vpop.permute.xlu0 %2019
        %2021 = vrot.lane.b32.xlu0 %v1712, 57
        %v2022 = vpop.permute.xlu0 %2021
        %2023 = vrot.lane.b32.xlu0 %v1716, 57
        %v2024 = vpop.permute.xlu0 %2023
        %v2025 = vsel %vm585, %v2018, %v2022
        %v2026 = vsel %vm585, %v2020, %v2024
        %v2027 = vsel %vm585, %v2014, %v2018
        %v2028 = vsel %vm585, %v2016, %v2020
        %v2029 = vsel %vm585, %v2010, %v2014
        %v2030 = vsel %vm585, %v2012, %v2016
        %v2031 = vsel %vm585, %v2022, %v2010
        %v2032 = vsel %vm585, %v2024, %v2012
        %v2033 = vld [vmem:[#allocation9 + $0x180] sm:$0xff]
        %v2034 = vld [vmem:[#allocation9 + $0x188] sm:$0xff]
        %v2035 = vld [vmem:[#allocation9 + $0x190] sm:$0xff]
        %v2036 = vld [vmem:[#allocation9 + $0x198] sm:$0xff]
        %v2037 = vld [vmem:[#allocation9 + $0x1a0] sm:$0xff]
        %v2038 = vld [vmem:[#allocation9 + $0x1a8] sm:$0xff]
        %v2039 = vld [vmem:[#allocation9 + $0x1b0] sm:$0xff]
        %v2040 = vld [vmem:[#allocation9 + $0x1b8] sm:$0xff]
        %v2041 = vmul.f32 %v2031, %v2033
        %v2042 = vmul.f32 %v2029, %v2034
        %v2043 = vmul.f32 %v2027, %v2035
        %v2044 = vmul.f32 %v2025, %v2036
        %v2045 = vmul.f32 %v2032, %v2037
        %v2046 = vmul.f32 %v2030, %v2038
        %v2047 = vmul.f32 %v2028, %v2039
        %v2048 = vmul.f32 %v2026, %v2040
        %v2049 = vpack.c.bf16 %v2045, %v2041
        %v2050 = vpack.c.bf16 %v2046, %v2042
        %v2051 = vpack.c.bf16 %v2047, %v2043
        %v2052 = vpack.c.bf16 %v2048, %v2044
        %2053 = vst [vmem:[#allocation2 + $0xc0] sm:$0xff] %v2049
        %2054 = vst [vmem:[#allocation2 + $0xc8] sm:$0xff] %v2050
        %2055 = vst [vmem:[#allocation2 + $0xd0] sm:$0xff] %v2051
        %2056 = vst [vmem:[#allocation2 + $0xd8] sm:$0xff] %v2052
        %2057 = vrot.lane.b32.xlu0 %v1709, 56
        %v2058 = vpop.permute.xlu0 %2057
        %2059 = vrot.lane.b32.xlu0 %v1713, 56
        %v2060 = vpop.permute.xlu0 %2059
        %2061 = vrot.lane.b32.xlu0 %v1710, 56
        %v2062 = vpop.permute.xlu0 %2061
        %2063 = vrot.lane.b32.xlu0 %v1714, 56
        %v2064 = vpop.permute.xlu0 %2063
        %2065 = vrot.lane.b32.xlu0 %v1711, 56
        %v2066 = vpop.permute.xlu0 %2065
        %2067 = vrot.lane.b32.xlu0 %v1715, 56
        %v2068 = vpop.permute.xlu0 %2067
        %2069 = vrot.lane.b32.xlu0 %v1712, 56
        %v2070 = vpop.permute.xlu0 %2069
        %2071 = vrot.lane.b32.xlu0 %v1716, 56
        %v2072 = vpop.permute.xlu0 %2071
        %v2073 = vsel %vm634, %v2066, %v2070
        %v2074 = vsel %vm634, %v2068, %v2072
        %v2075 = vsel %vm634, %v2062, %v2066
        %v2076 = vsel %vm634, %v2064, %v2068
        %v2077 = vsel %vm634, %v2058, %v2062
        %v2078 = vsel %vm634, %v2060, %v2064
        %v2079 = vsel %vm634, %v2070, %v2058
        %v2080 = vsel %vm634, %v2072, %v2060
        %v2081 = vld [vmem:[#allocation9 + $0x1c0] sm:$0xff]
        %v2082 = vld [vmem:[#allocation9 + $0x1c8] sm:$0xff]
        %v2083 = vld [vmem:[#allocation9 + $0x1d0] sm:$0xff]
        %v2084 = vld [vmem:[#allocation9 + $0x1d8] sm:$0xff]
        %v2085 = vld [vmem:[#allocation9 + $0x1e0] sm:$0xff]
        %v2086 = vld [vmem:[#allocation9 + $0x1e8] sm:$0xff]
        %v2087 = vld [vmem:[#allocation9 + $0x1f0] sm:$0xff]
        %v2088 = vld [vmem:[#allocation9 + $0x1f8] sm:$0xff]
        %v2089 = vmul.f32 %v2079, %v2081
        %v2090 = vmul.f32 %v2077, %v2082
        %v2091 = vmul.f32 %v2075, %v2083
        %v2092 = vmul.f32 %v2073, %v2084
        %v2093 = vmul.f32 %v2080, %v2085
        %v2094 = vmul.f32 %v2078, %v2086
        %v2095 = vmul.f32 %v2076, %v2087
        %v2096 = vmul.f32 %v2074, %v2088
        %v2097 = vpack.c.bf16 %v2093, %v2089
        %v2098 = vpack.c.bf16 %v2094, %v2090
        %v2099 = vpack.c.bf16 %v2095, %v2091
        %v2100 = vpack.c.bf16 %v2096, %v2092
        %2101 = vst [vmem:[#allocation2 + $0xe0] sm:$0xff] %v2097
        %2102 = vst [vmem:[#allocation2 + $0xe8] sm:$0xff] %v2098
        %2103 = vst [vmem:[#allocation2 + $0xf0] sm:$0xff] %v2099
        %2104 = vst [vmem:[#allocation2 + $0xf8] sm:$0xff] %v2100
        %2105 = vrot.lane.b32.xlu0 %v1709, 55
        %v2106 = vpop.permute.xlu0 %2105
        %2107 = vrot.lane.b32.xlu0 %v1713, 55
        %v2108 = vpop.permute.xlu0 %2107
        %2109 = vrot.lane.b32.xlu0 %v1710, 55
        %v2110 = vpop.permute.xlu0 %2109
        %2111 = vrot.lane.b32.xlu0 %v1714, 55
        %v2112 = vpop.permute.xlu0 %2111
        %2113 = vrot.lane.b32.xlu0 %v1711, 55
        %v2114 = vpop.permute.xlu0 %2113
        %2115 = vrot.lane.b32.xlu0 %v1715, 55
        %v2116 = vpop.permute.xlu0 %2115
        %2117 = vrot.lane.b32.xlu0 %v1712, 55
        %v2118 = vpop.permute.xlu0 %2117
        %2119 = vrot.lane.b32.xlu0 %v1716, 55
        %v2120 = vpop.permute.xlu0 %2119
        %v2121 = vsel %vm683, %v2114, %v2118
        %v2122 = vsel %vm683, %v2116, %v2120
        %v2123 = vsel %vm683, %v2110, %v2114
        %v2124 = vsel %vm683, %v2112, %v2116
        %v2125 = vsel %vm683, %v2106, %v2110
        %v2126 = vsel %vm683, %v2108, %v2112
        %v2127 = vsel %vm683, %v2118, %v2106
        %v2128 = vsel %vm683, %v2120, %v2108
        %v2129 = vld [vmem:[#allocation9 + $0x200] sm:$0xff]
        %v2130 = vld [vmem:[#allocation9 + $0x208] sm:$0xff]
        %v2131 = vld [vmem:[#allocation9 + $0x210] sm:$0xff]
        %v2132 = vld [vmem:[#allocation9 + $0x218] sm:$0xff]
        %v2133 = vld [vmem:[#allocation9 + $0x220] sm:$0xff]
        %v2134 = vld [vmem:[#allocation9 + $0x228] sm:$0xff]
        %v2135 = vld [vmem:[#allocation9 + $0x230] sm:$0xff]
        %v2136 = vld [vmem:[#allocation9 + $0x238] sm:$0xff]
        %v2137 = vmul.f32 %v2127, %v2129
        %v2138 = vmul.f32 %v2125, %v2130
        %v2139 = vmul.f32 %v2123, %v2131
        %v2140 = vmul.f32 %v2121, %v2132
        %v2141 = vmul.f32 %v2128, %v2133
        %v2142 = vmul.f32 %v2126, %v2134
        %v2143 = vmul.f32 %v2124, %v2135
        %v2144 = vmul.f32 %v2122, %v2136
        %v2145 = vpack.c.bf16 %v2141, %v2137
        %v2146 = vpack.c.bf16 %v2142, %v2138
        %v2147 = vpack.c.bf16 %v2143, %v2139
        %v2148 = vpack.c.bf16 %v2144, %v2140
        %2149 = vst [vmem:[#allocation2 + $0x100] sm:$0xff] %v2145
        %2150 = vst [vmem:[#allocation2 + $0x108] sm:$0xff] %v2146
        %2151 = vst [vmem:[#allocation2 + $0x110] sm:$0xff] %v2147
        %2152 = vst [vmem:[#allocation2 + $0x118] sm:$0xff] %v2148
        %2153 = vrot.lane.b32.xlu0 %v1709, 9
        %v2154 = vpop.permute.xlu0 %2153
        %2155 = vrot.lane.b32.xlu0 %v1713, 9
        %v2156 = vpop.permute.xlu0 %2155
        %2157 = vrot.lane.b32.xlu0 %v1710, 9
        %v2158 = vpop.permute.xlu0 %2157
        %2159 = vrot.lane.b32.xlu0 %v1714, 9
        %v2160 = vpop.permute.xlu0 %2159
        %2161 = vrot.lane.b32.xlu0 %v1711, 9
        %v2162 = vpop.permute.xlu0 %2161
        %2163 = vrot.lane.b32.xlu0 %v1715, 9
        %v2164 = vpop.permute.xlu0 %2163
        %2165 = vrot.lane.b32.xlu0 %v1712, 9
        %v2166 = vpop.permute.xlu0 %2165
        %2167 = vrot.lane.b32.xlu0 %v1716, 9
        %v2168 = vpop.permute.xlu0 %2167
        %v2169 = vsel %vm732, %v2162, %v2166
        %v2170 = vsel %vm732, %v2164, %v2168
        %v2171 = vsel %vm732, %v2158, %v2162
        %v2172 = vsel %vm732, %v2160, %v2164
        %v2173 = vsel %vm732, %v2154, %v2158
        %v2174 = vsel %vm732, %v2156, %v2160
        %v2175 = vsel %vm732, %v2166, %v2154
        %v2176 = vsel %vm732, %v2168, %v2156
        %v2177 = vld [vmem:[#allocation9 + $0x240] sm:$0xff]
        %v2178 = vld [vmem:[#allocation9 + $0x248] sm:$0xff]
        %v2179 = vld [vmem:[#allocation9 + $0x250] sm:$0xff]
        %v2180 = vld [vmem:[#allocation9 + $0x258] sm:$0xff]
        %v2181 = vld [vmem:[#allocation9 + $0x260] sm:$0xff]
        %v2182 = vld [vmem:[#allocation9 + $0x268] sm:$0xff]
        %v2183 = vld [vmem:[#allocation9 + $0x270] sm:$0xff]
        %v2184 = vld [vmem:[#allocation9 + $0x278] sm:$0xff]
        %v2185 = vmul.f32 %v2175, %v2177
        %v2186 = vmul.f32 %v2173, %v2178
        %v2187 = vmul.f32 %v2171, %v2179
        %v2188 = vmul.f32 %v2169, %v2180
        %v2189 = vmul.f32 %v2176, %v2181
        %v2190 = vmul.f32 %v2174, %v2182
        %v2191 = vmul.f32 %v2172, %v2183
        %v2192 = vmul.f32 %v2170, %v2184
        %v2193 = vpack.c.bf16 %v2189, %v2185
        %v2194 = vpack.c.bf16 %v2190, %v2186
        %v2195 = vpack.c.bf16 %v2191, %v2187
        %v2196 = vpack.c.bf16 %v2192, %v2188
        %2197 = vst [vmem:[#allocation2 + $0x120] sm:$0xff] %v2193
        %2198 = vst [vmem:[#allocation2 + $0x128] sm:$0xff] %v2194
        %2199 = vst [vmem:[#allocation2 + $0x130] sm:$0xff] %v2195
        %2200 = vst [vmem:[#allocation2 + $0x138] sm:$0xff] %v2196
        %2201 = vrot.lane.b32.xlu0 %v1709, 8
        %v2202 = vpop.permute.xlu0 %2201
        %2203 = vrot.lane.b32.xlu0 %v1713, 8
        %v2204 = vpop.permute.xlu0 %2203
        %2205 = vrot.lane.b32.xlu0 %v1710, 8
        %v2206 = vpop.permute.xlu0 %2205
        %2207 = vrot.lane.b32.xlu0 %v1714, 8
        %v2208 = vpop.permute.xlu0 %2207
        %2209 = vrot.lane.b32.xlu0 %v1711, 8
        %v2210 = vpop.permute.xlu0 %2209
        %2211 = vrot.lane.b32.xlu0 %v1715, 8
        %v2212 = vpop.permute.xlu0 %2211
        %2213 = vrot.lane.b32.xlu0 %v1712, 8
        %v2214 = vpop.permute.xlu0 %2213
        %2215 = vrot.lane.b32.xlu0 %v1716, 8
        %v2216 = vpop.permute.xlu0 %2215
        %v2217 = vsel %vm781, %v2210, %v2214
        %v2218 = vsel %vm781, %v2212, %v2216
        %v2219 = vsel %vm781, %v2206, %v2210
        %v2220 = vsel %vm781, %v2208, %v2212
        %v2221 = vsel %vm781, %v2202, %v2206
        %v2222 = vsel %vm781, %v2204, %v2208
        %v2223 = vsel %vm781, %v2214, %v2202
        %v2224 = vsel %vm781, %v2216, %v2204
        %v2225 = vld [vmem:[#allocation9 + $0x280] sm:$0xff]
        %v2226 = vld [vmem:[#allocation9 + $0x288] sm:$0xff]
        %v2227 = vld [vmem:[#allocation9 + $0x290] sm:$0xff]
        %v2228 = vld [vmem:[#allocation9 + $0x298] sm:$0xff]
        %v2229 = vld [vmem:[#allocation9 + $0x2a0] sm:$0xff]
        %v2230 = vld [vmem:[#allocation9 + $0x2a8] sm:$0xff]
        %v2231 = vld [vmem:[#allocation9 + $0x2b0] sm:$0xff]
        %v2232 = vld [vmem:[#allocation9 + $0x2b8] sm:$0xff]
        %v2233 = vmul.f32 %v2223, %v2225
        %v2234 = vmul.f32 %v2221, %v2226
        %v2235 = vmul.f32 %v2219, %v2227
        %v2236 = vmul.f32 %v2217, %v2228
        %v2237 = vmul.f32 %v2224, %v2229
        %v2238 = vmul.f32 %v2222, %v2230
        %v2239 = vmul.f32 %v2220, %v2231
        %v2240 = vmul.f32 %v2218, %v2232
        %v2241 = vpack.c.bf16 %v2237, %v2233
        %v2242 = vpack.c.bf16 %v2238, %v2234
        %v2243 = vpack.c.bf16 %v2239, %v2235
        %v2244 = vpack.c.bf16 %v2240, %v2236
        %2245 = vst [vmem:[#allocation2 + $0x140] sm:$0xff] %v2241
        %2246 = vst [vmem:[#allocation2 + $0x148] sm:$0xff] %v2242
        %2247 = vst [vmem:[#allocation2 + $0x150] sm:$0xff] %v2243
        %2248 = vst [vmem:[#allocation2 + $0x158] sm:$0xff] %v2244
        %2249 = vrot.lane.b32.xlu0 %v1709, 7
        %v2250 = vpop.permute.xlu0 %2249
        %2251 = vrot.lane.b32.xlu0 %v1713, 7
        %v2252 = vpop.permute.xlu0 %2251
        %2253 = vrot.lane.b32.xlu0 %v1710, 7
        %v2254 = vpop.permute.xlu0 %2253
        %2255 = vrot.lane.b32.xlu0 %v1714, 7
        %v2256 = vpop.permute.xlu0 %2255
        %2257 = vrot.lane.b32.xlu0 %v1711, 7
        %v2258 = vpop.permute.xlu0 %2257
        %2259 = vrot.lane.b32.xlu0 %v1715, 7
        %v2260 = vpop.permute.xlu0 %2259
        %2261 = vrot.lane.b32.xlu0 %v1712, 7
        %v2262 = vpop.permute.xlu0 %2261
        %2263 = vrot.lane.b32.xlu0 %v1716, 7
        %v2264 = vpop.permute.xlu0 %2263
        %v2265 = vsel %vm830, %v2258, %v2262
        %v2266 = vsel %vm830, %v2260, %v2264
        %v2267 = vsel %vm830, %v2254, %v2258
        %v2268 = vsel %vm830, %v2256, %v2260
        %v2269 = vsel %vm830, %v2250, %v2254
        %v2270 = vsel %vm830, %v2252, %v2256
        %v2271 = vsel %vm830, %v2262, %v2250
        %v2272 = vsel %vm830, %v2264, %v2252
        %v2273 = vld [vmem:[#allocation9 + $0x2c0] sm:$0xff]
        %v2274 = vld [vmem:[#allocation9 + $0x2c8] sm:$0xff]
        %v2275 = vld [vmem:[#allocation9 + $0x2d0] sm:$0xff]
        %v2276 = vld [vmem:[#allocation9 + $0x2d8] sm:$0xff]
        %v2277 = vld [vmem:[#allocation9 + $0x2e0] sm:$0xff]
        %v2278 = vld [vmem:[#allocation9 + $0x2e8] sm:$0xff]
        %v2279 = vld [vmem:[#allocation9 + $0x2f0] sm:$0xff]
        %v2280 = vld [vmem:[#allocation9 + $0x2f8] sm:$0xff]
        %v2281 = vmul.f32 %v2271, %v2273
        %v2282 = vmul.f32 %v2269, %v2274
        %v2283 = vmul.f32 %v2267, %v2275
        %v2284 = vmul.f32 %v2265, %v2276
        %v2285 = vmul.f32 %v2272, %v2277
        %v2286 = vmul.f32 %v2270, %v2278
        %v2287 = vmul.f32 %v2268, %v2279
        %v2288 = vmul.f32 %v2266, %v2280
        %v2289 = vpack.c.bf16 %v2285, %v2281
        %v2290 = vpack.c.bf16 %v2286, %v2282
        %v2291 = vpack.c.bf16 %v2287, %v2283
        %v2292 = vpack.c.bf16 %v2288, %v2284
        %2293 = vst [vmem:[#allocation2 + $0x160] sm:$0xff] %v2289
        %2294 = vst [vmem:[#allocation2 + $0x168] sm:$0xff] %v2290
        %2295 = vst [vmem:[#allocation2 + $0x170] sm:$0xff] %v2291
        %2296 = vst [vmem:[#allocation2 + $0x178] sm:$0xff] %v2292
        %2297 = vrot.lane.b32.xlu0 %v1709, 1
        %v2298 = vpop.permute.xlu0 %2297
        %2299 = vrot.lane.b32.xlu0 %v1713, 1
        %v2300 = vpop.permute.xlu0 %2299
        %2301 = vrot.lane.b32.xlu0 %v1710, 1
        %v2302 = vpop.permute.xlu0 %2301
        %2303 = vrot.lane.b32.xlu0 %v1714, 1
        %v2304 = vpop.permute.xlu0 %2303
        %2305 = vrot.lane.b32.xlu0 %v1711, 1
        %v2306 = vpop.permute.xlu0 %2305
        %2307 = vrot.lane.b32.xlu0 %v1715, 1
        %v2308 = vpop.permute.xlu0 %2307
        %2309 = vrot.lane.b32.xlu0 %v1712, 1
        %v2310 = vpop.permute.xlu0 %2309
        %2311 = vrot.lane.b32.xlu0 %v1716, 1
        %v2312 = vpop.permute.xlu0 %2311
        %v2313 = vsel %vm879, %v2306, %v2310
        %v2314 = vsel %vm879, %v2308, %v2312
        %v2315 = vsel %vm879, %v2302, %v2306
        %v2316 = vsel %vm879, %v2304, %v2308
        %v2317 = vsel %vm879, %v2298, %v2302
        %v2318 = vsel %vm879, %v2300, %v2304
        %v2319 = vsel %vm879, %v2310, %v2298
        %v2320 = vsel %vm879, %v2312, %v2300
        %v2321 = vld [vmem:[#allocation9 + $0x300] sm:$0xff]
        %v2322 = vld [vmem:[#allocation9 + $0x308] sm:$0xff]
        %v2323 = vld [vmem:[#allocation9 + $0x310] sm:$0xff]
        %v2324 = vld [vmem:[#allocation9 + $0x318] sm:$0xff]
        %v2325 = vld [vmem:[#allocation9 + $0x320] sm:$0xff]
        %v2326 = vld [vmem:[#allocation9 + $0x328] sm:$0xff]
        %v2327 = vld [vmem:[#allocation9 + $0x330] sm:$0xff]
        %v2328 = vld [vmem:[#allocation9 + $0x338] sm:$0xff]
        %v2329 = vmul.f32 %v2319, %v2321
        %v2330 = vmul.f32 %v2317, %v2322
        %v2331 = vmul.f32 %v2315, %v2323
        %v2332 = vmul.f32 %v2313, %v2324
        %v2333 = vmul.f32 %v2320, %v2325
        %v2334 = vmul.f32 %v2318, %v2326
        %v2335 = vmul.f32 %v2316, %v2327
        %v2336 = vmul.f32 %v2314, %v2328
        %v2337 = vpack.c.bf16 %v2333, %v2329
        %v2338 = vpack.c.bf16 %v2334, %v2330
        %v2339 = vpack.c.bf16 %v2335, %v2331
        %v2340 = vpack.c.bf16 %v2336, %v2332
        %2341 = vst [vmem:[#allocation2 + $0x180] sm:$0xff] %v2337
        %2342 = vst [vmem:[#allocation2 + $0x188] sm:$0xff] %v2338
        %2343 = vst [vmem:[#allocation2 + $0x190] sm:$0xff] %v2339
        %2344 = vst [vmem:[#allocation2 + $0x198] sm:$0xff] %v2340
        %v2345 = vpack.c.bf16 %v1713, %v1709
        %v2346 = vpack.c.bf16 %v1714, %v1710
        %v2347 = vpack.c.bf16 %v1715, %v1711
        %v2348 = vpack.c.bf16 %v1716, %v1712
        %2349 = vst [vmem:[#allocation2 + $0x1a0] sm:$0xff] %v2345
        %2350 = vst [vmem:[#allocation2 + $0x1a8] sm:$0xff] %v2346
        %2351 = vst [vmem:[#allocation2 + $0x1b0] sm:$0xff] %v2347
        %2352 = vst [vmem:[#allocation2 + $0x1b8] sm:$0xff] %v2348
        %2353 = vrot.lane.b32.xlu0 %v1709, 127
        %v2354 = vpop.permute.xlu0 %2353
        %2355 = vrot.lane.b32.xlu0 %v1713, 127
        %v2356 = vpop.permute.xlu0 %2355
        %2357 = vrot.lane.b32.xlu0 %v1710, 127
        %v2358 = vpop.permute.xlu0 %2357
        %2359 = vrot.lane.b32.xlu0 %v1714, 127
        %v2360 = vpop.permute.xlu0 %2359
        %2361 = vrot.lane.b32.xlu0 %v1711, 127
        %v2362 = vpop.permute.xlu0 %2361
        %2363 = vrot.lane.b32.xlu0 %v1715, 127
        %v2364 = vpop.permute.xlu0 %2363
        %2365 = vrot.lane.b32.xlu0 %v1712, 127
        %v2366 = vpop.permute.xlu0 %2365
        %2367 = vrot.lane.b32.xlu0 %v1716, 127
        %v2368 = vpop.permute.xlu0 %2367
        %v2369 = vsel %vm936, %v2362, %v2366
        %v2370 = vsel %vm936, %v2364, %v2368
        %v2371 = vsel %vm936, %v2358, %v2362
        %v2372 = vsel %vm936, %v2360, %v2364
        %v2373 = vsel %vm936, %v2354, %v2358
        %v2374 = vsel %vm936, %v2356, %v2360
        %v2375 = vsel %vm936, %v2366, %v2354
        %v2376 = vsel %vm936, %v2368, %v2356
        %v2377 = vld [vmem:[#allocation9 + $0x380] sm:$0xff]
        %v2378 = vld [vmem:[#allocation9 + $0x388] sm:$0xff]
        %v2379 = vld [vmem:[#allocation9 + $0x390] sm:$0xff]
        %v2380 = vld [vmem:[#allocation9 + $0x398] sm:$0xff]
        %v2381 = vld [vmem:[#allocation9 + $0x3a0] sm:$0xff]
        %v2382 = vld [vmem:[#allocation9 + $0x3a8] sm:$0xff]
        %v2383 = vld [vmem:[#allocation9 + $0x3b0] sm:$0xff]
        %v2384 = vld [vmem:[#allocation9 + $0x3b8] sm:$0xff]
        %v2385 = vmul.f32 %v2373, %v2377
        %v2386 = vmul.f32 %v2371, %v2378
        %v2387 = vmul.f32 %v2369, %v2379
        %v2388 = vmul.f32 %v2375, %v2380
        %v2389 = vmul.f32 %v2374, %v2381
        %v2390 = vmul.f32 %v2372, %v2382
        %v2391 = vmul.f32 %v2370, %v2383
        %v2392 = vmul.f32 %v2376, %v2384
        %v2393 = vpack.c.bf16 %v2389, %v2385
        %v2394 = vpack.c.bf16 %v2390, %v2386
        %v2395 = vpack.c.bf16 %v2391, %v2387
        %v2396 = vpack.c.bf16 %v2392, %v2388
        %2397 = vst [vmem:[#allocation2 + $0x1c0] sm:$0xff] %v2393
        %2398 = vst [vmem:[#allocation2 + $0x1c8] sm:$0xff] %v2394
        %2399 = vst [vmem:[#allocation2 + $0x1d0] sm:$0xff] %v2395
        %2400 = vst [vmem:[#allocation2 + $0x1d8] sm:$0xff] %v2396
        %2401 = vrot.lane.b32.xlu0 %v1709, 121
        %v2402 = vpop.permute.xlu0 %2401
        %2403 = vrot.lane.b32.xlu0 %v1713, 121
        %v2404 = vpop.permute.xlu0 %2403
        %2405 = vrot.lane.b32.xlu0 %v1710, 121
        %v2406 = vpop.permute.xlu0 %2405
        %2407 = vrot.lane.b32.xlu0 %v1714, 121
        %v2408 = vpop.permute.xlu0 %2407
        %2409 = vrot.lane.b32.xlu0 %v1711, 121
        %v2410 = vpop.permute.xlu0 %2409
        %2411 = vrot.lane.b32.xlu0 %v1715, 121
        %v2412 = vpop.permute.xlu0 %2411
        %2413 = vrot.lane.b32.xlu0 %v1712, 121
        %v2414 = vpop.permute.xlu0 %2413
        %2415 = vrot.lane.b32.xlu0 %v1716, 121
        %v2416 = vpop.permute.xlu0 %2415
        %v2417 = vsel %vm985, %v2410, %v2414
        %v2418 = vsel %vm985, %v2412, %v2416
        %v2419 = vsel %vm985, %v2406, %v2410
        %v2420 = vsel %vm985, %v2408, %v2412
        %v2421 = vsel %vm985, %v2402, %v2406
        %v2422 = vsel %vm985, %v2404, %v2408
        %v2423 = vsel %vm985, %v2414, %v2402
        %v2424 = vsel %vm985, %v2416, %v2404
        %v2425 = vld [vmem:[#allocation9 + $0x3c0] sm:$0xff]
        %v2426 = vld [vmem:[#allocation9 + $0x3c8] sm:$0xff]
        %v2427 = vld [vmem:[#allocation9 + $0x3d0] sm:$0xff]
        %v2428 = vld [vmem:[#allocation9 + $0x3d8] sm:$0xff]
        %v2429 = vld [vmem:[#allocation9 + $0x3e0] sm:$0xff]
        %v2430 = vld [vmem:[#allocation9 + $0x3e8] sm:$0xff]
        %v2431 = vld [vmem:[#allocation9 + $0x3f0] sm:$0xff]
        %v2432 = vld [vmem:[#allocation9 + $0x3f8] sm:$0xff]
        %v2433 = vmul.f32 %v2421, %v2425
        %v2434 = vmul.f32 %v2419, %v2426
        %v2435 = vmul.f32 %v2417, %v2427
        %v2436 = vmul.f32 %v2423, %v2428
        %v2437 = vmul.f32 %v2422, %v2429
        %v2438 = vmul.f32 %v2420, %v2430
        %v2439 = vmul.f32 %v2418, %v2431
        %v2440 = vmul.f32 %v2424, %v2432
        %v2441 = vpack.c.bf16 %v2437, %v2433
        %v2442 = vpack.c.bf16 %v2438, %v2434
        %v2443 = vpack.c.bf16 %v2439, %v2435
        %v2444 = vpack.c.bf16 %v2440, %v2436
        %2445 = vst [vmem:[#allocation2 + $0x1e0] sm:$0xff] %v2441
        %2446 = vst [vmem:[#allocation2 + $0x1e8] sm:$0xff] %v2442
        %2447 = vst [vmem:[#allocation2 + $0x1f0] sm:$0xff] %v2443
        %2448 = vst [vmem:[#allocation2 + $0x1f8] sm:$0xff] %v2444
        %2449 = vrot.lane.b32.xlu0 %v1709, 120
        %v2450 = vpop.permute.xlu0 %2449
        %2451 = vrot.lane.b32.xlu0 %v1713, 120
        %v2452 = vpop.permute.xlu0 %2451
        %2453 = vrot.lane.b32.xlu0 %v1710, 120
        %v2454 = vpop.permute.xlu0 %2453
        %2455 = vrot.lane.b32.xlu0 %v1714, 120
        %v2456 = vpop.permute.xlu0 %2455
        %2457 = vrot.lane.b32.xlu0 %v1711, 120
        %v2458 = vpop.permute.xlu0 %2457
        %2459 = vrot.lane.b32.xlu0 %v1715, 120
        %v2460 = vpop.permute.xlu0 %2459
        %2461 = vrot.lane.b32.xlu0 %v1712, 120
        %v2462 = vpop.permute.xlu0 %2461
        %2463 = vrot.lane.b32.xlu0 %v1716, 120
        %v2464 = vpop.permute.xlu0 %2463
        %v2465 = vsel %vm1034, %v2458, %v2462
        %v2466 = vsel %vm1034, %v2460, %v2464
        %v2467 = vsel %vm1034, %v2454, %v2458
        %v2468 = vsel %vm1034, %v2456, %v2460
        %v2469 = vsel %vm1034, %v2450, %v2454
        %v2470 = vsel %vm1034, %v2452, %v2456
        %v2471 = vsel %vm1034, %v2462, %v2450
        %v2472 = vsel %vm1034, %v2464, %v2452
        %v2473 = vld [vmem:[#allocation9 + $0x400] sm:$0xff]
        %v2474 = vld [vmem:[#allocation9 + $0x408] sm:$0xff]
        %v2475 = vld [vmem:[#allocation9 + $0x410] sm:$0xff]
        %v2476 = vld [vmem:[#allocation9 + $0x418] sm:$0xff]
        %v2477 = vld [vmem:[#allocation9 + $0x420] sm:$0xff]
        %v2478 = vld [vmem:[#allocation9 + $0x428] sm:$0xff]
        %v2479 = vld [vmem:[#allocation9 + $0x430] sm:$0xff]
        %v2480 = vld [vmem:[#allocation9 + $0x438] sm:$0xff]
        %v2481 = vmul.f32 %v2469, %v2473
        %v2482 = vmul.f32 %v2467, %v2474
        %v2483 = vmul.f32 %v2465, %v2475
        %v2484 = vmul.f32 %v2471, %v2476
        %v2485 = vmul.f32 %v2470, %v2477
        %v2486 = vmul.f32 %v2468, %v2478
        %v2487 = vmul.f32 %v2466, %v2479
        %v2488 = vmul.f32 %v2472, %v2480
        %v2489 = vpack.c.bf16 %v2485, %v2481
        %v2490 = vpack.c.bf16 %v2486, %v2482
        %v2491 = vpack.c.bf16 %v2487, %v2483
        %v2492 = vpack.c.bf16 %v2488, %v2484
        %2493 = vst [vmem:[#allocation2 + $0x200] sm:$0xff] %v2489
        %2494 = vst [vmem:[#allocation2 + $0x208] sm:$0xff] %v2490
        %2495 = vst [vmem:[#allocation2 + $0x210] sm:$0xff] %v2491
        %2496 = vst [vmem:[#allocation2 + $0x218] sm:$0xff] %v2492
        %2497 = vrot.lane.b32.xlu0 %v1709, 119
        %v2498 = vpop.permute.xlu0 %2497
        %2499 = vrot.lane.b32.xlu0 %v1713, 119
        %v2500 = vpop.permute.xlu0 %2499
        %2501 = vrot.lane.b32.xlu0 %v1710, 119
        %v2502 = vpop.permute.xlu0 %2501
        %2503 = vrot.lane.b32.xlu0 %v1714, 119
        %v2504 = vpop.permute.xlu0 %2503
        %2505 = vrot.lane.b32.xlu0 %v1711, 119
        %v2506 = vpop.permute.xlu0 %2505
        %2507 = vrot.lane.b32.xlu0 %v1715, 119
        %v2508 = vpop.permute.xlu0 %2507
        %2509 = vrot.lane.b32.xlu0 %v1712, 119
        %v2510 = vpop.permute.xlu0 %2509
        %2511 = vrot.lane.b32.xlu0 %v1716, 119
        %v2512 = vpop.permute.xlu0 %2511
        %v2513 = vsel %vm1083, %v2506, %v2510
        %v2514 = vsel %vm1083, %v2508, %v2512
        %v2515 = vsel %vm1083, %v2502, %v2506
        %v2516 = vsel %vm1083, %v2504, %v2508
        %v2517 = vsel %vm1083, %v2498, %v2502
        %v2518 = vsel %vm1083, %v2500, %v2504
        %v2519 = vsel %vm1083, %v2510, %v2498
        %v2520 = vsel %vm1083, %v2512, %v2500
        %v2521 = vld [vmem:[#allocation9 + $0x440] sm:$0xff]
        %v2522 = vld [vmem:[#allocation9 + $0x448] sm:$0xff]
        %v2523 = vld [vmem:[#allocation9 + $0x450] sm:$0xff]
        %v2524 = vld [vmem:[#allocation9 + $0x458] sm:$0xff]
        %v2525 = vld [vmem:[#allocation9 + $0x460] sm:$0xff]
        %v2526 = vld [vmem:[#allocation9 + $0x468] sm:$0xff]
        %v2527 = vld [vmem:[#allocation9 + $0x470] sm:$0xff]
        %v2528 = vld [vmem:[#allocation9 + $0x478] sm:$0xff]
        %v2529 = vmul.f32 %v2517, %v2521
        %v2530 = vmul.f32 %v2515, %v2522
        %v2531 = vmul.f32 %v2513, %v2523
        %v2532 = vmul.f32 %v2519, %v2524
        %v2533 = vmul.f32 %v2518, %v2525
        %v2534 = vmul.f32 %v2516, %v2526
        %v2535 = vmul.f32 %v2514, %v2527
        %v2536 = vmul.f32 %v2520, %v2528
        %v2537 = vpack.c.bf16 %v2533, %v2529
        %v2538 = vpack.c.bf16 %v2534, %v2530
        %v2539 = vpack.c.bf16 %v2535, %v2531
        %v2540 = vpack.c.bf16 %v2536, %v2532
        %2541 = vst [vmem:[#allocation2 + $0x220] sm:$0xff] %v2537
        %2542 = vst [vmem:[#allocation2 + $0x228] sm:$0xff] %v2538
        %2543 = vst [vmem:[#allocation2 + $0x230] sm:$0xff] %v2539
        %2544 = vst [vmem:[#allocation2 + $0x238] sm:$0xff] %v2540
        %v2545 = vld [vmem:[#allocation9 + $0x480] sm:$0xff]
        %v2546 = vld [vmem:[#allocation9 + $0x488] sm:$0xff]
        %v2547 = vld [vmem:[#allocation9 + $0x490] sm:$0xff]
        %v2548 = vld [vmem:[#allocation9 + $0x498] sm:$0xff]
        %v2549 = vld [vmem:[#allocation9 + $0x4a0] sm:$0xff]
        %v2550 = vld [vmem:[#allocation9 + $0x4a8] sm:$0xff]
        %v2551 = vld [vmem:[#allocation9 + $0x4b0] sm:$0xff]
        %v2552 = vld [vmem:[#allocation9 + $0x4b8] sm:$0xff]
        %v2553 = vmul.f32 %v1741, %v2545
        %v2554 = vmul.f32 %v1739, %v2546
        %v2555 = vmul.f32 %v1737, %v2547
        %v2556 = vmul.f32 %v1743, %v2548
        %v2557 = vmul.f32 %v1742, %v2549
        %v2558 = vmul.f32 %v1740, %v2550
        %v2559 = vmul.f32 %v1738, %v2551
        %v2560 = vmul.f32 %v1744, %v2552
        %v2561 = vpack.c.bf16 %v2557, %v2553
        %v2562 = vpack.c.bf16 %v2558, %v2554
        %v2563 = vpack.c.bf16 %v2559, %v2555
        %v2564 = vpack.c.bf16 %v2560, %v2556
        %2565 = vst [vmem:[#allocation2 + $0x240] sm:$0xff] %v2561
        %2566 = vst [vmem:[#allocation2 + $0x248] sm:$0xff] %v2562
        %2567 = vst [vmem:[#allocation2 + $0x250] sm:$0xff] %v2563
        %2568 = vst [vmem:[#allocation2 + $0x258] sm:$0xff] %v2564
        %v2569 = vld [vmem:[#allocation9 + $0x4c0] sm:$0xff]
        %v2570 = vld [vmem:[#allocation9 + $0x4c8] sm:$0xff]
        %v2571 = vld [vmem:[#allocation9 + $0x4d0] sm:$0xff]
        %v2572 = vld [vmem:[#allocation9 + $0x4d8] sm:$0xff]
        %v2573 = vld [vmem:[#allocation9 + $0x4e0] sm:$0xff]
        %v2574 = vld [vmem:[#allocation9 + $0x4e8] sm:$0xff]
        %v2575 = vld [vmem:[#allocation9 + $0x4f0] sm:$0xff]
        %v2576 = vld [vmem:[#allocation9 + $0x4f8] sm:$0xff]
        %v2577 = vmul.f32 %v1789, %v2569
        %v2578 = vmul.f32 %v1787, %v2570
        %v2579 = vmul.f32 %v1785, %v2571
        %v2580 = vmul.f32 %v1791, %v2572
        %v2581 = vmul.f32 %v1790, %v2573
        %v2582 = vmul.f32 %v1788, %v2574
        %v2583 = vmul.f32 %v1786, %v2575
        %v2584 = vmul.f32 %v1792, %v2576
        %v2585 = vpack.c.bf16 %v2581, %v2577
        %v2586 = vpack.c.bf16 %v2582, %v2578
        %v2587 = vpack.c.bf16 %v2583, %v2579
        %v2588 = vpack.c.bf16 %v2584, %v2580
        %2589 = vst [vmem:[#allocation2 + $0x260] sm:$0xff] %v2585
        %2590 = vst [vmem:[#allocation2 + $0x268] sm:$0xff] %v2586
        %2591 = vst [vmem:[#allocation2 + $0x270] sm:$0xff] %v2587
        %2592 = vst [vmem:[#allocation2 + $0x278] sm:$0xff] %v2588
        %v2593 = vld [vmem:[#allocation9 + $0x500] sm:$0xff]
        %v2594 = vld [vmem:[#allocation9 + $0x508] sm:$0xff]
        %v2595 = vld [vmem:[#allocation9 + $0x510] sm:$0xff]
        %v2596 = vld [vmem:[#allocation9 + $0x518] sm:$0xff]
        %v2597 = vld [vmem:[#allocation9 + $0x520] sm:$0xff]
        %v2598 = vld [vmem:[#allocation9 + $0x528] sm:$0xff]
        %v2599 = vld [vmem:[#allocation9 + $0x530] sm:$0xff]
        %v2600 = vld [vmem:[#allocation9 + $0x538] sm:$0xff]
        %v2601 = vmul.f32 %v1837, %v2593
        %v2602 = vmul.f32 %v1835, %v2594
        %v2603 = vmul.f32 %v1833, %v2595
        %v2604 = vmul.f32 %v1839, %v2596
        %v2605 = vmul.f32 %v1838, %v2597
        %v2606 = vmul.f32 %v1836, %v2598
        %v2607 = vmul.f32 %v1834, %v2599
        %v2608 = vmul.f32 %v1840, %v2600
        %v2609 = vpack.c.bf16 %v2605, %v2601
        %v2610 = vpack.c.bf16 %v2606, %v2602
        %v2611 = vpack.c.bf16 %v2607, %v2603
        %v2612 = vpack.c.bf16 %v2608, %v2604
        %2613 = vst [vmem:[#allocation2 + $0x280] sm:$0xff] %v2609
        %2614 = vst [vmem:[#allocation2 + $0x288] sm:$0xff] %v2610
        %2615 = vst [vmem:[#allocation2 + $0x290] sm:$0xff] %v2611
        %2616 = vst [vmem:[#allocation2 + $0x298] sm:$0xff] %v2612
        %v2617 = vld [vmem:[#allocation9 + $0x540] sm:$0xff]
        %v2618 = vld [vmem:[#allocation9 + $0x548] sm:$0xff]
        %v2619 = vld [vmem:[#allocation9 + $0x550] sm:$0xff]
        %v2620 = vld [vmem:[#allocation9 + $0x558] sm:$0xff]
        %v2621 = vld [vmem:[#allocation9 + $0x560] sm:$0xff]
        %v2622 = vld [vmem:[#allocation9 + $0x568] sm:$0xff]
        %v2623 = vld [vmem:[#allocation9 + $0x570] sm:$0xff]
        %v2624 = vld [vmem:[#allocation9 + $0x578] sm:$0xff]
        %v2625 = vmul.f32 %v1885, %v2617
        %v2626 = vmul.f32 %v1883, %v2618
        %v2627 = vmul.f32 %v1881, %v2619
        %v2628 = vmul.f32 %v1887, %v2620
        %v2629 = vmul.f32 %v1886, %v2621
        %v2630 = vmul.f32 %v1884, %v2622
        %v2631 = vmul.f32 %v1882, %v2623
        %v2632 = vmul.f32 %v1888, %v2624
        %v2633 = vpack.c.bf16 %v2629, %v2625
        %v2634 = vpack.c.bf16 %v2630, %v2626
        %v2635 = vpack.c.bf16 %v2631, %v2627
        %v2636 = vpack.c.bf16 %v2632, %v2628
        %2637 = vst [vmem:[#allocation2 + $0x2a0] sm:$0xff] %v2633
        %2638 = vst [vmem:[#allocation2 + $0x2a8] sm:$0xff] %v2634
        %2639 = vst [vmem:[#allocation2 + $0x2b0] sm:$0xff] %v2635
        %2640 = vst [vmem:[#allocation2 + $0x2b8] sm:$0xff] %v2636
        %v2641 = vld [vmem:[#allocation9 + $0x580] sm:$0xff]
        %v2642 = vld [vmem:[#allocation9 + $0x588] sm:$0xff]
        %v2643 = vld [vmem:[#allocation9 + $0x590] sm:$0xff]
        %v2644 = vld [vmem:[#allocation9 + $0x598] sm:$0xff]
        %v2645 = vld [vmem:[#allocation9 + $0x5a0] sm:$0xff]
        %v2646 = vld [vmem:[#allocation9 + $0x5a8] sm:$0xff]
        %v2647 = vld [vmem:[#allocation9 + $0x5b0] sm:$0xff]
        %v2648 = vld [vmem:[#allocation9 + $0x5b8] sm:$0xff]
        %v2649 = vmul.f32 %v1933, %v2641
        %v2650 = vmul.f32 %v1931, %v2642
        %v2651 = vmul.f32 %v1929, %v2643
        %v2652 = vmul.f32 %v1935, %v2644
        %v2653 = vmul.f32 %v1934, %v2645
        %v2654 = vmul.f32 %v1932, %v2646
        %v2655 = vmul.f32 %v1930, %v2647
        %v2656 = vmul.f32 %v1936, %v2648
        %v2657 = vpack.c.bf16 %v2653, %v2649
        %v2658 = vpack.c.bf16 %v2654, %v2650
        %v2659 = vpack.c.bf16 %v2655, %v2651
        %v2660 = vpack.c.bf16 %v2656, %v2652
        %2661 = vst [vmem:[#allocation2 + $0x2c0] sm:$0xff] %v2657
        %2662 = vst [vmem:[#allocation2 + $0x2c8] sm:$0xff] %v2658
        %2663 = vst [vmem:[#allocation2 + $0x2d0] sm:$0xff] %v2659
        %2664 = vst [vmem:[#allocation2 + $0x2d8] sm:$0xff] %v2660
        %v2665 = vld [vmem:[#allocation9 + $0x5c0] sm:$0xff]
        %v2666 = vld [vmem:[#allocation9 + $0x5c8] sm:$0xff]
        %v2667 = vld [vmem:[#allocation9 + $0x5d0] sm:$0xff]
        %v2668 = vld [vmem:[#allocation9 + $0x5d8] sm:$0xff]
        %v2669 = vld [vmem:[#allocation9 + $0x5e0] sm:$0xff]
        %v2670 = vld [vmem:[#allocation9 + $0x5e8] sm:$0xff]
        %v2671 = vld [vmem:[#allocation9 + $0x5f0] sm:$0xff]
        %v2672 = vld [vmem:[#allocation9 + $0x5f8] sm:$0xff]
        %v2673 = vmul.f32 %v1981, %v2665
        %v2674 = vmul.f32 %v1979, %v2666
        %v2675 = vmul.f32 %v1977, %v2667
        %v2676 = vmul.f32 %v1983, %v2668
        %v2677 = vmul.f32 %v1982, %v2669
        %v2678 = vmul.f32 %v1980, %v2670
        %v2679 = vmul.f32 %v1978, %v2671
        %v2680 = vmul.f32 %v1984, %v2672
        %v2681 = vpack.c.bf16 %v2677, %v2673
        %v2682 = vpack.c.bf16 %v2678, %v2674
        %v2683 = vpack.c.bf16 %v2679, %v2675
        %v2684 = vpack.c.bf16 %v2680, %v2676
        %2685 = vst [vmem:[#allocation2 + $0x2e0] sm:$0xff] %v2681
        %2686 = vst [vmem:[#allocation2 + $0x2e8] sm:$0xff] %v2682
        %2687 = vst [vmem:[#allocation2 + $0x2f0] sm:$0xff] %v2683
        %2688 = vst [vmem:[#allocation2 + $0x2f8] sm:$0xff] %v2684
        %v2689 = vld [vmem:[#allocation9 + $0x600] sm:$0xff]
        %v2690 = vld [vmem:[#allocation9 + $0x608] sm:$0xff]
        %v2691 = vld [vmem:[#allocation9 + $0x610] sm:$0xff]
        %v2692 = vld [vmem:[#allocation9 + $0x618] sm:$0xff]
        %v2693 = vld [vmem:[#allocation9 + $0x620] sm:$0xff]
        %v2694 = vld [vmem:[#allocation9 + $0x628] sm:$0xff]
        %v2695 = vld [vmem:[#allocation9 + $0x630] sm:$0xff]
        %v2696 = vld [vmem:[#allocation9 + $0x638] sm:$0xff]
        %v2697 = vmul.f32 %v2029, %v2689
        %v2698 = vmul.f32 %v2027, %v2690
        %v2699 = vmul.f32 %v2025, %v2691
        %v2700 = vmul.f32 %v2031, %v2692
        %v2701 = vmul.f32 %v2030, %v2693
        %v2702 = vmul.f32 %v2028, %v2694
        %v2703 = vmul.f32 %v2026, %v2695
        %v2704 = vmul.f32 %v2032, %v2696
        %v2705 = vpack.c.bf16 %v2701, %v2697
        %v2706 = vpack.c.bf16 %v2702, %v2698
        %v2707 = vpack.c.bf16 %v2703, %v2699
        %v2708 = vpack.c.bf16 %v2704, %v2700
        %2709 = vst [vmem:[#allocation2 + $0x300] sm:$0xff] %v2705
        %2710 = vst [vmem:[#allocation2 + $0x308] sm:$0xff] %v2706
        %2711 = vst [vmem:[#allocation2 + $0x310] sm:$0xff] %v2707
        %2712 = vst [vmem:[#allocation2 + $0x318] sm:$0xff] %v2708
        %v2713 = vld [vmem:[#allocation9 + $0x640] sm:$0xff]
        %v2714 = vld [vmem:[#allocation9 + $0x648] sm:$0xff]
        %v2715 = vld [vmem:[#allocation9 + $0x650] sm:$0xff]
        %v2716 = vld [vmem:[#allocation9 + $0x658] sm:$0xff]
        %v2717 = vld [vmem:[#allocation9 + $0x660] sm:$0xff]
        %v2718 = vld [vmem:[#allocation9 + $0x668] sm:$0xff]
        %v2719 = vld [vmem:[#allocation9 + $0x670] sm:$0xff]
        %v2720 = vld [vmem:[#allocation9 + $0x678] sm:$0xff]
        %v2721 = vmul.f32 %v2077, %v2713
        %v2722 = vmul.f32 %v2075, %v2714
        %v2723 = vmul.f32 %v2073, %v2715
        %v2724 = vmul.f32 %v2079, %v2716
        %v2725 = vmul.f32 %v2078, %v2717
        %v2726 = vmul.f32 %v2076, %v2718
        %v2727 = vmul.f32 %v2074, %v2719
        %v2728 = vmul.f32 %v2080, %v2720
        %v2729 = vpack.c.bf16 %v2725, %v2721
        %v2730 = vpack.c.bf16 %v2726, %v2722
        %v2731 = vpack.c.bf16 %v2727, %v2723
        %v2732 = vpack.c.bf16 %v2728, %v2724
        %2733 = vst [vmem:[#allocation2 + $0x320] sm:$0xff] %v2729
        %2734 = vst [vmem:[#allocation2 + $0x328] sm:$0xff] %v2730
        %2735 = vst [vmem:[#allocation2 + $0x330] sm:$0xff] %v2731
        %2736 = vst [vmem:[#allocation2 + $0x338] sm:$0xff] %v2732
        %v2737 = vld [vmem:[#allocation9 + $0x680] sm:$0xff]
        %v2738 = vld [vmem:[#allocation9 + $0x688] sm:$0xff]
        %v2739 = vld [vmem:[#allocation9 + $0x690] sm:$0xff]
        %v2740 = vld [vmem:[#allocation9 + $0x698] sm:$0xff]
        %v2741 = vld [vmem:[#allocation9 + $0x6a0] sm:$0xff]
        %v2742 = vld [vmem:[#allocation9 + $0x6a8] sm:$0xff]
        %v2743 = vld [vmem:[#allocation9 + $0x6b0] sm:$0xff]
        %v2744 = vld [vmem:[#allocation9 + $0x6b8] sm:$0xff]
        %v2745 = vmul.f32 %v2125, %v2737
        %v2746 = vmul.f32 %v2123, %v2738
        %v2747 = vmul.f32 %v2121, %v2739
        %v2748 = vmul.f32 %v2127, %v2740
        %v2749 = vmul.f32 %v2126, %v2741
        %v2750 = vmul.f32 %v2124, %v2742
        %v2751 = vmul.f32 %v2122, %v2743
        %v2752 = vmul.f32 %v2128, %v2744
        %v2753 = vpack.c.bf16 %v2749, %v2745
        %v2754 = vpack.c.bf16 %v2750, %v2746
        %v2755 = vpack.c.bf16 %v2751, %v2747
        %v2756 = vpack.c.bf16 %v2752, %v2748
        %2757 = vst [vmem:[#allocation2 + $0x340] sm:$0xff] %v2753
        %2758 = vst [vmem:[#allocation2 + $0x348] sm:$0xff] %v2754
        %2759 = vst [vmem:[#allocation2 + $0x350] sm:$0xff] %v2755
        %2760 = vst [vmem:[#allocation2 + $0x358] sm:$0xff] %v2756
        %v2761 = vld [vmem:[#allocation2] sm:$0xff]
        %v2762 = vld [vmem:[#allocation2 + $0x8] sm:$0xff]
        %v2763 = vld [vmem:[#allocation2 + $0x10] sm:$0xff]
        %v2764 = vld [vmem:[#allocation2 + $0x18] sm:$0xff]
        %v2765 = vld [vmem:[#allocation2 + $0x20] sm:$0xff]
        %v2766 = vld [vmem:[#allocation2 + $0x28] sm:$0xff]
        %v2767 = vld [vmem:[#allocation2 + $0x30] sm:$0xff]
        %v2768 = vld [vmem:[#allocation2 + $0x38] sm:$0xff]
        %v2769 = vld [vmem:[#allocation2 + $0x40] sm:$0xff]
        %v2770 = vld [vmem:[#allocation2 + $0x48] sm:$0xff]
        %v2771 = vld [vmem:[#allocation2 + $0x50] sm:$0xff]
        %v2772 = vld [vmem:[#allocation2 + $0x58] sm:$0xff]
        %v2773 = vld [vmem:[#allocation2 + $0x60] sm:$0xff]
        %v2774 = vld [vmem:[#allocation2 + $0x68] sm:$0xff]
        %v2775 = vld [vmem:[#allocation2 + $0x70] sm:$0xff]
        %v2776 = vld [vmem:[#allocation2 + $0x78] sm:$0xff]
        %v2777 = vld [vmem:[#allocation2 + $0x80] sm:$0xff]
        %v2778 = vld [vmem:[#allocation2 + $0x88] sm:$0xff]
        %v2779 = vld [vmem:[#allocation2 + $0x90] sm:$0xff]
        %v2780 = vld [vmem:[#allocation2 + $0x98] sm:$0xff]
        %v2781 = vld [vmem:[#allocation2 + $0xa0] sm:$0xff]
        %v2782 = vld [vmem:[#allocation2 + $0xa8] sm:$0xff]
        %v2783 = vld [vmem:[#allocation2 + $0xb0] sm:$0xff]
        %v2784 = vld [vmem:[#allocation2 + $0xb8] sm:$0xff]
        %v2785 = vld [vmem:[#allocation2 + $0xc0] sm:$0xff]
        %v2786 = vld [vmem:[#allocation2 + $0xc8] sm:$0xff]
        %v2787 = vld [vmem:[#allocation2 + $0xd0] sm:$0xff]
        %v2788 = vld [vmem:[#allocation2 + $0xd8] sm:$0xff]
        %v2789 = vld [vmem:[#allocation2 + $0xe0] sm:$0xff]
        %v2790 = vld [vmem:[#allocation2 + $0xe8] sm:$0xff]
        %v2791 = vld [vmem:[#allocation2 + $0xf0] sm:$0xff]
        %v2792 = vld [vmem:[#allocation2 + $0xf8] sm:$0xff]
        %v2793 = vld [vmem:[#allocation2 + $0x100] sm:$0xff]
        %v2794 = vld [vmem:[#allocation2 + $0x108] sm:$0xff]
        %v2795 = vld [vmem:[#allocation2 + $0x110] sm:$0xff]
        %v2796 = vld [vmem:[#allocation2 + $0x118] sm:$0xff]
        %v2797 = vld [vmem:[#allocation2 + $0x120] sm:$0xff]
        %v2798 = vld [vmem:[#allocation2 + $0x128] sm:$0xff]
        %v2799 = vld [vmem:[#allocation2 + $0x130] sm:$0xff]
        %v2800 = vld [vmem:[#allocation2 + $0x138] sm:$0xff]
        %v2801 = vld [vmem:[#allocation2 + $0x140] sm:$0xff]
        %v2802 = vld [vmem:[#allocation2 + $0x148] sm:$0xff]
        %v2803 = vld [vmem:[#allocation2 + $0x150] sm:$0xff]
        %v2804 = vld [vmem:[#allocation2 + $0x158] sm:$0xff]
        %v2805 = vld [vmem:[#allocation2 + $0x160] sm:$0xff]
        %v2806 = vld [vmem:[#allocation2 + $0x168] sm:$0xff]
        %v2807 = vld [vmem:[#allocation2 + $0x170] sm:$0xff]
        %v2808 = vld [vmem:[#allocation2 + $0x178] sm:$0xff]
        %v2809 = vld [vmem:[#allocation2 + $0x180] sm:$0xff]
        %v2810 = vld [vmem:[#allocation2 + $0x188] sm:$0xff]
        %v2811 = vld [vmem:[#allocation2 + $0x190] sm:$0xff]
        %v2812 = vld [vmem:[#allocation2 + $0x198] sm:$0xff]
        %v2813 = vld [vmem:[#allocation2 + $0x1a0] sm:$0xff]
        %v2814 = vld [vmem:[#allocation2 + $0x1a8] sm:$0xff]
        %v2815 = vld [vmem:[#allocation2 + $0x1b0] sm:$0xff]
        %v2816 = vld [vmem:[#allocation2 + $0x1b8] sm:$0xff]
        %v2817 = vld [vmem:[#allocation2 + $0x1c0] sm:$0xff]
        %v2818 = vld [vmem:[#allocation2 + $0x1c8] sm:$0xff]
        %v2819 = vld [vmem:[#allocation2 + $0x1d0] sm:$0xff]
        %v2820 = vld [vmem:[#allocation2 + $0x1d8] sm:$0xff]
        %v2821 = vld [vmem:[#allocation2 + $0x1e0] sm:$0xff]
        %v2822 = vld [vmem:[#allocation2 + $0x1e8] sm:$0xff]
        %v2823 = vld [vmem:[#allocation2 + $0x1f0] sm:$0xff]
        %v2824 = vld [vmem:[#allocation2 + $0x1f8] sm:$0xff]
        %v2825 = vld [vmem:[#allocation2 + $0x200] sm:$0xff]
        %v2826 = vld [vmem:[#allocation2 + $0x208] sm:$0xff]
        %v2827 = vld [vmem:[#allocation2 + $0x210] sm:$0xff]
        %v2828 = vld [vmem:[#allocation2 + $0x218] sm:$0xff]
        %v2829 = vld [vmem:[#allocation2 + $0x220] sm:$0xff]
        %v2830 = vld [vmem:[#allocation2 + $0x228] sm:$0xff]
        %v2831 = vld [vmem:[#allocation2 + $0x230] sm:$0xff]
        %v2832 = vld [vmem:[#allocation2 + $0x238] sm:$0xff]
        %v2833 = vld [vmem:[#allocation2 + $0x240] sm:$0xff]
        %v2834 = vld [vmem:[#allocation2 + $0x248] sm:$0xff]
        %v2835 = vld [vmem:[#allocation2 + $0x250] sm:$0xff]
        %v2836 = vld [vmem:[#allocation2 + $0x258] sm:$0xff]
        %v2837 = vld [vmem:[#allocation2 + $0x260] sm:$0xff]
        %v2838 = vld [vmem:[#allocation2 + $0x268] sm:$0xff]
        %v2839 = vld [vmem:[#allocation2 + $0x270] sm:$0xff]
        %v2840 = vld [vmem:[#allocation2 + $0x278] sm:$0xff]
        %v2841 = vld [vmem:[#allocation2 + $0x280] sm:$0xff]
        %v2842 = vld [vmem:[#allocation2 + $0x288] sm:$0xff]
        %v2843 = vld [vmem:[#allocation2 + $0x290] sm:$0xff]
        %v2844 = vld [vmem:[#allocation2 + $0x298] sm:$0xff]
        %v2845 = vld [vmem:[#allocation2 + $0x2a0] sm:$0xff]
        %v2846 = vld [vmem:[#allocation2 + $0x2a8] sm:$0xff]
        %v2847 = vld [vmem:[#allocation2 + $0x2b0] sm:$0xff]
        %v2848 = vld [vmem:[#allocation2 + $0x2b8] sm:$0xff]
        %v2849 = vld [vmem:[#allocation2 + $0x2c0] sm:$0xff]
        %v2850 = vld [vmem:[#allocation2 + $0x2c8] sm:$0xff]
        %v2851 = vld [vmem:[#allocation2 + $0x2d0] sm:$0xff]
        %v2852 = vld [vmem:[#allocation2 + $0x2d8] sm:$0xff]
        %v2853 = vld [vmem:[#allocation2 + $0x2e0] sm:$0xff]
        %v2854 = vld [vmem:[#allocation2 + $0x2e8] sm:$0xff]
        %v2855 = vld [vmem:[#allocation2 + $0x2f0] sm:$0xff]
        %v2856 = vld [vmem:[#allocation2 + $0x2f8] sm:$0xff]
        %v2857 = vld [vmem:[#allocation2 + $0x300] sm:$0xff]
        %v2858 = vld [vmem:[#allocation2 + $0x308] sm:$0xff]
        %v2859 = vld [vmem:[#allocation2 + $0x310] sm:$0xff]
        %v2860 = vld [vmem:[#allocation2 + $0x318] sm:$0xff]
        %v2861 = vld [vmem:[#allocation2 + $0x320] sm:$0xff]
        %v2862 = vld [vmem:[#allocation2 + $0x328] sm:$0xff]
        %v2863 = vld [vmem:[#allocation2 + $0x330] sm:$0xff]
        %v2864 = vld [vmem:[#allocation2 + $0x338] sm:$0xff]
        %v2865 = vld [vmem:[#allocation2 + $0x340] sm:$0xff]
        %v2866 = vld [vmem:[#allocation2 + $0x348] sm:$0xff]
        %v2867 = vld [vmem:[#allocation2 + $0x350] sm:$0xff]
        %v2868 = vld [vmem:[#allocation2 + $0x358] sm:$0xff]
        %v2873 = vunpack.c.l.b16 %v1717
        %v2874 = vunpack.c.h.b16 %v1717
        %v2875 = vunpack.c.l.b16 %v1718
        %v2876 = vunpack.c.h.b16 %v1718
        %v2877 = vunpack.c.l.b16 %v1719
        %v2878 = vunpack.c.h.b16 %v1719
        %v2879 = vunpack.c.l.b16 %v1720
        %v2880 = vunpack.c.h.b16 %v1720
        %v2881 = vpack.c.b16 %v2877, %v2873
        %v2882 = vpack.c.b16 %v2878, %v2874
        %v2883 = vpack.c.b16 %v2879, %v2875
        %v2884 = vpack.c.b16 %v2880, %v2876
        %v2889 = vsel %vm1459, %v2884, 0
        %2891 = vmatprep.subr.bf16.mxu0 %v2762
        %2892 = vmatpush1.bf16.msra.mxu0 %v2761
        %2893 = vmatprep.subr.bf16.mxu0 %v2766
        %2894 = vmatpush1.bf16.msra.mxu0 %v2765
        %2895 = vmatprep.subr.bf16.mxu0 %v2770
        %2896 = vmatpush1.bf16.msra.mxu0 %v2769
        %2897 = vmatprep.subr.bf16.mxu0 %v2774
        %2898 = vmatpush1.bf16.msra.mxu0 %v2773
        %2899 = vmatprep.subr.bf16.mxu0 %v2778
        %2900 = vmatpush1.bf16.msra.mxu0 %v2777
        %2901 = vmatprep.subr.bf16.mxu0 %v2782
        %2902 = vmatpush1.bf16.msra.mxu0 %v2781
        %2903 = vmatprep.subr.bf16.mxu0 %v2786
        %2904 = vmatpush1.bf16.msra.mxu0 %v2785
        %2905 = vmatprep.subr.bf16.mxu0 %v2790
        %2906 = vmatpush1.bf16.msra.mxu0 %v2789
        %2907 = vmatprep.subr.bf16.mxu0 %v2794
        %2908 = vmatpush1.bf16.msra.mxu0 %v2793
        %2909 = vmatprep.subr.bf16.mxu0 %v2798
        %2910 = vmatpush1.bf16.msra.mxu0 %v2797
        %2911 = vmatprep.subr.bf16.mxu0 %v2802
        %2912 = vmatpush1.bf16.msra.mxu0 %v2801
        %2913 = vmatprep.subr.bf16.mxu0 %v2806
        %2914 = vmatpush1.bf16.msra.mxu0 %v2805
        %2915 = vmatprep.subr.bf16.mxu0 %v2810
        %2916 = vmatpush1.bf16.msra.mxu0 %v2809
        %2917 = vmatprep.subr.bf16.mxu0 %v2814
        %2918 = vmatpush1.bf16.msra.mxu0 %v2813
        %2919 = vmatprep.subr.bf16.mxu0 %v2818
        %2920 = vmatpush1.bf16.msra.mxu0 %v2817
        %2921 = vmatprep.subr.bf16.mxu0 %v2822
        %2922 = vmatpush1.bf16.msra.mxu0 %v2821
        %2923 = vmatprep.mubr.bf16.mxu0 %v2882
        %2924 = vmatmul.mubr.bf16.gmra.mrb[0].mxu0 %v2881
        %v2925 = vpop.f32.mrb[0].mxu0
        %v2926 = vadd.f32 0.0, %v2925
        %v2927 = vpop.f32.mrb[0].mxu0
        %v2928 = vadd.f32 0.0, %v2927
        %v2929 = vpop.f32.mrb[0].mxu0
        %v2930 = vadd.f32 0.0, %v2929
        %v2931 = vpop.f32.mrb[0].mxu0
        %v2932 = vadd.f32 0.0, %v2931
        %2933 = vdwg.mxu0
        %2934 = vmatprep.subr.bf16.mxu0 %v2826
        %2935 = vmatpush1.bf16.msra.mxu0 %v2825
        %2936 = vmatprep.subr.bf16.mxu0 %v2830
        %2937 = vmatpush1.bf16.msra.mxu0 %v2829
        %2938 = vmatprep.subr.bf16.mxu0 %v2834
        %2939 = vmatpush1.bf16.msra.mxu0 %v2833
        %2940 = vmatprep.subr.bf16.mxu0 %v2838
        %2941 = vmatpush1.bf16.msra.mxu0 %v2837
        %2942 = vmatprep.subr.bf16.mxu0 %v2842
        %2943 = vmatpush1.bf16.msra.mxu0 %v2841
        %2944 = vmatprep.subr.bf16.mxu0 %v2846
        %2945 = vmatpush1.bf16.msra.mxu0 %v2845
        %2946 = vmatprep.subr.bf16.mxu0 %v2850
        %2947 = vmatpush1.bf16.msra.mxu0 %v2849
        %2948 = vmatprep.subr.bf16.mxu0 %v2854
        %2949 = vmatpush1.bf16.msra.mxu0 %v2853
        %2950 = vmatprep.subr.bf16.mxu0 %v2858
        %2951 = vmatpush1.bf16.msra.mxu0 %v2857
        %2952 = vmatprep.subr.bf16.mxu0 %v2862
        %2953 = vmatpush1.bf16.msra.mxu0 %v2861
        %2954 = vmatprep.subr.bf16.mxu0 %v2866
        %2955 = vmatpush1.bf16.msra.mxu0 %v2865
        %2956 = vmatprep.subr.bf16.mxu0 0
        %2957 = vmatpush1.bf16.msra.mxu0 0
        %2958 = vmatprep.subr.bf16.mxu0 0
        %2959 = vmatpush1.bf16.msra.mxu0 0
        %2960 = vmatprep.subr.bf16.mxu0 0
        %2961 = vmatpush1.bf16.msra.mxu0 0
        %2962 = vmatprep.subr.bf16.mxu0 0
        %2963 = vmatpush1.bf16.msra.mxu0 0
        %2964 = vmatprep.subr.bf16.mxu0 0
        %2965 = vmatpush1.bf16.msra.mxu0 0
        %2966 = vmatprep.mubr.bf16.mxu0 %v2889
        %2967 = vmatmul.mubr.bf16.gmra.mrb[0].mxu0 %v2883
        %v2968 = vpop.f32.mrb[0].mxu0
        %v2969 = vadd.f32 %v2926, %v2968
        %v2970 = vpop.f32.mrb[0].mxu0
        %v2971 = vadd.f32 %v2928, %v2970
        %v2972 = vpop.f32.mrb[0].mxu0
        %v2973 = vadd.f32 %v2930, %v2972
        %v2974 = vpop.f32.mrb[0].mxu0
        %v2975 = vadd.f32 %v2932, %v2974
        %2976 = vdwg.mxu0
        %2977 = vmatprep.subr.bf16.mxu0 %v2764
        %2978 = vmatpush1.bf16.msra.mxu0 %v2763
        %2979 = vmatprep.subr.bf16.mxu0 %v2768
        %2980 = vmatpush1.bf16.msra.mxu0 %v2767
        %2981 = vmatprep.subr.bf16.mxu0 %v2772
        %2982 = vmatpush1.bf16.msra.mxu0 %v2771
        %2983 = vmatprep.subr.bf16.mxu0 %v2776
        %2984 = vmatpush1.bf16.msra.mxu0 %v2775
        %2985 = vmatprep.subr.bf16.mxu0 %v2780
        %2986 = vmatpush1.bf16.msra.mxu0 %v2779
        %2987 = vmatprep.subr.bf16.mxu0 %v2784
        %2988 = vmatpush1.bf16.msra.mxu0 %v2783
        %2989 = vmatprep.subr.bf16.mxu0 %v2788
        %2990 = vmatpush1.bf16.msra.mxu0 %v2787
        %2991 = vmatprep.subr.bf16.mxu0 %v2792
        %2992 = vmatpush1.bf16.msra.mxu0 %v2791
        %2993 = vmatprep.subr.bf16.mxu0 %v2796
        %2994 = vmatpush1.bf16.msra.mxu0 %v2795
        %2995 = vmatprep.subr.bf16.mxu0 %v2800
        %2996 = vmatpush1.bf16.msra.mxu0 %v2799
        %2997 = vmatprep.subr.bf16.mxu0 %v2804
        %2998 = vmatpush1.bf16.msra.mxu0 %v2803
        %2999 = vmatprep.subr.bf16.mxu0 %v2808
        %3000 = vmatpush1.bf16.msra.mxu0 %v2807
        %3001 = vmatprep.subr.bf16.mxu0 %v2812
        %3002 = vmatpush1.bf16.msra.mxu0 %v2811
        %3003 = vmatprep.subr.bf16.mxu0 %v2816
        %3004 = vmatpush1.bf16.msra.mxu0 %v2815
        %3005 = vmatprep.subr.bf16.mxu0 %v2820
        %3006 = vmatpush1.bf16.msra.mxu0 %v2819
        %3007 = vmatprep.subr.bf16.mxu0 %v2824
        %3008 = vmatpush1.bf16.msra.mxu0 %v2823
        %3009 = vmatprep.mubr.bf16.mxu0 %v2882
        %3010 = vmatmul.mubr.bf16.gmra.mrb[0].mxu0 %v2881
        %v3011 = vpop.f32.mrb[0].mxu0
        %v3012 = vadd.f32 0.0, %v3011
        %v3013 = vpop.f32.mrb[0].mxu0
        %v3014 = vadd.f32 0.0, %v3013
        %v3015 = vpop.f32.mrb[0].mxu0
        %v3016 = vadd.f32 0.0, %v3015
        %v3017 = vpop.f32.mrb[0].mxu0
        %v3018 = vadd.f32 0.0, %v3017
        %3019 = vdwg.mxu0
        %3020 = vmatprep.subr.bf16.mxu0 %v2828
        %3021 = vmatpush1.bf16.msra.mxu0 %v2827
        %3022 = vmatprep.subr.bf16.mxu0 %v2832
        %3023 = vmatpush1.bf16.msra.mxu0 %v2831
        %3024 = vmatprep.subr.bf16.mxu0 %v2836
        %3025 = vmatpush1.bf16.msra.mxu0 %v2835
        %3026 = vmatprep.subr.bf16.mxu0 %v2840
        %3027 = vmatpush1.bf16.msra.mxu0 %v2839
        %3028 = vmatprep.subr.bf16.mxu0 %v2844
        %3029 = vmatpush1.bf16.msra.mxu0 %v2843
        %3030 = vmatprep.subr.bf16.mxu0 %v2848
        %3031 = vmatpush1.bf16.msra.mxu0 %v2847
        %3032 = vmatprep.subr.bf16.mxu0 %v2852
        %3033 = vmatpush1.bf16.msra.mxu0 %v2851
        %3034 = vmatprep.subr.bf16.mxu0 %v2856
        %3035 = vmatpush1.bf16.msra.mxu0 %v2855
        %3036 = vmatprep.subr.bf16.mxu0 %v2860
        %3037 = vmatpush1.bf16.msra.mxu0 %v2859
        %3038 = vmatprep.subr.bf16.mxu0 %v2864
        %3039 = vmatpush1.bf16.msra.mxu0 %v2863
        %3040 = vmatprep.subr.bf16.mxu0 %v2868
        %3041 = vmatpush1.bf16.msra.mxu0 %v2867
        %3042 = vmatprep.subr.bf16.mxu0 0
        %3043 = vmatpush1.bf16.msra.mxu0 0
        %3044 = vmatprep.subr.bf16.mxu0 0
        %3045 = vmatpush1.bf16.msra.mxu0 0
        %3046 = vmatprep.subr.bf16.mxu0 0
        %3047 = vmatpush1.bf16.msra.mxu0 0
        %3048 = vmatprep.subr.bf16.mxu0 0
        %3049 = vmatpush1.bf16.msra.mxu0 0
        %3050 = vmatprep.subr.bf16.mxu0 0
        %3051 = vmatpush1.bf16.msra.mxu0 0
        %3052 = vmatprep.mubr.bf16.mxu0 %v2889
        %3053 = vmatmul.mubr.bf16.gmra.mrb[0].mxu0 %v2883
        %v3054 = vpop.f32.mrb[0].mxu0
        %v3055 = vadd.f32 %v3012, %v3054
        %v3056 = vpop.f32.mrb[0].mxu0
        %v3057 = vadd.f32 %v3014, %v3056
        %v3058 = vpop.f32.mrb[0].mxu0
        %v3059 = vadd.f32 %v3016, %v3058
        %v3060 = vpop.f32.mrb[0].mxu0
        %v3061 = vadd.f32 %v3018, %v3060
        %3062 = vdwg.mxu0
        %v3063 = vadd.f32 %v2969, %v2971
        %v3064 = vadd.f32 %v3063, %v3055
        %v3065 = vadd.f32 %v3064, %v3057
        %3066 = vadd.xlane.f32.xlu0 %v3065
        %v3067 = vpop.xlane.xlu0 %3066
        %v3068 = vadd.f32 %v2973, %v2975
        %v3069 = vadd.f32 %v3068, %v3059
        %v3070 = vadd.f32 %v3069, %v3061
        %3071 = vadd.xlane.f32.xlu0 %v3070
        %v3072 = vpop.xlane.xlu0 %3071
        %v3073 = vmul.f32 %v3067, 0.001953125
        %v3074 = vmul.f32 %v3072, 0.001953125
        %v3075 = vmul.f32 %v2969, %v2969
        %v3076 = vmul.f32 %v2971, %v2971
        %v3077 = vmul.f32 %v3055, %v3055
        %v3078 = vmul.f32 %v3057, %v3057
        %v3079 = vmul.f32 %v2973, %v2973
        %v3080 = vmul.f32 %v2975, %v2975
        %v3081 = vmul.f32 %v3059, %v3059
        %v3082 = vmul.f32 %v3061, %v3061
        %v3083 = vadd.f32 %v3075, %v3076
        %v3084 = vadd.f32 %v3083, %v3077
        %v3085 = vadd.f32 %v3084, %v3078
        %3086 = vadd.xlane.f32.xlu0 %v3085
        %v3087 = vpop.xlane.xlu0 %3086
        %v3088 = vadd.f32 %v3079, %v3080
        %v3089 = vadd.f32 %v3088, %v3081
        %v3090 = vadd.f32 %v3089, %v3082
        %3091 = vadd.xlane.f32.xlu0 %v3090
        %v3092 = vpop.xlane.xlu0 %3091
        %v3093 = vmul.f32 %v3087, 0.001953125
        %v3094 = vmul.f32 %v3092, 0.001953125
        %v3095 = vmul.f32 %v3073, %v3073
        %v3096 = vmul.f32 %v3074, %v3074
        %v3097 = vsub.f32 %v3093, %v3095
        %v3098 = vsub.f32 %v3094, %v3096
        %v3099 = vmax.f32 %v3097, 0.0
        %v3100 = vmax.f32 %v3098, 0.0
        %v3101 = vsub.f32 %v2969, %v3073
        %v3102 = vsub.f32 %v2971, %v3073
        %v3103 = vsub.f32 %v3055, %v3073
        %v3104 = vsub.f32 %v3057, %v3073
        %v3105 = vsub.f32 %v2973, %v3074
        %v3106 = vsub.f32 %v2975, %v3074
        %v3107 = vsub.f32 %v3059, %v3074
        %v3108 = vsub.f32 %v3061, %v3074
        %v3109 = vadd.f32 %v3099, 1e-05
        %v3110 = vadd.f32 %v3100, 1e-05
        %v3111 = vrsqrt.pop %v3109
        %v3112 = vrsqrt.pop %v3110
        %v3113 = vmul.f32 %v3101, %v3111
        %v3114 = vmul.f32 %v3102, %v3111
        %v3115 = vmul.f32 %v3103, %v3111
        %v3116 = vmul.f32 %v3104, %v3111
        %v3117 = vmul.f32 %v3105, %v3112
        %v3118 = vmul.f32 %v3106, %v3112
        %v3119 = vmul.f32 %v3107, %v3112
        %v3120 = vmul.f32 %v3108, %v3112
        %vm3121 = vcmp.ge.f32.partialorder %v3113, 0.0
        %vm3122 = vcmp.ge.f32.partialorder %v3114, 0.0
        %vm3123 = vcmp.ge.f32.partialorder %v3115, 0.0
        %vm3124 = vcmp.ge.f32.partialorder %v3116, 0.0
        %vm3125 = vcmp.ge.f32.partialorder %v3117, 0.0
        %vm3126 = vcmp.ge.f32.partialorder %v3118, 0.0
        %vm3127 = vcmp.ge.f32.partialorder %v3119, 0.0
        %vm3128 = vcmp.ge.f32.partialorder %v3120, 0.0
        %v3129 = vmul.f32 %v3113, 0.01
        %v3130 = vmul.f32 %v3114, 0.01
        %v3131 = vmul.f32 %v3115, 0.01
        %v3132 = vmul.f32 %v3116, 0.01
        %v3133 = vmul.f32 %v3117, 0.01
        %v3134 = vmul.f32 %v3118, 0.01
        %v3135 = vmul.f32 %v3119, 0.01
        %v3136 = vmul.f32 %v3120, 0.01
        %v3137 = vsel %vm3121, %v3113, %v3129
        %v3138 = vsel %vm3122, %v3114, %v3130
        %v3139 = vsel %vm3123, %v3115, %v3131
        %v3140 = vsel %vm3124, %v3116, %v3132
        %v3141 = vsel %vm3125, %v3117, %v3133
        %v3142 = vsel %vm3126, %v3118, %v3134
        %v3143 = vsel %vm3127, %v3119, %v3135
        %v3144 = vsel %vm3128, %v3120, %v3136
        %3145 = vst [vmem:[%s259] sm:$0xff] %v3137
        %3146 = vst [vmem:[%s259 + $0x8] sm:$0xff] %v3138
        %3147 = vst [vmem:[%s259 + $0x10] sm:$0xff] %v3139
        %3148 = vst [vmem:[%s259 + $0x18] sm:$0xff] %v3140
        %3149 = vst [vmem:[%s259 + $0x20] sm:$0xff] %v3141
        %3150 = vst [vmem:[%s259 + $0x28] sm:$0xff] %v3142
        %3151 = vst [vmem:[%s259 + $0x30] sm:$0xff] %v3143
        %3152 = vst [vmem:[%s259 + $0x38] sm:$0xff] %v3144
        %s3153 = sand.u32 %s120, 1
        %s3154 = scalar_lea.sflag [#allocation5], %s3153
        %s3155 = sand.u32 %s120, 1
        %s3156 = smul.addr %s3155, 64
        %s3157 = scalar_lea.vmem [#allocation11], %s3156
        // Predicated region
        $region53: #{tpu_custom_call.1} parent=35 // pred_check
          %p3158 = pneg %p130
        $region54: #{tpu_custom_call.1} parent=35 // pred_check_branch
          %3160 = sbr.rel (%p3158) target = $region56
        $region55: #{tpu_custom_call.1} parent=35 // pred_region
          %s3162 = ssub.s32 1024, 1024
          %3163 = vsyncadd %s3154, %s3162
          %s3164 = smul.addr %s23, 8
          %s3165 = smul.addr %s3164, 128
          %s3166 = scalar_lea.hbm %s4, %s3165
          %s3167 = sshll.u32 %s3157, 4
          %s3168 = int_to_ptr.vmem [resolvable:$true] %s3167
          %3173 = dma.vmem_to_hbm [thread:$0]  %s3168, 1024, %s3166, %s3154, 512, 512, 32
        $region56: #{tpu_custom_call.1} parent=35 // pred_fallthru
          _
      $region36: #{tpu_custom_call.1} parent=5 // pred_fallthru
        _
      %p3174 = scmp.le.s32.totalorder 2, %s18
      // Predicated region
      $region57: #{tpu_custom_call.1} parent=5 // pred_check
        %p3175 = pneg %p3174
      $region58: #{tpu_custom_call.1} parent=5 // pred_check_branch
        %3177 = sbr.rel (%p3175) target = $region60
      $region59: #{tpu_custom_call.1} parent=5 // pred_region
        %s3178 = ssub.s32 %s18, 2
        // Predicated region
        $region61: #{tpu_custom_call.1} parent=59 // pred_check
          %p3179 = pneg %p136
        $region62: #{tpu_custom_call.1} parent=59 // pred_check_branch
          %3181 = sbr.rel (%p3179) target = $region64
        $region63: #{tpu_custom_call.1} parent=59 // pred_region
          %s3182 = sand.u32 %s121, 1
          %s3183 = scalar_lea.sflag [#allocation5], %s3182
          %s3184 = sand.u32 %s121, 1
          %s3185 = smul.addr %s3184, 64
          %s3186 = scalar_lea.vmem [#allocation11], %s3185
          %3187 = dma.done %s3183, 1024
        $region64: #{tpu_custom_call.1} parent=59 // pred_fallthru
          _
      $region60: #{tpu_custom_call.1} parent=5 // pred_fallthru
        _
    $region6: #{tpu_custom_call.1} parent=1 // loop_footer
      %s22 = sadd.s32 1, %s18
    $region7: #{tpu_custom_call.1} parent=1 // loop_footer_branch
      %17 = sbr.rel target = $region3
    $region8: #{tpu_custom_call.1} parent=1 // loop_exit
      _
    %3188 = vsyncpa [#allocation4], 1
    %s3189 = scalar_lea.sflag [#allocation4], 1
    %3190 = vsyncpa %s3189, 1
    %3191 = vsyncpa [#allocation7], 1
    %3192 = vsyncpa [#allocation10], 1
    %3193 = vsyncpa [#allocation5], 1
    %s3194 = scalar_lea.sflag [#allocation5], 1
    %3195 = vsyncpa %s3194, 1

</llo_original>
